<compile_context>
chip_gen: v7x
topology: tpu7x:2x2x1
jax: 0.10.0
libtpu: 0.0.40
codegen_flags: <defaults>
</compile_context>

<pallas_src>
import functools

import jax
import jax.numpy as jnp
from jax import lax
from jax.experimental import pallas as pl
from jax.experimental.pallas import tpu as pltpu

EPS = 1e-5
LANES = 128


def _round_up(x, m):
    return (x + m - 1) // m * m


def _conv3x3_packed(xsrc, w_ref, bias, Hout, Wout, stride):
    """3x3 conv (pad already applied) as 3 K-packed MXU matmuls (one per kw).

    xsrc : (B, Hs, Ws, C) f32 spatially padded source.
    w_ref: (3, 3*C, Cout) bf16 weights; index 0 is kw, K ordered kh-major then channel.
    bias : (1, Cout) f32 folded BN bias, added into the first tap's accumulator init.
    Returns (B*Hout*Wout, Cout) f32.
    """
    B, _, _, C = xsrc.shape
    M = B * Hout * Wout
    if stride > 1:
        # Hoist the W (sublane) decimation out of the kw loop: one strided slice per phase.
        phases = [xsrc[:, :, p::stride, :] for p in range(stride)]
    acc = None
    for kw in range(3):
        if stride == 1:
            col = xsrc[:, :, kw:kw + Wout, :]                          # (B, Hs, Wout, C)
            taps = [col[:, kh:kh + Hout] for kh in range(3)]
        else:
            col = phases[kw % stride][:, :, kw // stride:kw // stride + Wout, :]
            taps = [col[:, kh:kh + (Hout - 1) * stride + 1:stride] for kh in range(3)]
        # Lane-concatenate the 3 kh taps -> one matmul with K = 3*C.  Cast to bf16 only
        # at the MXU input; accumulation stays f32.
        packed = jnp.concatenate([t.astype(jnp.bfloat16) for t in taps], axis=-1)
        packed = packed.reshape(M, 3 * C)
        part = jnp.dot(packed, w_ref[kw], preferred_element_type=jnp.float32)
        acc = (part + bias) if acc is None else (acc + part)
    return acc


def _basic_block_kernel(xp_ref, w1_ref, w2_ref, ws_ref,
                        b1_ref, b2_ref, bs_ref,
                        out_ref, pad1_ref, *, stride, has_shortcut):
    """Fused basic block for B_tile batch elements.

    xp_ref : (B, H+2, W+2, Cin)     spatially padded input (convs AND shortcut read it)
    w1_ref : (3, 3*Cin, Cout) bf16  conv1 weights, BN1 scale folded, K-packed per kw
    w2_ref : (3, 3*Cout, Cout) bf16 conv2 weights, BN2 scale folded, K-packed per kw
    ws_ref : (Cin, Cout) bf16       1x1 shortcut conv weights, BN scale folded
    b*_ref : (1, Cout) f32          folded BatchNorm biases
    out_ref: (B, Hout, Wout, Cout)
    pad1_ref: VMEM scratch (B, Hout+2, Wout+2, Cout) holding the padded conv1 activation.
    """
    B, Hout, Wout, Cout = out_ref.shape
    Cin = xp_ref.shape[-1]
    M = B * Hout * Wout

    xp = xp_ref[...]                                   # (B, H+2, W+2, Cin) f32

    # ---- conv1 (3x3, stride, pad=1) + bn1 (scale folded, bias in acc init) + relu ----
    out1 = jnp.maximum(
        _conv3x3_packed(xp, w1_ref, b1_ref[...], Hout, Wout, stride), 0.0)

    # ---- re-pad conv1 output in VMEM scratch for conv2 ----
    # Zero only the 1-pixel halo; the interior is fully overwritten every step
    # (done every iteration so it stays correct when the batch axis is core-sharded).
    zrow = jnp.zeros((B, 1, Wout + 2, Cout), jnp.float32)
    zcol = jnp.zeros((B, Hout + 2, 1, Cout), jnp.float32)
    pad1_ref[:, 0:1, :, :] = zrow
    pad1_ref[:, Hout + 1:Hout + 2, :, :] = zrow
    pad1_ref[:, :, 0:1, :] = zcol
    pad1_ref[:, :, Wout + 1:Wout + 2, :] = zcol
    pad1_ref[:, 1:1 + Hout, 1:1 + Wout, :] = out1.reshape(B, Hout, Wout, Cout)

    # ---- conv2 (3x3, stride=1, pad=1) + bn2 (scale folded, bias in acc init) ----
    out2 = _conv3x3_packed(pad1_ref[...], w2_ref, b2_ref[...], Hout, Wout, 1)

    # ---- shortcut path (read from the already-DMA'd padded input; no 2nd operand) ----
    if has_shortcut:
        if stride == 1:
            xs = xp[:, 1:1 + Hout, 1:1 + Wout, :]
        else:
            xs = xp[:, 1:1 + (Hout - 1) * stride + 1:stride,
                       1:1 + (Wout - 1) * stride + 1:stride, :]
        sc = jnp.dot(xs.reshape(M, Cin).astype(jnp.bfloat16), ws_ref[...],
                     preferred_element_type=jnp.float32) + bs_ref[...]
    else:
        # Identity shortcut: stride == 1 and Cin == Cout (asserted in the wrapper);
        # residual is kept exactly in f32.
        sc = xp[:, 1:1 + Hout, 1:1 + Wout, :].reshape(M, Cin)

    # ---- skip_add (FloatFunctional.add == plain float add) + relu ----
    out = jnp.maximum(out2 + sc, 0.0)
    out_ref[...] = out.reshape(B, Hout, Wout, Cout).astype(out_ref.dtype)


def _pick_batch_tile(N, HW):
    """Largest divisor of N that keeps the matmul M dim near the MXU tile for small
    feature maps, while still leaving >=2 grid steps (two v7x TensorCores) when N allows."""
    target = max(1, 256 // max(HW, 1))
    b = 1
    for d in range(1, N + 1):
        if N % d == 0 and d <= target:
            b = d
    if N >= 2 and N // b < 2:
        for d in range(b, 0, -1):
            if N % d == 0 and N // d >= 2:
                return d
    return b


def ptq_basic_block_pallas(x_nhwc, kparams, *, stride, has_shortcut):
    """x_nhwc: (N, H, W, Cin) float32 -> (N, Hout, Wout, Cout) float32 (NHWC)."""
    N, H, W, Cin = x_nhwc.shape
    Cout = kparams["w1"].shape[-1]
    Hout = (H - 1) // stride + 1
    Wout = (W - 1) // stride + 1

    if not has_shortcut:
        assert stride == 1 and Cin == Cout, \
            "identity shortcut requires stride==1 and in_planes==planes"

    # Pad channels to the 128-lane width so matmul K/N dims and the output last dim are
    # lane-dense.  Padded channels are exact zeros and sliced off below.
    Cin_p = _round_up(Cin, LANES)
    Cout_p = _round_up(Cout, LANES)

    def padc(a, axis, new):
        pads = [(0, 0)] * a.ndim
        pads[axis] = (0, new - a.shape[axis])
        return jnp.pad(a, pads)

    def pack_w(w, cin_p):
        # (3,3,Cin,Cout) HWIO (BN scale already folded) -> (3, 3*cin_p, Cout_p) bf16,
        # indexed by kw, K ordered kh-major then channel (matches the kernel's concat).
        w = padc(padc(w, 2, cin_p), 3, Cout_p)
        return jnp.transpose(w, (1, 0, 2, 3)).reshape(3, 3 * cin_p, Cout_p).astype(jnp.bfloat16)

    w1 = pack_w(kparams["w1"], Cin_p)
    w2 = pack_w(kparams["w2"], Cout_p)
    ws = padc(padc(kparams["ws"], 0, Cin_p), 1, Cout_p).astype(jnp.bfloat16)
    b1 = padc(kparams["b1"], 1, Cout_p)
    b2 = padc(kparams["b2"], 1, Cout_p)
    bs = padc(kparams["bs"], 1, Cout_p)

    # Single spatially- and channel-padded f32 input; both convs and the shortcut read it.
    xp = jnp.pad(x_nhwc, ((0, 0), (1, 1), (1, 1), (0, Cin_p - Cin)))

    B_tile = _pick_batch_tile(N, Hout * Wout)
    grid = (N // B_tile,)

    kernel = functools.partial(_basic_block_kernel,
                               stride=stride, has_shortcut=has_shortcut)

    # Constant blocks (same tile every grid step): single-buffer them so the big conv
    # weights are not allocated twice in VMEM.
    const3 = lambda shape: pl.BlockSpec(shape, lambda n: (0, 0, 0),
                                        pipeline_mode=pl.Buffered(1))
    const2 = lambda shape: pl.BlockSpec(shape, lambda n: (0, 0),
                                        pipeline_mode=pl.Buffered(1))

    # Stage-aware VMEM budget: real block/weight/scratch footprint (+ matmul temporaries),
    # capped below the physical capacity (leaves headroom for compiler-internal scratch,
    # especially on v7x's 64 MiB VMEM).
    M = B_tile * Hout * Wout
    est = (2 * B_tile * (H + 2) * (W + 2) * Cin_p * 4            # xp block (double-buffered)
           + 2 * B_tile * Hout * Wout * Cout_p * 4               # out block (double-buffered)
           + (w1.size + w2.size + ws.size) * 2                   # bf16 weights, Buffered(1)
           + (b1.size + b2.size + bs.size) * 4                   # f32 biases
           + B_tile * (Hout + 2) * (Wout + 2) * Cout_p * 4       # pad1 scratch
           + M * 3 * max(Cin_p, Cout_p) * 2 + 4 * M * Cout_p * 4)  # matmul temporaries
    try:
        vmem_cap = int(pltpu.get_tpu_info().vmem_capacity_bytes)
    except Exception:
        vmem_cap = 64 * 1024 * 1024
    upper = max(24 * 1024 * 1024, min(vmem_cap - 24 * 1024 * 1024, 96 * 1024 * 1024))
    vmem_limit = int(min(max(est * 3 // 2, 32 * 1024 * 1024), upper))

    out_p = pl.pallas_call(
        kernel,
        out_shape=jax.ShapeDtypeStruct((N, Hout, Wout, Cout_p), jnp.float32),
        grid=grid,
        in_specs=[
            pl.BlockSpec((B_tile, H + 2, W + 2, Cin_p), lambda n: (n, 0, 0, 0)),  # xp
            const3((3, 3 * Cin_p, Cout_p)),    # w1 (BN1 scale folded, bf16, K-packed)
            const3((3, 3 * Cout_p, Cout_p)),   # w2 (BN2 scale folded, bf16, K-packed)
            const2((Cin_p, Cout_p)),           # ws (BN scale folded, bf16)
            const2((1, Cout_p)),               # b1
            const2((1, Cout_p)),               # b2
            const2((1, Cout_p)),               # bs
        ],
        out_specs=pl.BlockSpec((B_tile, Hout, Wout, Cout_p), lambda n: (n, 0, 0, 0)),
        scratch_shapes=[pltpu.VMEM((B_tile, Hout + 2, Wout + 2, Cout_p), jnp.float32)],
        compiler_params=pltpu.CompilerParams(
            # batch axis is independent per step -> shard across v7x's 2 TensorCores
            dimension_semantics=("parallel",),
            vmem_limit_bytes=vmem_limit,
        ),
    )(xp, w1, w2, ws, b1, b2, bs)

    return out_p[..., :Cout]


# ------------------------ parameter init (deterministic, synthetic) ------------------------

def _bn_init(key, c):
    k1, k2, k3, k4 = jax.random.split(key, 4)
    gamma = jax.random.uniform(k1, (c,), jnp.float32, 0.5, 1.5)
    beta = jax.random.normal(k2, (c,), jnp.float32) * 0.1
    mean = jax.random.normal(k3, (c,), jnp.float32) * 0.1
    var = jax.random.uniform(k4, (c,), jnp.float32, 0.5, 1.5)
    return gamma, beta, mean, var


def _fold_bn(gamma, beta, mean, var):
    scale = gamma / jnp.sqrt(var + EPS)
    bias = beta - mean * scale
    return scale.reshape(1, -1), bias.reshape(1, -1)


def init_params(key, in_planes, planes):
    ks = jax.random.split(key, 6)
    w1_oihw = jax.random.normal(ks[0], (planes, in_planes, 3, 3), jnp.float32) * 0.2
    w2_oihw = jax.random.normal(ks[1], (planes, planes, 3, 3), jnp.float32) * 0.2
    ws_oihw = jax.random.normal(ks[2], (planes, in_planes, 1, 1), jnp.float32) * 0.2
    bn1 = _bn_init(ks[3], planes)
    bn2 = _bn_init(ks[4], planes)
    bns = _bn_init(ks[5], planes)

    s1, b1 = _fold_bn(*bn1)
    s2, b2 = _fold_bn(*bn2)
    ss, bs = _fold_bn(*bns)

    torch_params = dict(w1_oihw=w1_oihw, w2_oihw=w2_oihw, ws_oihw=ws_oihw,
                        bn1=bn1, bn2=bn2, bns=bns)
    # Kernel params: HWIO weights with the BN scale folded in (per output channel);
    # only the per-channel bias remains for the kernel's VPU.
    kernel_params = dict(
        w1=jnp.transpose(w1_oihw, (2, 3, 1, 0)) * s1[0],        # (3,3,Cin,Cout)
        w2=jnp.transpose(w2_oihw, (2, 3, 1, 0)) * s2[0],        # (3,3,Cout,Cout)
        ws=jnp.transpose(ws_oihw[:, :, 0, 0], (1, 0)) * ss[0],  # (Cin,Cout)
        b1=b1, b2=b2, bs=bs)
    return torch_params, kernel_params


# ------------------------ pure-JAX reference (NCHW, mirrors PyTorch) ------------------------

def ref_basic_block_nchw(x, p, *, stride, has_shortcut):
    def conv(inp, w, s, pad):
        return lax.conv_general_dilated(
            inp, w, (s, s), ((pad, pad), (pad, pad)),
            dimension_numbers=("NCHW", "OIHW", "NCHW"))

    def bn(inp, params):
        gamma, beta, mean, var = params
        rs = lambda v: v[None, :, None, None]
        return (inp - rs(mean)) / jnp.sqrt(rs(var) + EPS) * rs(gamma) + rs(beta)

    out = jax.nn.relu(bn(conv(x, p["w1_oihw"], stride, 1), p["bn1"]))
    out = bn(conv(out, p["w2_oihw"], 1, 1), p["bn2"])
    if has_shortcut:
        sc = bn(conv(x, p["ws_oihw"], stride, 0), p["bns"])
    else:
        sc = x
    return jax.nn.relu(out + sc)


if __name__ == "__main__":
    N, in_planes, H, W = 2, 4, 16, 16
    planes = 8
    stride = 1
    has_shortcut = (stride != 1) or (in_planes != planes)

    key = jax.random.PRNGKey(0)
    kx, kp = jax.random.split(key)
    x_nchw = jax.random.normal(kx, (N, in_planes, H, W), jnp.float32)

    torch_params, kernel_params = init_params(kp, in_planes, planes)

    # Kernel path: NCHW -> NHWC -> pallas -> NCHW
    x_nhwc = jnp.transpose(x_nchw, (0, 2, 3, 1))
    out_nhwc = ptq_basic_block_pallas(x_nhwc, kernel_params,
                                      stride=stride, has_shortcut=has_shortcut)
    out_nchw = jnp.transpose(out_nhwc, (0, 3, 1, 2))
    out_nchw = jax.block_until_ready(out_nchw)

    # Reference check: matmuls run in bf16 (f32 accumulate), so tolerance is relative.
    ref = ref_basic_block_nchw(x_nchw, torch_params,
                               stride=stride, has_shortcut=has_shortcut)
    max_err = float(jnp.max(jnp.abs(out_nchw - ref)))
    ref_scale = float(jnp.max(jnp.abs(ref)))
    tol = 5e-2 * ref_scale + 5e-2
    if max_err > tol:
        raise AssertionError(f"Pallas result mismatch: max abs err={max_err}, tol={tol}")

    print("KERNEL_OK")
</pallas_src>

<mosaic_0001>
module attributes {stable_mosaic.version = 11 : i64} {
  func.func @_basic_block_kernel(%arg0: i32, %arg1: memref<1x18x18x128xf32, #tpu.memory_space<vmem>>, %arg2: memref<3x384x128xbf16, #tpu.memory_space<vmem>>, %arg3: memref<3x384x128xbf16, #tpu.memory_space<vmem>>, %arg4: memref<128x128xbf16, #tpu.memory_space<vmem>>, %arg5: memref<1x128xf32, #tpu.memory_space<vmem>>, %arg6: memref<1x128xf32, #tpu.memory_space<vmem>>, %arg7: memref<1x128xf32, #tpu.memory_space<vmem>>, %arg8: memref<1x16x16x128xf32, #tpu.memory_space<vmem>>, %arg9: memref<1x18x18x128xf32, #tpu.memory_space<vmem>>) attributes {dimension_semantics = [#tpu.dimension_semantics<parallel>], iteration_bounds = array<i64: 2>, scalar_prefetch = 0 : i64, scratch_operands = 1 : i64, tpu.core_type = #tpu.core_type<tc>, window_params = [{transform_indices = @transform_0, window_bounds = array<i64: 1, 18, 18, 128>}, {pipeline_mode = #tpu.pipeline_mode<synchronous>, transform_indices = @transform_1, window_bounds = array<i64: 3, 384, 128>}, {pipeline_mode = #tpu.pipeline_mode<synchronous>, transform_indices = @transform_2, window_bounds = array<i64: 3, 384, 128>}, {pipeline_mode = #tpu.pipeline_mode<synchronous>, transform_indices = @transform_3, window_bounds = array<i64: 128, 128>}, {pipeline_mode = #tpu.pipeline_mode<synchronous>, transform_indices = @transform_4, window_bounds = array<i64: 1, 128>}, {pipeline_mode = #tpu.pipeline_mode<synchronous>, transform_indices = @transform_5, window_bounds = array<i64: 1, 128>}, {pipeline_mode = #tpu.pipeline_mode<synchronous>, transform_indices = @transform_6, window_bounds = array<i64: 1, 128>}, {transform_indices = @transform_7, window_bounds = array<i64: 1, 16, 16, 128>}]} {
    %c0 = arith.constant 0 : index
    %c0_0 = arith.constant 0 : index
    %c0_1 = arith.constant 0 : index
    %c0_2 = arith.constant 0 : index
    %0 = vector.load %arg1[%c0, %c0_0, %c0_1, %c0_2] : memref<1x18x18x128xf32, #tpu.memory_space<vmem>>, vector<1x18x18x128xf32>
    %c0_3 = arith.constant 0 : index
    %c0_4 = arith.constant 0 : index
    %1 = vector.load %arg5[%c0_3, %c0_4] : memref<1x128xf32, #tpu.memory_space<vmem>>, vector<1x128xf32>
    %2 = vector.extract_strided_slice %0 {offsets = [0, 0, 0, 0], sizes = [1, 18, 16, 128], strides = [1, 1, 1, 1]} : vector<1x18x18x128xf32> to vector<1x18x16x128xf32>
    %3 = vector.extract_strided_slice %2 {offsets = [0, 0, 0, 0], sizes = [1, 16, 16, 128], strides = [1, 1, 1, 1]} : vector<1x18x16x128xf32> to vector<1x16x16x128xf32>
    %4 = vector.extract_strided_slice %2 {offsets = [0, 1, 0, 0], sizes = [1, 16, 16, 128], strides = [1, 1, 1, 1]} : vector<1x18x16x128xf32> to vector<1x16x16x128xf32>
    %5 = vector.extract_strided_slice %2 {offsets = [0, 2, 0, 0], sizes = [1, 16, 16, 128], strides = [1, 1, 1, 1]} : vector<1x18x16x128xf32> to vector<1x16x16x128xf32>
    %6 = arith.truncf %3 : vector<1x16x16x128xf32> to vector<1x16x16x128xbf16>
    %7 = arith.truncf %4 : vector<1x16x16x128xf32> to vector<1x16x16x128xbf16>
    %8 = arith.truncf %5 : vector<1x16x16x128xf32> to vector<1x16x16x128xbf16>
    %9 = tpu.concatenate %6, %7, %8 in 3 : vector<1x16x16x128xbf16>, vector<1x16x16x128xbf16>, vector<1x16x16x128xbf16> -> vector<1x16x16x384xbf16>
    %10 = vector.shape_cast %9 : vector<1x16x16x384xbf16> to vector<256x384xbf16>
    %c0_5 = arith.constant 0 : index
    %c0_6 = arith.constant 0 : index
    %c0_7 = arith.constant 0 : index
    %11 = vector.load %arg2[%c0_5, %c0_6, %c0_7] : memref<3x384x128xbf16, #tpu.memory_space<vmem>>, vector<1x384x128xbf16>
    %12 = vector.shape_cast %11 : vector<1x384x128xbf16> to vector<384x128xbf16>
    %cst = arith.constant dense<0.000000e+00> : vector<256x128xf32>
    %13 = tpu.matmul %10, %12, %cst {dimension_numbers = #tpu.dot_dimension_numbers<[1], [0], [0], [1], [0, 0, 1, 1], [], []>} : vector<256x384xbf16>, vector<384x128xbf16>, vector<256x128xf32> -> vector<256x128xf32>
    %14 = vector.broadcast %1 : vector<1x128xf32> to vector<256x128xf32>
    %15 = arith.addf %13, %14 : vector<256x128xf32>
    %16 = vector.extract_strided_slice %0 {offsets = [0, 0, 1, 0], sizes = [1, 18, 16, 128], strides = [1, 1, 1, 1]} : vector<1x18x18x128xf32> to vector<1x18x16x128xf32>
    %17 = vector.extract_strided_slice %16 {offsets = [0, 0, 0, 0], sizes = [1, 16, 16, 128], strides = [1, 1, 1, 1]} : vector<1x18x16x128xf32> to vector<1x16x16x128xf32>
    %18 = vector.extract_strided_slice %16 {offsets = [0, 1, 0, 0], sizes = [1, 16, 16, 128], strides = [1, 1, 1, 1]} : vector<1x18x16x128xf32> to vector<1x16x16x128xf32>
    %19 = vector.extract_strided_slice %16 {offsets = [0, 2, 0, 0], sizes = [1, 16, 16, 128], strides = [1, 1, 1, 1]} : vector<1x18x16x128xf32> to vector<1x16x16x128xf32>
    %20 = arith.truncf %17 : vector<1x16x16x128xf32> to vector<1x16x16x128xbf16>
    %21 = arith.truncf %18 : vector<1x16x16x128xf32> to vector<1x16x16x128xbf16>
    %22 = arith.truncf %19 : vector<1x16x16x128xf32> to vector<1x16x16x128xbf16>
    %23 = tpu.concatenate %20, %21, %22 in 3 : vector<1x16x16x128xbf16>, vector<1x16x16x128xbf16>, vector<1x16x16x128xbf16> -> vector<1x16x16x384xbf16>
    %24 = vector.shape_cast %23 : vector<1x16x16x384xbf16> to vector<256x384xbf16>
    %c1 = arith.constant 1 : index
    %c0_8 = arith.constant 0 : index
    %c0_9 = arith.constant 0 : index
    %25 = vector.load %arg2[%c1, %c0_8, %c0_9] : memref<3x384x128xbf16, #tpu.memory_space<vmem>>, vector<1x384x128xbf16>
    %26 = vector.shape_cast %25 : vector<1x384x128xbf16> to vector<384x128xbf16>
    %cst_10 = arith.constant dense<0.000000e+00> : vector<256x128xf32>
    %27 = tpu.matmul %24, %26, %cst_10 {dimension_numbers = #tpu.dot_dimension_numbers<[1], [0], [0], [1], [0, 0, 1, 1], [], []>} : vector<256x384xbf16>, vector<384x128xbf16>, vector<256x128xf32> -> vector<256x128xf32>
    %28 = arith.addf %15, %27 : vector<256x128xf32>
    %29 = vector.extract_strided_slice %0 {offsets = [0, 0, 2, 0], sizes = [1, 18, 16, 128], strides = [1, 1, 1, 1]} : vector<1x18x18x128xf32> to vector<1x18x16x128xf32>
    %30 = vector.extract_strided_slice %29 {offsets = [0, 0, 0, 0], sizes = [1, 16, 16, 128], strides = [1, 1, 1, 1]} : vector<1x18x16x128xf32> to vector<1x16x16x128xf32>
    %31 = vector.extract_strided_slice %29 {offsets = [0, 1, 0, 0], sizes = [1, 16, 16, 128], strides = [1, 1, 1, 1]} : vector<1x18x16x128xf32> to vector<1x16x16x128xf32>
    %32 = vector.extract_strided_slice %29 {offsets = [0, 2, 0, 0], sizes = [1, 16, 16, 128], strides = [1, 1, 1, 1]} : vector<1x18x16x128xf32> to vector<1x16x16x128xf32>
    %33 = arith.truncf %30 : vector<1x16x16x128xf32> to vector<1x16x16x128xbf16>
    %34 = arith.truncf %31 : vector<1x16x16x128xf32> to vector<1x16x16x128xbf16>
    %35 = arith.truncf %32 : vector<1x16x16x128xf32> to vector<1x16x16x128xbf16>
    %36 = tpu.concatenate %33, %34, %35 in 3 : vector<1x16x16x128xbf16>, vector<1x16x16x128xbf16>, vector<1x16x16x128xbf16> -> vector<1x16x16x384xbf16>
    %37 = vector.shape_cast %36 : vector<1x16x16x384xbf16> to vector<256x384xbf16>
    %c2 = arith.constant 2 : index
    %c0_11 = arith.constant 0 : index
    %c0_12 = arith.constant 0 : index
    %38 = vector.load %arg2[%c2, %c0_11, %c0_12] : memref<3x384x128xbf16, #tpu.memory_space<vmem>>, vector<1x384x128xbf16>
    %39 = vector.shape_cast %38 : vector<1x384x128xbf16> to vector<384x128xbf16>
    %cst_13 = arith.constant dense<0.000000e+00> : vector<256x128xf32>
    %40 = tpu.matmul %37, %39, %cst_13 {dimension_numbers = #tpu.dot_dimension_numbers<[1], [0], [0], [1], [0, 0, 1, 1], [], []>} : vector<256x384xbf16>, vector<384x128xbf16>, vector<256x128xf32> -> vector<256x128xf32>
    %41 = arith.addf %28, %40 : vector<256x128xf32>
    %cst_14 = arith.constant 0.000000e+00 : f32
    %42 = vector.broadcast %cst_14 : f32 to vector<256x128xf32>
    %43 = arith.maximumf %41, %42 : vector<256x128xf32>
    %cst_15 = arith.constant 0.000000e+00 : f32
    %44 = vector.broadcast %cst_15 : f32 to vector<1x1x18x128xf32>
    %cst_16 = arith.constant 0.000000e+00 : f32
    %45 = vector.broadcast %cst_16 : f32 to vector<1x18x1x128xf32>
    %c0_17 = arith.constant 0 : index
    %c0_18 = arith.constant 0 : index
    %c0_19 = arith.constant 0 : index
    %c0_20 = arith.constant 0 : index
    %46 = vector.load %arg9[%c0_17, %c0_18, %c0_19, %c0_20] : memref<1x18x18x128xf32, #tpu.memory_space<vmem>>, vector<1x1x18x128xf32>
    tpu.vector_store %arg9[%c0_17, %c0_18, %c0_19, %c0_20], %44 {strides = array<i32>} : memref<1x18x18x128xf32, #tpu.memory_space<vmem>>, vector<1x1x18x128xf32>,
    %c0_21 = arith.constant 0 : index
    %c17 = arith.constant 17 : index
    %c0_22 = arith.constant 0 : index
    %c0_23 = arith.constant 0 : index
    %47 = vector.load %arg9[%c0_21, %c17, %c0_22, %c0_23] : memref<1x18x18x128xf32, #tpu.memory_space<vmem>>, vector<1x1x18x128xf32>
    tpu.vector_store %arg9[%c0_21, %c17, %c0_22, %c0_23], %44 {strides = array<i32>} : memref<1x18x18x128xf32, #tpu.memory_space<vmem>>, vector<1x1x18x128xf32>,
    %c0_24 = arith.constant 0 : index
    %c0_25 = arith.constant 0 : index
    %c0_26 = arith.constant 0 : index
    %c0_27 = arith.constant 0 : index
    %48 = vector.load %arg9[%c0_24, %c0_25, %c0_26, %c0_27] : memref<1x18x18x128xf32, #tpu.memory_space<vmem>>, vector<1x18x1x128xf32>
    tpu.vector_store %arg9[%c0_24, %c0_25, %c0_26, %c0_27], %45 {strides = array<i32>} : memref<1x18x18x128xf32, #tpu.memory_space<vmem>>, vector<1x18x1x128xf32>,
    %c0_28 = arith.constant 0 : index
    %c0_29 = arith.constant 0 : index
    %c17_30 = arith.constant 17 : index
    %c0_31 = arith.constant 0 : index
    %49 = vector.load %arg9[%c0_28, %c0_29, %c17_30, %c0_31] : memref<1x18x18x128xf32, #tpu.memory_space<vmem>>, vector<1x18x1x128xf32>
    tpu.vector_store %arg9[%c0_28, %c0_29, %c17_30, %c0_31], %45 {strides = array<i32>} : memref<1x18x18x128xf32, #tpu.memory_space<vmem>>, vector<1x18x1x128xf32>,
    %50 = vector.shape_cast %43 : vector<256x128xf32> to vector<1x16x16x128xf32>
    %c0_32 = arith.constant 0 : index
    %c1_33 = arith.constant 1 : index
    %c1_34 = arith.constant 1 : index
    %c0_35 = arith.constant 0 : index
    %51 = vector.load %arg9[%c0_32, %c1_33, %c1_34, %c0_35] : memref<1x18x18x128xf32, #tpu.memory_space<vmem>>, vector<1x16x16x128xf32>
    tpu.vector_store %arg9[%c0_32, %c1_33, %c1_34, %c0_35], %50 {strides = array<i32>} : memref<1x18x18x128xf32, #tpu.memory_space<vmem>>, vector<1x16x16x128xf32>,
    %c0_36 = arith.constant 0 : index
    %c0_37 = arith.constant 0 : index
    %c0_38 = arith.constant 0 : index
    %c0_39 = arith.constant 0 : index
    %52 = vector.load %arg9[%c0_36, %c0_37, %c0_38, %c0_39] : memref<1x18x18x128xf32, #tpu.memory_space<vmem>>, vector<1x18x18x128xf32>
    %c0_40 = arith.constant 0 : index
    %c0_41 = arith.constant 0 : index
    %53 = vector.load %arg6[%c0_40, %c0_41] : memref<1x128xf32, #tpu.memory_space<vmem>>, vector<1x128xf32>
    %54 = vector.extract_strided_slice %52 {offsets = [0, 0, 0, 0], sizes = [1, 18, 16, 128], strides = [1, 1, 1, 1]} : vector<1x18x18x128xf32> to vector<1x18x16x128xf32>
    %55 = vector.extract_strided_slice %54 {offsets = [0, 0, 0, 0], sizes = [1, 16, 16, 128], strides = [1, 1, 1, 1]} : vector<1x18x16x128xf32> to vector<1x16x16x128xf32>
    %56 = vector.extract_strided_slice %54 {offsets = [0, 1, 0, 0], sizes = [1, 16, 16, 128], strides = [1, 1, 1, 1]} : vector<1x18x16x128xf32> to vector<1x16x16x128xf32>
    %57 = vector.extract_strided_slice %54 {offsets = [0, 2, 0, 0], sizes = [1, 16, 16, 128], strides = [1, 1, 1, 1]} : vector<1x18x16x128xf32> to vector<1x16x16x128xf32>
    %58 = arith.truncf %55 : vector<1x16x16x128xf32> to vector<1x16x16x128xbf16>
    %59 = arith.truncf %56 : vector<1x16x16x128xf32> to vector<1x16x16x128xbf16>
    %60 = arith.truncf %57 : vector<1x16x16x128xf32> to vector<1x16x16x128xbf16>
    %61 = tpu.concatenate %58, %59, %60 in 3 : vector<1x16x16x128xbf16>, vector<1x16x16x128xbf16>, vector<1x16x16x128xbf16> -> vector<1x16x16x384xbf16>
    %62 = vector.shape_cast %61 : vector<1x16x16x384xbf16> to vector<256x384xbf16>
    %c0_42 = arith.constant 0 : index
    %c0_43 = arith.constant 0 : index
    %c0_44 = arith.constant 0 : index
    %63 = vector.load %arg3[%c0_42, %c0_43, %c0_44] : memref<3x384x128xbf16, #tpu.memory_space<vmem>>, vector<1x384x128xbf16>
    %64 = vector.shape_cast %63 : vector<1x384x128xbf16> to vector<384x128xbf16>
    %cst_45 = arith.constant dense<0.000000e+00> : vector<256x128xf32>
    %65 = tpu.matmul %62, %64, %cst_45 {dimension_numbers = #tpu.dot_dimension_numbers<[1], [0], [0], [1], [0, 0, 1, 1], [], []>} : vector<256x384xbf16>, vector<384x128xbf16>, vector<256x128xf32> -> vector<256x128xf32>
    %66 = vector.broadcast %53 : vector<1x128xf32> to vector<256x128xf32>
    %67 = arith.addf %65, %66 : vector<256x128xf32>
    %68 = vector.extract_strided_slice %52 {offsets = [0, 0, 1, 0], sizes = [1, 18, 16, 128], strides = [1, 1, 1, 1]} : vector<1x18x18x128xf32> to vector<1x18x16x128xf32>
    %69 = vector.extract_strided_slice %68 {offsets = [0, 0, 0, 0], sizes = [1, 16, 16, 128], strides = [1, 1, 1, 1]} : vector<1x18x16x128xf32> to vector<1x16x16x128xf32>
    %70 = vector.extract_strided_slice %68 {offsets = [0, 1, 0, 0], sizes = [1, 16, 16, 128], strides = [1, 1, 1, 1]} : vector<1x18x16x128xf32> to vector<1x16x16x128xf32>
    %71 = vector.extract_strided_slice %68 {offsets = [0, 2, 0, 0], sizes = [1, 16, 16, 128], strides = [1, 1, 1, 1]} : vector<1x18x16x128xf32> to vector<1x16x16x128xf32>
    %72 = arith.truncf %69 : vector<1x16x16x128xf32> to vector<1x16x16x128xbf16>
    %73 = arith.truncf %70 : vector<1x16x16x128xf32> to vector<1x16x16x128xbf16>
    %74 = arith.truncf %71 : vector<1x16x16x128xf32> to vector<1x16x16x128xbf16>
    %75 = tpu.concatenate %72, %73, %74 in 3 : vector<1x16x16x128xbf16>, vector<1x16x16x128xbf16>, vector<1x16x16x128xbf16> -> vector<1x16x16x384xbf16>
    %76 = vector.shape_cast %75 : vector<1x16x16x384xbf16> to vector<256x384xbf16>
    %c1_46 = arith.constant 1 : index
    %c0_47 = arith.constant 0 : index
    %c0_48 = arith.constant 0 : index
    %77 = vector.load %arg3[%c1_46, %c0_47, %c0_48] : memref<3x384x128xbf16, #tpu.memory_space<vmem>>, vector<1x384x128xbf16>
    %78 = vector.shape_cast %77 : vector<1x384x128xbf16> to vector<384x128xbf16>
    %cst_49 = arith.constant dense<0.000000e+00> : vector<256x128xf32>
    %79 = tpu.matmul %76, %78, %cst_49 {dimension_numbers = #tpu.dot_dimension_numbers<[1], [0], [0], [1], [0, 0, 1, 1], [], []>} : vector<256x384xbf16>, vector<384x128xbf16>, vector<256x128xf32> -> vector<256x128xf32>
    %80 = arith.addf %67, %79 : vector<256x128xf32>
    %81 = vector.extract_strided_slice %52 {offsets = [0, 0, 2, 0], sizes = [1, 18, 16, 128], strides = [1, 1, 1, 1]} : vector<1x18x18x128xf32> to vector<1x18x16x128xf32>
    %82 = vector.extract_strided_slice %81 {offsets = [0, 0, 0, 0], sizes = [1, 16, 16, 128], strides = [1, 1, 1, 1]} : vector<1x18x16x128xf32> to vector<1x16x16x128xf32>
    %83 = vector.extract_strided_slice %81 {offsets = [0, 1, 0, 0], sizes = [1, 16, 16, 128], strides = [1, 1, 1, 1]} : vector<1x18x16x128xf32> to vector<1x16x16x128xf32>
    %84 = vector.extract_strided_slice %81 {offsets = [0, 2, 0, 0], sizes = [1, 16, 16, 128], strides = [1, 1, 1, 1]} : vector<1x18x16x128xf32> to vector<1x16x16x128xf32>
    %85 = arith.truncf %82 : vector<1x16x16x128xf32> to vector<1x16x16x128xbf16>
    %86 = arith.truncf %83 : vector<1x16x16x128xf32> to vector<1x16x16x128xbf16>
    %87 = arith.truncf %84 : vector<1x16x16x128xf32> to vector<1x16x16x128xbf16>
    %88 = tpu.concatenate %85, %86, %87 in 3 : vector<1x16x16x128xbf16>, vector<1x16x16x128xbf16>, vector<1x16x16x128xbf16> -> vector<1x16x16x384xbf16>
    %89 = vector.shape_cast %88 : vector<1x16x16x384xbf16> to vector<256x384xbf16>
    %c2_50 = arith.constant 2 : index
    %c0_51 = arith.constant 0 : index
    %c0_52 = arith.constant 0 : index
    %90 = vector.load %arg3[%c2_50, %c0_51, %c0_52] : memref<3x384x128xbf16, #tpu.memory_space<vmem>>, vector<1x384x128xbf16>
    %91 = vector.shape_cast %90 : vector<1x384x128xbf16> to vector<384x128xbf16>
    %cst_53 = arith.constant dense<0.000000e+00> : vector<256x128xf32>
    %92 = tpu.matmul %89, %91, %cst_53 {dimension_numbers = #tpu.dot_dimension_numbers<[1], [0], [0], [1], [0, 0, 1, 1], [], []>} : vector<256x384xbf16>, vector<384x128xbf16>, vector<256x128xf32> -> vector<256x128xf32>
    %93 = arith.addf %80, %92 : vector<256x128xf32>
    %94 = vector.extract_strided_slice %0 {offsets = [0, 1, 1, 0], sizes = [1, 16, 16, 128], strides = [1, 1, 1, 1]} : vector<1x18x18x128xf32> to vector<1x16x16x128xf32>
    %95 = vector.shape_cast %94 : vector<1x16x16x128xf32> to vector<256x128xf32>
    %96 = arith.truncf %95 : vector<256x128xf32> to vector<256x128xbf16>
    %c0_54 = arith.constant 0 : index
    %c0_55 = arith.constant 0 : index
    %97 = vector.load %arg4[%c0_54, %c0_55] : memref<128x128xbf16, #tpu.memory_space<vmem>>, vector<128x128xbf16>
    %cst_56 = arith.constant dense<0.000000e+00> : vector<256x128xf32>
    %98 = tpu.matmul %96, %97, %cst_56 {dimension_numbers = #tpu.dot_dimension_numbers<[1], [0], [0], [1], [0, 0, 1, 1], [], []>} : vector<256x128xbf16>, vector<128x128xbf16>, vector<256x128xf32> -> vector<256x128xf32>
    %c0_57 = arith.constant 0 : index
    %c0_58 = arith.constant 0 : index
    %99 = vector.load %arg7[%c0_57, %c0_58] : memref<1x128xf32, #tpu.memory_space<vmem>>, vector<1x128xf32>
    %100 = vector.broadcast %99 : vector<1x128xf32> to vector<256x128xf32>
    %101 = arith.addf %98, %100 : vector<256x128xf32>
    %102 = arith.addf %93, %101 : vector<256x128xf32>
    %cst_59 = arith.constant 0.000000e+00 : f32
    %103 = vector.broadcast %cst_59 : f32 to vector<256x128xf32>
    %104 = arith.maximumf %102, %103 : vector<256x128xf32>
    %105 = vector.shape_cast %104 : vector<256x128xf32> to vector<1x16x16x128xf32>
    %c0_60 = arith.constant 0 : index
    %c0_61 = arith.constant 0 : index
    %c0_62 = arith.constant 0 : index
    %c0_63 = arith.constant 0 : index
    %106 = vector.load %arg8[%c0_60, %c0_61, %c0_62, %c0_63] : memref<1x16x16x128xf32, #tpu.memory_space<vmem>>, vector<1x16x16x128xf32>
    tpu.vector_store %arg8[%c0_60, %c0_61, %c0_62, %c0_63], %105 {strides = array<i32>} : memref<1x16x16x128xf32, #tpu.memory_space<vmem>>, vector<1x16x16x128xf32>,
    return
  }
  func.func @transform_0(%arg0: i32) -> (i32, i32, i32, i32) {
    %c0_i32 = arith.constant 0 : i32
    %c0_i32_0 = arith.constant 0 : i32
    %c0_i32_1 = arith.constant 0 : i32
    %c0_i32_2 = arith.constant 0 : i32
    return %arg0, %c0_i32, %c0_i32_0, %c0_i32_1 : i32, i32, i32, i32
  }
  func.func @transform_1(%arg0: i32) -> (i32, i32, i32) {
    %c0_i32 = arith.constant 0 : i32
    %c0_i32_0 = arith.constant 0 : i32
    %c0_i32_1 = arith.constant 0 : i32
    %c0_i32_2 = arith.constant 0 : i32
    return %c0_i32, %c0_i32_0, %c0_i32_1 : i32, i32, i32
  }
  func.func @transform_2(%arg0: i32) -> (i32, i32, i32) {
    %c0_i32 = arith.constant 0 : i32
    %c0_i32_0 = arith.constant 0 : i32
    %c0_i32_1 = arith.constant 0 : i32
    %c0_i32_2 = arith.constant 0 : i32
    return %c0_i32, %c0_i32_0, %c0_i32_1 : i32, i32, i32
  }
  func.func @transform_3(%arg0: i32) -> (i32, i32) {
    %c0_i32 = arith.constant 0 : i32
    %c0_i32_0 = arith.constant 0 : i32
    %c0_i32_1 = arith.constant 0 : i32
    return %c0_i32, %c0_i32_0 : i32, i32
  }
  func.func @transform_4(%arg0: i32) -> (i32, i32) {
    %c0_i32 = arith.constant 0 : i32
    %c0_i32_0 = arith.constant 0 : i32
    %c0_i32_1 = arith.constant 0 : i32
    return %c0_i32, %c0_i32_0 : i32, i32
  }
  func.func @transform_5(%arg0: i32) -> (i32, i32) {
    %c0_i32 = arith.constant 0 : i32
    %c0_i32_0 = arith.constant 0 : i32
    %c0_i32_1 = arith.constant 0 : i32
    return %c0_i32, %c0_i32_0 : i32, i32
  }
  func.func @transform_6(%arg0: i32) -> (i32, i32) {
    %c0_i32 = arith.constant 0 : i32
    %c0_i32_0 = arith.constant 0 : i32
    %c0_i32_1 = arith.constant 0 : i32
    return %c0_i32, %c0_i32_0 : i32, i32
  }
  func.func @transform_7(%arg0: i32) -> (i32, i32, i32, i32) {
    %c0_i32 = arith.constant 0 : i32
    %c0_i32_0 = arith.constant 0 : i32
    %c0_i32_1 = arith.constant 0 : i32
    %c0_i32_2 = arith.constant 0 : i32
    return %arg0, %c0_i32, %c0_i32_0, %c0_i32_1 : i32, i32, i32, i32
  }
}

</mosaic_0001>

<llo_original>
// kernel: tpu_custom_call.1
$region0: #{tpu_custom_call.1}
  #allocation0 [shape = 'u32[]', space=smem, size = 0x4, offset = 0x4, fixed_abs, tag = 'smem constant byte address 0x4 - core index']
  #allocation1 [shape = 'u32[144,128]{1,0:T(1,128)}', space=vmem, size = 0x12000, scoped, tag = 'internal scratch']
  #allocation2 [shape = 'f32[1,18,18,128]{3,2,1,0:T(8,128)}', space=vmem, size = 0x36000, scoped, tag = 'scratch operand']
  %s0 = inlined_call_operand.vmem [shape: f32[2,18,18,128], index: 0, kind: input, shape index: {}]
  %s1 = inlined_call_operand.vmem [shape: bf16[3,384,128], index: 1, kind: input, shape index: {}]
  %s2 = inlined_call_operand.vmem [shape: bf16[3,384,128], index: 2, kind: input, shape index: {}]
  %s3 = inlined_call_operand.vmem [shape: bf16[128,128], index: 3, kind: input, shape index: {}]
  %s4 = inlined_call_operand.vmem [shape: f32[1,128], index: 4, kind: input, shape index: {}]
  %s5 = inlined_call_operand.vmem [shape: f32[1,128], index: 5, kind: input, shape index: {}]
  %s6 = inlined_call_operand.vmem [shape: f32[1,128], index: 6, kind: input, shape index: {}]
  %s7 = inlined_call_operand.hbm [shape: f32[2,16,16,128], index: 7, kind: output, shape index: {}]
  %s8 = sld [smem:[#allocation0]]
  $region61: #{tpu_custom_call.1} parent=0
    _
  %s10 = ssub.s32 1, %s8
  %s11 = scalar_select 0, %s10, %s8
  $region1: #{tpu_custom_call.1} parent=0
    #allocation3 [shape = 'u8[262144]{0}', space=vmem, size = 0x40000, scoped, tag = 'output window, operand 0']
    #allocation4 [shape = 's32[2]{0}', space=sflag, size = 0x8, scoped, tag = 'scoped memory for tpu_custom_call.1']
    %12 = vsyncpa [#allocation4], 0
    %s13 = scalar_lea.sflag [#allocation4], 1
    %14 = vsyncpa %s13, 0
    loop: start=0, step=1, limit=4
    $region2: #{tpu_custom_call.1} parent=1 // loop_pre_header
      _
    $region3: #{tpu_custom_call.1} parent=1 // loop_header
      %s16 = sphi 0, %s20
      %p17 = scmp.ge.s32.totalorder %s16, 4
      %s26 = sphi 0, %s28
      %s29 = sphi 0, %s26
      %s30 = sphi 0, %s29
      %s46 = sphi 0, %s30
      %s50 = sphi 0, %s50
      %s52 = sphi 0, %s50
      %s53 = sphi 0, %s52
      %s67 = sphi 0, %s53
      %s71 = sphi 0, %s71
      %s73 = sphi 0, %s71
      %s74 = sphi 0, %s73
      %s88 = sphi 0, %s74
      %s92 = sphi 0, %s92
      %s94 = sphi 0, %s92
      %s95 = sphi 0, %s94
      %s109 = sphi 0, %s95
      %s113 = sphi 0, %s113
      %s115 = sphi 0, %s113
      %s116 = sphi 0, %s115
      %s130 = sphi 0, %s116
      %s134 = sphi 0, %s134
      %s136 = sphi 0, %s134
      %s137 = sphi 0, %s136
      %s151 = sphi 0, %s137
      %s155 = sphi 0, %s155
      %s157 = sphi 0, %s155
      %s158 = sphi 0, %s157
      %s172 = sphi 0, %s158
      %s178 = sphi 0, %s180
      %s181 = sphi 0, %s178
      %s182 = sphi 0, %s181
      %s198 = sphi 0, %s182
    $region4: #{tpu_custom_call.1} parent=1 // loop_header_branch
      %19 = sbr.rel (%p17) target = $region8
    $region5: #{tpu_custom_call.1} parent=1 // loop_body
      %s21 = ssub.s32 %s16, 1
      %s22 = ssub.s32 %s16, 2
      %s23 = sadd.s32 %s16, 1
      %s24 = ssub.s32 %s16, %s23
      %p25 = scmp.eq.s32.totalorder %s24, 0
      %s27 = sadd.s32 %s26, 1
      %s28 = scalar_select %p25, %s26, %s27
      %p31 = pneg %p25
      %p32 = scmp.eq.s32.totalorder %s16, 1
      %p33 = por %p31, %p32
      %p34 = scmp.ne.s32.totalorder %s26, %s29
      %p35 = scmp.eq.s32.totalorder %s16, 0
      %p36 = por %p34, %p35
      %p37 = scmp.ne.s32.totalorder %s26, %s29
      %p38 = scmp.eq.s32.totalorder %s21, 1
      %p39 = por %p37, %p38
      %p40 = scmp.ne.s32.totalorder %s29, %s30
      %p41 = scmp.eq.s32.totalorder %s21, 0
      %p42 = por %p40, %p41
      %p43 = scmp.ne.s32.totalorder %s29, %s30
      %p44 = scmp.eq.s32.totalorder %s22, 1
      %p45 = por %p43, %p44
      %p47 = scmp.ne.s32.totalorder %s30, %s46
      %p48 = scmp.eq.s32.totalorder %s22, 0
      %p49 = por %p47, %p48
      %s51 = sadd.s32 %s50, 1
      %p54 = scmp.eq.s32.totalorder %s16, 1
      %p55 = scmp.ne.s32.totalorder %s50, %s52
      %p56 = scmp.eq.s32.totalorder %s16, 0
      %p57 = por %p55, %p56
      %p58 = scmp.ne.s32.totalorder %s50, %s52
      %p59 = scmp.eq.s32.totalorder %s21, 1
      %p60 = por %p58, %p59
      %p61 = scmp.ne.s32.totalorder %s52, %s53
      %p62 = scmp.eq.s32.totalorder %s21, 0
      %p63 = por %p61, %p62
      %p64 = scmp.ne.s32.totalorder %s52, %s53
      %p65 = scmp.eq.s32.totalorder %s22, 1
      %p66 = por %p64, %p65
      %p68 = scmp.ne.s32.totalorder %s53, %s67
      %p69 = scmp.eq.s32.totalorder %s22, 0
      %p70 = por %p68, %p69
      %s72 = sadd.s32 %s71, 1
      %p75 = scmp.eq.s32.totalorder %s16, 1
      %p76 = scmp.ne.s32.totalorder %s71, %s73
      %p77 = scmp.eq.s32.totalorder %s16, 0
      %p78 = por %p76, %p77
      %p79 = scmp.ne.s32.totalorder %s71, %s73
      %p80 = scmp.eq.s32.totalorder %s21, 1
      %p81 = por %p79, %p80
      %p82 = scmp.ne.s32.totalorder %s73, %s74
      %p83 = scmp.eq.s32.totalorder %s21, 0
      %p84 = por %p82, %p83
      %p85 = scmp.ne.s32.totalorder %s73, %s74
      %p86 = scmp.eq.s32.totalorder %s22, 1
      %p87 = por %p85, %p86
      %p89 = scmp.ne.s32.totalorder %s74, %s88
      %p90 = scmp.eq.s32.totalorder %s22, 0
      %p91 = por %p89, %p90
      %s93 = sadd.s32 %s92, 1
      %p96 = scmp.eq.s32.totalorder %s16, 1
      %p97 = scmp.ne.s32.totalorder %s92, %s94
      %p98 = scmp.eq.s32.totalorder %s16, 0
      %p99 = por %p97, %p98
      %p100 = scmp.ne.s32.totalorder %s92, %s94
      %p101 = scmp.eq.s32.totalorder %s21, 1
      %p102 = por %p100, %p101
      %p103 = scmp.ne.s32.totalorder %s94, %s95
      %p104 = scmp.eq.s32.totalorder %s21, 0
      %p105 = por %p103, %p104
      %p106 = scmp.ne.s32.totalorder %s94, %s95
      %p107 = scmp.eq.s32.totalorder %s22, 1
      %p108 = por %p106, %p107
      %p110 = scmp.ne.s32.totalorder %s95, %s109
      %p111 = scmp.eq.s32.totalorder %s22, 0
      %p112 = por %p110, %p111
      %s114 = sadd.s32 %s113, 1
      %p117 = scmp.eq.s32.totalorder %s16, 1
      %p118 = scmp.ne.s32.totalorder %s113, %s115
      %p119 = scmp.eq.s32.totalorder %s16, 0
      %p120 = por %p118, %p119
      %p121 = scmp.ne.s32.totalorder %s113, %s115
      %p122 = scmp.eq.s32.totalorder %s21, 1
      %p123 = por %p121, %p122
      %p124 = scmp.ne.s32.totalorder %s115, %s116
      %p125 = scmp.eq.s32.totalorder %s21, 0
      %p126 = por %p124, %p125
      %p127 = scmp.ne.s32.totalorder %s115, %s116
      %p128 = scmp.eq.s32.totalorder %s22, 1
      %p129 = por %p127, %p128
      %p131 = scmp.ne.s32.totalorder %s116, %s130
      %p132 = scmp.eq.s32.totalorder %s22, 0
      %p133 = por %p131, %p132
      %s135 = sadd.s32 %s134, 1
      %p138 = scmp.eq.s32.totalorder %s16, 1
      %p139 = scmp.ne.s32.totalorder %s134, %s136
      %p140 = scmp.eq.s32.totalorder %s16, 0
      %p141 = por %p139, %p140
      %p142 = scmp.ne.s32.totalorder %s134, %s136
      %p143 = scmp.eq.s32.totalorder %s21, 1
      %p144 = por %p142, %p143
      %p145 = scmp.ne.s32.totalorder %s136, %s137
      %p146 = scmp.eq.s32.totalorder %s21, 0
      %p147 = por %p145, %p146
      %p148 = scmp.ne.s32.totalorder %s136, %s137
      %p149 = scmp.eq.s32.totalorder %s22, 1
      %p150 = por %p148, %p149
      %p152 = scmp.ne.s32.totalorder %s137, %s151
      %p153 = scmp.eq.s32.totalorder %s22, 0
      %p154 = por %p152, %p153
      %s156 = sadd.s32 %s155, 1
      %p159 = scmp.eq.s32.totalorder %s16, 1
      %p160 = scmp.ne.s32.totalorder %s155, %s157
      %p161 = scmp.eq.s32.totalorder %s16, 0
      %p162 = por %p160, %p161
      %p163 = scmp.ne.s32.totalorder %s155, %s157
      %p164 = scmp.eq.s32.totalorder %s21, 1
      %p165 = por %p163, %p164
      %p166 = scmp.ne.s32.totalorder %s157, %s158
      %p167 = scmp.eq.s32.totalorder %s21, 0
      %p168 = por %p166, %p167
      %p169 = scmp.ne.s32.totalorder %s157, %s158
      %p170 = scmp.eq.s32.totalorder %s22, 1
      %p171 = por %p169, %p170
      %p173 = scmp.ne.s32.totalorder %s158, %s172
      %p174 = scmp.eq.s32.totalorder %s22, 0
      %p175 = por %p173, %p174
      %s176 = ssub.s32 %s16, %s23
      %p177 = scmp.eq.s32.totalorder %s176, 0
      %s179 = sadd.s32 %s178, 1
      %s180 = scalar_select %p177, %s178, %s179
      %p183 = pneg %p177
      %p184 = scmp.eq.s32.totalorder %s16, 1
      %p185 = por %p183, %p184
      %p186 = scmp.ne.s32.totalorder %s178, %s181
      %p187 = scmp.eq.s32.totalorder %s16, 0
      %p188 = por %p186, %p187
      %p189 = scmp.ne.s32.totalorder %s178, %s181
      %p190 = scmp.eq.s32.totalorder %s21, 1
      %p191 = por %p189, %p190
      %p192 = scmp.ne.s32.totalorder %s181, %s182
      %p193 = scmp.eq.s32.totalorder %s21, 0
      %p194 = por %p192, %p193
      %p195 = scmp.ne.s32.totalorder %s181, %s182
      %p196 = scmp.eq.s32.totalorder %s22, 1
      %p197 = por %p195, %p196
      %p199 = scmp.ne.s32.totalorder %s182, %s198
      %p200 = scmp.eq.s32.totalorder %s22, 0
      %p201 = por %p199, %p200
      %p202 = scmp.le.s32.totalorder 1, %s16
      %p203 = scmp.lt.s32.totalorder %s16, 3
      %p204 = pnand %p202, %p203
      %p205 = pneg %p204
      // Predicated region
      $region9: #{tpu_custom_call.1} parent=5 // pred_check
        _
      $region10: #{tpu_custom_call.1} parent=5 // pred_check_branch
        %207 = sbr.rel (%p204) target = $region12
      $region11: #{tpu_custom_call.1} parent=5 // pred_region
        %s208 = ssub.s32 %s16, 1
        // Predicated region
        $region13: #{tpu_custom_call.1} parent=11 // pred_check
          %p209 = pneg %p63
        $region14: #{tpu_custom_call.1} parent=11 // pred_check_branch
          %211 = sbr.rel (%p209) target = $region16
        $region15: #{tpu_custom_call.1} parent=11 // pred_region
          _
        $region16: #{tpu_custom_call.1} parent=11 // pred_fallthru
          _
        // Predicated region
        $region17: #{tpu_custom_call.1} parent=11 // pred_check
          %p212 = pneg %p84
        $region18: #{tpu_custom_call.1} parent=11 // pred_check_branch
          %214 = sbr.rel (%p212) target = $region20
        $region19: #{tpu_custom_call.1} parent=11 // pred_region
          _
        $region20: #{tpu_custom_call.1} parent=11 // pred_fallthru
          _
        // Predicated region
        $region21: #{tpu_custom_call.1} parent=11 // pred_check
          %p215 = pneg %p105
        $region22: #{tpu_custom_call.1} parent=11 // pred_check_branch
          %217 = sbr.rel (%p215) target = $region24
        $region23: #{tpu_custom_call.1} parent=11 // pred_region
          _
        $region24: #{tpu_custom_call.1} parent=11 // pred_fallthru
          _
        // Predicated region
        $region25: #{tpu_custom_call.1} parent=11 // pred_check
          %p218 = pneg %p126
        $region26: #{tpu_custom_call.1} parent=11 // pred_check_branch
          %220 = sbr.rel (%p218) target = $region28
        $region27: #{tpu_custom_call.1} parent=11 // pred_region
          _
        $region28: #{tpu_custom_call.1} parent=11 // pred_fallthru
          _
        // Predicated region
        $region29: #{tpu_custom_call.1} parent=11 // pred_check
          %p221 = pneg %p147
        $region30: #{tpu_custom_call.1} parent=11 // pred_check_branch
          %223 = sbr.rel (%p221) target = $region32
        $region31: #{tpu_custom_call.1} parent=11 // pred_region
          _
        $region32: #{tpu_custom_call.1} parent=11 // pred_fallthru
          _
        // Predicated region
        $region33: #{tpu_custom_call.1} parent=11 // pred_check
          %p224 = pneg %p168
        $region34: #{tpu_custom_call.1} parent=11 // pred_check_branch
          %226 = sbr.rel (%p224) target = $region36
        $region35: #{tpu_custom_call.1} parent=11 // pred_region
          _
        $region36: #{tpu_custom_call.1} parent=11 // pred_fallthru
          _
      $region12: #{tpu_custom_call.1} parent=5 // pred_fallthru
        _
      %p227 = scmp.lt.s32.totalorder %s16, 2
      // Predicated region
      $region37: #{tpu_custom_call.1} parent=5 // pred_check
        %p228 = pneg %p227
      $region38: #{tpu_custom_call.1} parent=5 // pred_check_branch
        %230 = sbr.rel (%p228) target = $region40
      $region39: #{tpu_custom_call.1} parent=5 // pred_region
        // Predicated region
        $region41: #{tpu_custom_call.1} parent=39 // pred_check
          %p231 = pneg %p36
        $region42: #{tpu_custom_call.1} parent=39 // pred_check_branch
          %233 = sbr.rel (%p231) target = $region44
        $region43: #{tpu_custom_call.1} parent=39 // pred_region
          %p234 = scmp.lt.s32.totalorder %s16, 1
          %s235 = scalar_select %p234, %s16, 1
          %s236 = smul.addr %s235, 54
          %s237 = smul.addr %s236, 8
          %s238 = scalar_lea.vmem %s0, %s237
        $region44: #{tpu_custom_call.1} parent=39 // pred_fallthru
          _
      $region40: #{tpu_custom_call.1} parent=5 // pred_fallthru
        _
      %p239 = scmp.le.s32.totalorder 1, %s16
      %p240 = scmp.lt.s32.totalorder %s16, 3
      %p241 = pnand %p239, %p240
      %p242 = pneg %p241
      // Predicated region
      $region45: #{tpu_custom_call.1} parent=5 // pred_check
        _
      $region46: #{tpu_custom_call.1} parent=5 // pred_check_branch
        %244 = sbr.rel (%p241) target = $region48
      $region47: #{tpu_custom_call.1} parent=5 // pred_region
        %s245 = ssub.s32 %s16, 1
        %p246 = scmp.lt.s32.totalorder %s21, 1
        %s247 = scalar_select %p246, %s21, 1
        %s248 = smul.addr %s247, 54
        %s249 = smul.addr %s248, 8
        %s250 = scalar_lea.vmem %s0, %s249
        %p251 = pneg %p42
        %p252 = pneg %p39
        %p253 = pneg %p63
        %p254 = pneg %p60
        %p255 = pneg %p84
        %p256 = pneg %p81
        %p257 = pneg %p105
        %p258 = pneg %p102
        %p259 = pneg %p126
        %p260 = pneg %p123
        %p261 = pneg %p147
        %p262 = pneg %p144
        %p263 = pneg %p168
        %p264 = pneg %p165
        %p265 = pneg %p194
        %p266 = pneg %p191
        %s267 = sand.u32 %s181, 1
        %s268 = scalar_lea.sflag [#allocation4], %s267
        %s269 = sand.u32 %s181, 1
        %s270 = smul.addr %s269, 256
        %s271 = scalar_lea.vmem [#allocation3], %s270
        %p272 = scmp.lt.s32.totalorder %s21, 1
        %s273 = scalar_select %p272, %s21, 1
        %s274 = smul.addr %s273, 54
        %s275 = smul.addr %s274, 8
        %s276 = scalar_lea.vmem %s0, %s275
        %v278 = vld [vmem:[%s276] sm:$0xff]
        %v279 = vld [vmem:[%s276 + $0x8] sm:$0xff]
        %v280 = vld [vmem:[%s276 + $0x10] sm:$0x3]
        %v281 = vld [vmem:[%s276 + $0x18] sm:$0xff]
        %v282 = vld [vmem:[%s276 + $0x20] sm:$0xff]
        %v283 = vld [vmem:[%s276 + $0x28] sm:$0x3]
        %v284 = vld [vmem:[%s276 + $0x30] sm:$0xff]
        %v285 = vld [vmem:[%s276 + $0x38] sm:$0xff]
        %v286 = vld [vmem:[%s276 + $0x40] sm:$0x3]
        %v287 = vld [vmem:[%s276 + $0x48] sm:$0xff]
        %v288 = vld [vmem:[%s276 + $0x50] sm:$0xff]
        %v289 = vld [vmem:[%s276 + $0x58] sm:$0x3]
        %v290 = vld [vmem:[%s276 + $0x60] sm:$0xff]
        %v291 = vld [vmem:[%s276 + $0x68] sm:$0xff]
        %v292 = vld [vmem:[%s276 + $0x70] sm:$0x3]
        %v293 = vld [vmem:[%s276 + $0x78] sm:$0xff]
        %v294 = vld [vmem:[%s276 + $0x80] sm:$0xff]
        %v295 = vld [vmem:[%s276 + $0x88] sm:$0x3]
        %v296 = vld [vmem:[%s276 + $0x90] sm:$0xff]
        %v297 = vld [vmem:[%s276 + $0x98] sm:$0xff]
        %v298 = vld [vmem:[%s276 + $0xa0] sm:$0x3]
        %v299 = vld [vmem:[%s276 + $0xa8] sm:$0xff]
        %v300 = vld [vmem:[%s276 + $0xb0] sm:$0xff]
        %v301 = vld [vmem:[%s276 + $0xb8] sm:$0x3]
        %v302 = vld [vmem:[%s276 + $0xc0] sm:$0xff]
        %v303 = vld [vmem:[%s276 + $0xc8] sm:$0xff]
        %v304 = vld [vmem:[%s276 + $0xd0] sm:$0x3]
        %v305 = vld [vmem:[%s276 + $0xd8] sm:$0xff]
        %v306 = vld [vmem:[%s276 + $0xe0] sm:$0xff]
        %v307 = vld [vmem:[%s276 + $0xe8] sm:$0x3]
        %v308 = vld [vmem:[%s276 + $0xf0] sm:$0xff]
        %v309 = vld [vmem:[%s276 + $0xf8] sm:$0xff]
        %v310 = vld [vmem:[%s276 + $0x100] sm:$0x3]
        %v311 = vld [vmem:[%s276 + $0x108] sm:$0xff]
        %v312 = vld [vmem:[%s276 + $0x110] sm:$0xff]
        %v313 = vld [vmem:[%s276 + $0x118] sm:$0x3]
        %v314 = vld [vmem:[%s276 + $0x120] sm:$0xff]
        %v315 = vld [vmem:[%s276 + $0x128] sm:$0xff]
        %v316 = vld [vmem:[%s276 + $0x130] sm:$0x3]
        %v317 = vld [vmem:[%s276 + $0x138] sm:$0xff]
        %v318 = vld [vmem:[%s276 + $0x140] sm:$0xff]
        %v319 = vld [vmem:[%s276 + $0x148] sm:$0x3]
        %v320 = vld [vmem:[%s276 + $0x150] sm:$0xff]
        %v321 = vld [vmem:[%s276 + $0x158] sm:$0xff]
        %v322 = vld [vmem:[%s276 + $0x160] sm:$0x3]
        %v323 = vld [vmem:[%s276 + $0x168] sm:$0xff]
        %v324 = vld [vmem:[%s276 + $0x170] sm:$0xff]
        %v325 = vld [vmem:[%s276 + $0x178] sm:$0x3]
        %v326 = vld [vmem:[%s276 + $0x180] sm:$0xff]
        %v327 = vld [vmem:[%s276 + $0x188] sm:$0xff]
        %v328 = vld [vmem:[%s276 + $0x190] sm:$0x3]
        %v329 = vld [vmem:[%s276 + $0x198] sm:$0xff]
        %v330 = vld [vmem:[%s276 + $0x1a0] sm:$0xff]
        %v331 = vld [vmem:[%s276 + $0x1a8] sm:$0x3]
        %v332 = vld [vmem:[%s4] sm:$0x1]
        %v333 = vpack.c.bf16 %v279, %v278
        %v334 = vpack.c.bf16 %v282, %v281
        %v335 = vpack.c.bf16 %v285, %v284
        %v336 = vpack.c.bf16 %v288, %v287
        %v337 = vpack.c.bf16 %v291, %v290
        %v338 = vpack.c.bf16 %v294, %v293
        %v339 = vpack.c.bf16 %v297, %v296
        %v340 = vpack.c.bf16 %v300, %v299
        %v341 = vpack.c.bf16 %v303, %v302
        %v342 = vpack.c.bf16 %v306, %v305
        %v343 = vpack.c.bf16 %v309, %v308
        %v344 = vpack.c.bf16 %v312, %v311
        %v345 = vpack.c.bf16 %v315, %v314
        %v346 = vpack.c.bf16 %v318, %v317
        %v347 = vpack.c.bf16 %v321, %v320
        %v348 = vpack.c.bf16 %v324, %v323
        %v349 = vpack.c.bf16 %v327, %v326
        %v350 = vpack.c.bf16 %v330, %v329
        %v351 = vld [vmem:[%s1] sm:$0xf]
        %v352 = vld [vmem:[%s1 + $0x4] sm:$0xf]
        %v353 = vld [vmem:[%s1 + $0x8] sm:$0xf]
        %v354 = vld [vmem:[%s1 + $0xc] sm:$0xf]
        %v355 = vld [vmem:[%s1 + $0x10] sm:$0xf]
        %v356 = vld [vmem:[%s1 + $0x14] sm:$0xf]
        %v357 = vld [vmem:[%s1 + $0x18] sm:$0xf]
        %v358 = vld [vmem:[%s1 + $0x1c] sm:$0xf]
        %v359 = vld [vmem:[%s1 + $0x20] sm:$0xf]
        %v360 = vld [vmem:[%s1 + $0x24] sm:$0xf]
        %v361 = vld [vmem:[%s1 + $0x28] sm:$0xf]
        %v362 = vld [vmem:[%s1 + $0x2c] sm:$0xf]
        %v363 = vld [vmem:[%s1 + $0x30] sm:$0xf]
        %v364 = vld [vmem:[%s1 + $0x34] sm:$0xf]
        %v365 = vld [vmem:[%s1 + $0x38] sm:$0xf]
        %v366 = vld [vmem:[%s1 + $0x3c] sm:$0xf]
        %v367 = vld [vmem:[%s1 + $0x40] sm:$0xf]
        %v368 = vld [vmem:[%s1 + $0x44] sm:$0xf]
        %v369 = vld [vmem:[%s1 + $0x48] sm:$0xf]
        %v370 = vld [vmem:[%s1 + $0x4c] sm:$0xf]
        %v371 = vld [vmem:[%s1 + $0x50] sm:$0xf]
        %v372 = vld [vmem:[%s1 + $0x54] sm:$0xf]
        %v373 = vld [vmem:[%s1 + $0x58] sm:$0xf]
        %v374 = vld [vmem:[%s1 + $0x5c] sm:$0xf]
        %v375 = vld [vmem:[%s1 + $0x60] sm:$0xf]
        %v376 = vld [vmem:[%s1 + $0x64] sm:$0xf]
        %v377 = vld [vmem:[%s1 + $0x68] sm:$0xf]
        %v378 = vld [vmem:[%s1 + $0x6c] sm:$0xf]
        %v379 = vld [vmem:[%s1 + $0x70] sm:$0xf]
        %v380 = vld [vmem:[%s1 + $0x74] sm:$0xf]
        %v381 = vld [vmem:[%s1 + $0x78] sm:$0xf]
        %v382 = vld [vmem:[%s1 + $0x7c] sm:$0xf]
        %v383 = vld [vmem:[%s1 + $0x80] sm:$0xf]
        %v384 = vld [vmem:[%s1 + $0x84] sm:$0xf]
        %v385 = vld [vmem:[%s1 + $0x88] sm:$0xf]
        %v386 = vld [vmem:[%s1 + $0x8c] sm:$0xf]
        %v387 = vld [vmem:[%s1 + $0x90] sm:$0xf]
        %v388 = vld [vmem:[%s1 + $0x94] sm:$0xf]
        %v389 = vld [vmem:[%s1 + $0x98] sm:$0xf]
        %v390 = vld [vmem:[%s1 + $0x9c] sm:$0xf]
        %v391 = vld [vmem:[%s1 + $0xa0] sm:$0xf]
        %v392 = vld [vmem:[%s1 + $0xa4] sm:$0xf]
        %v393 = vld [vmem:[%s1 + $0xa8] sm:$0xf]
        %v394 = vld [vmem:[%s1 + $0xac] sm:$0xf]
        %v395 = vld [vmem:[%s1 + $0xb0] sm:$0xf]
        %v396 = vld [vmem:[%s1 + $0xb4] sm:$0xf]
        %v397 = vld [vmem:[%s1 + $0xb8] sm:$0xf]
        %v398 = vld [vmem:[%s1 + $0xbc] sm:$0xf]
        %v400 = vlaneseq
        %v401 = vshrl.u32 %v400, 7
        %v402 = vsub.s32 0, %v401
        %v403 = vrot.slane %v332, %v402
        %v453 = vunpack.c.l.b16 %v351
        %v454 = vunpack.c.l.b16 %v352
        %v455 = vunpack.c.l.b16 %v353
        %v456 = vunpack.c.l.b16 %v354
        %v457 = vunpack.c.l.b16 %v355
        %v458 = vunpack.c.l.b16 %v356
        %v459 = vunpack.c.l.b16 %v357
        %v460 = vunpack.c.l.b16 %v358
        %v461 = vunpack.c.l.b16 %v359
        %v462 = vunpack.c.l.b16 %v360
        %v463 = vunpack.c.l.b16 %v361
        %v464 = vunpack.c.l.b16 %v362
        %v465 = vunpack.c.l.b16 %v363
        %v466 = vunpack.c.l.b16 %v364
        %v467 = vunpack.c.l.b16 %v365
        %v468 = vunpack.c.l.b16 %v366
        %v469 = vunpack.c.l.b16 %v367
        %v470 = vunpack.c.l.b16 %v368
        %v471 = vunpack.c.l.b16 %v369
        %v472 = vunpack.c.l.b16 %v370
        %v473 = vunpack.c.l.b16 %v371
        %v474 = vunpack.c.l.b16 %v372
        %v475 = vunpack.c.l.b16 %v373
        %v476 = vunpack.c.l.b16 %v374
        %v477 = vunpack.c.l.b16 %v375
        %v478 = vunpack.c.l.b16 %v376
        %v479 = vunpack.c.l.b16 %v377
        %v480 = vunpack.c.l.b16 %v378
        %v481 = vunpack.c.l.b16 %v379
        %v482 = vunpack.c.l.b16 %v380
        %v483 = vunpack.c.l.b16 %v381
        %v484 = vunpack.c.l.b16 %v382
        %v485 = vunpack.c.l.b16 %v383
        %v486 = vunpack.c.l.b16 %v384
        %v487 = vunpack.c.l.b16 %v385
        %v488 = vunpack.c.l.b16 %v386
        %v489 = vunpack.c.l.b16 %v387
        %v490 = vunpack.c.l.b16 %v388
        %v491 = vunpack.c.l.b16 %v389
        %v492 = vunpack.c.l.b16 %v390
        %v493 = vunpack.c.l.b16 %v391
        %v494 = vunpack.c.l.b16 %v392
        %v495 = vunpack.c.l.b16 %v393
        %v496 = vunpack.c.l.b16 %v394
        %v497 = vunpack.c.l.b16 %v395
        %v498 = vunpack.c.l.b16 %v396
        %v499 = vunpack.c.l.b16 %v397
        %v500 = vunpack.c.l.b16 %v398
        %v501 = vpack.c.b16 %v454, %v453
        %v502 = vpack.c.b16 %v456, %v455
        %v503 = vpack.c.b16 %v458, %v457
        %v504 = vpack.c.b16 %v460, %v459
        %v505 = vpack.c.b16 %v462, %v461
        %v506 = vpack.c.b16 %v464, %v463
        %v507 = vpack.c.b16 %v466, %v465
        %v508 = vpack.c.b16 %v468, %v467
        %v509 = vpack.c.b16 %v470, %v469
        %v510 = vpack.c.b16 %v472, %v471
        %v511 = vpack.c.b16 %v474, %v473
        %v512 = vpack.c.b16 %v476, %v475
        %v513 = vpack.c.b16 %v478, %v477
        %v514 = vpack.c.b16 %v480, %v479
        %v515 = vpack.c.b16 %v482, %v481
        %v516 = vpack.c.b16 %v484, %v483
        %v517 = vpack.c.b16 %v486, %v485
        %v518 = vpack.c.b16 %v488, %v487
        %v519 = vpack.c.b16 %v490, %v489
        %v520 = vpack.c.b16 %v492, %v491
        %v521 = vpack.c.b16 %v494, %v493
        %v522 = vpack.c.b16 %v496, %v495
        %v523 = vpack.c.b16 %v498, %v497
        %v524 = vpack.c.b16 %v500, %v499
        %549 = vmatprep.subr.bf16.mxu0 0
        %550 = vmatpush1.bf16.msra.mxu0 %v501
        %551 = vmatprep.subr.bf16.mxu0 0
        %552 = vmatpush1.bf16.msra.mxu0 %v502
        %553 = vmatprep.subr.bf16.mxu0 0
        %554 = vmatpush1.bf16.msra.mxu0 %v503
        %555 = vmatprep.subr.bf16.mxu0 0
        %556 = vmatpush1.bf16.msra.mxu0 %v504
        %557 = vmatprep.subr.bf16.mxu0 0
        %558 = vmatpush1.bf16.msra.mxu0 %v505
        %559 = vmatprep.subr.bf16.mxu0 0
        %560 = vmatpush1.bf16.msra.mxu0 %v506
        %561 = vmatprep.subr.bf16.mxu0 0
        %562 = vmatpush1.bf16.msra.mxu0 %v507
        %563 = vmatprep.subr.bf16.mxu0 0
        %564 = vmatpush1.bf16.msra.mxu0 %v508
        %565 = vmatprep.subr.bf16.mxu0 0
        %566 = vmatpush1.bf16.msra.mxu0 %v509
        %567 = vmatprep.subr.bf16.mxu0 0
        %568 = vmatpush1.bf16.msra.mxu0 %v510
        %569 = vmatprep.subr.bf16.mxu0 0
        %570 = vmatpush1.bf16.msra.mxu0 %v511
        %571 = vmatprep.subr.bf16.mxu0 0
        %572 = vmatpush1.bf16.msra.mxu0 %v512
        %573 = vmatprep.subr.bf16.mxu0 0
        %574 = vmatpush1.bf16.msra.mxu0 %v513
        %575 = vmatprep.subr.bf16.mxu0 0
        %576 = vmatpush1.bf16.msra.mxu0 %v514
        %577 = vmatprep.subr.bf16.mxu0 0
        %578 = vmatpush1.bf16.msra.mxu0 %v515
        %579 = vmatprep.subr.bf16.mxu0 0
        %580 = vmatpush1.bf16.msra.mxu0 %v516
        %581 = vmatprep.mubr.bf16.mxu0 %v334
        %582 = vmatmul.mubr.bf16.gmra.mrb[0].mxu0 %v333
        %v583 = vpop.f32.mrb[0].mxu0
        %v584 = vadd.f32 %v403, %v583
        %v585 = vpop.f32.mrb[0].mxu0
        %v586 = vpop.f32.mrb[0].mxu0
        %v587 = vadd.f32 %v403, %v586
        %v588 = vpop.f32.mrb[0].mxu0
        %589 = vmatprep.mubr.bf16.mxu0 %v335
        %590 = vmatmul.mubr.bf16.gmra.mrb[0].mxu0 %v334
        %v591 = vpop.f32.mrb[0].mxu0
        %v592 = vadd.f32 %v403, %v591
        %v593 = vpop.f32.mrb[0].mxu0
        %v594 = vpop.f32.mrb[0].mxu0
        %v595 = vadd.f32 %v403, %v594
        %v596 = vpop.f32.mrb[0].mxu0
        %597 = vmatprep.mubr.bf16.mxu0 %v336
        %598 = vmatmul.mubr.bf16.gmra.mrb[0].mxu0 %v335
        %v599 = vpop.f32.mrb[0].mxu0
        %v600 = vadd.f32 %v403, %v599
        %v601 = vpop.f32.mrb[0].mxu0
        %v602 = vpop.f32.mrb[0].mxu0
        %v603 = vadd.f32 %v403, %v602
        %v604 = vpop.f32.mrb[0].mxu0
        %605 = vmatprep.mubr.bf16.mxu0 %v337
        %606 = vmatmul.mubr.bf16.gmra.mrb[0].mxu0 %v336
        %v607 = vpop.f32.mrb[0].mxu0
        %v608 = vadd.f32 %v403, %v607
        %v609 = vpop.f32.mrb[0].mxu0
        %v610 = vpop.f32.mrb[0].mxu0
        %v611 = vadd.f32 %v403, %v610
        %v612 = vpop.f32.mrb[0].mxu0
        %613 = vmatprep.mubr.bf16.mxu0 %v338
        %614 = vmatmul.mubr.bf16.gmra.mrb[0].mxu0 %v337
        %v615 = vpop.f32.mrb[0].mxu0
        %v616 = vadd.f32 %v403, %v615
        %v617 = vpop.f32.mrb[0].mxu0
        %v618 = vpop.f32.mrb[0].mxu0
        %v619 = vadd.f32 %v403, %v618
        %v620 = vpop.f32.mrb[0].mxu0
        %621 = vmatprep.mubr.bf16.mxu0 %v339
        %622 = vmatmul.mubr.bf16.gmra.mrb[0].mxu0 %v338
        %v623 = vpop.f32.mrb[0].mxu0
        %v624 = vadd.f32 %v403, %v623
        %v625 = vpop.f32.mrb[0].mxu0
        %v626 = vpop.f32.mrb[0].mxu0
        %v627 = vadd.f32 %v403, %v626
        %v628 = vpop.f32.mrb[0].mxu0
        %629 = vmatprep.mubr.bf16.mxu0 %v340
        %630 = vmatmul.mubr.bf16.gmra.mrb[0].mxu0 %v339
        %v631 = vpop.f32.mrb[0].mxu0
        %v632 = vadd.f32 %v403, %v631
        %v633 = vpop.f32.mrb[0].mxu0
        %v634 = vpop.f32.mrb[0].mxu0
        %v635 = vadd.f32 %v403, %v634
        %v636 = vpop.f32.mrb[0].mxu0
        %637 = vmatprep.mubr.bf16.mxu0 %v341
        %638 = vmatmul.mubr.bf16.gmra.mrb[0].mxu0 %v340
        %v639 = vpop.f32.mrb[0].mxu0
        %v640 = vadd.f32 %v403, %v639
        %v641 = vpop.f32.mrb[0].mxu0
        %v642 = vpop.f32.mrb[0].mxu0
        %v643 = vadd.f32 %v403, %v642
        %v644 = vpop.f32.mrb[0].mxu0
        %645 = vmatprep.mubr.bf16.mxu0 %v342
        %646 = vmatmul.mubr.bf16.gmra.mrb[0].mxu0 %v341
        %v647 = vpop.f32.mrb[0].mxu0
        %v648 = vadd.f32 %v403, %v647
        %v649 = vpop.f32.mrb[0].mxu0
        %v650 = vpop.f32.mrb[0].mxu0
        %v651 = vadd.f32 %v403, %v650
        %v652 = vpop.f32.mrb[0].mxu0
        %653 = vmatprep.mubr.bf16.mxu0 %v343
        %654 = vmatmul.mubr.bf16.gmra.mrb[0].mxu0 %v342
        %v655 = vpop.f32.mrb[0].mxu0
        %v656 = vadd.f32 %v403, %v655
        %v657 = vpop.f32.mrb[0].mxu0
        %v658 = vpop.f32.mrb[0].mxu0
        %v659 = vadd.f32 %v403, %v658
        %v660 = vpop.f32.mrb[0].mxu0
        %661 = vmatprep.mubr.bf16.mxu0 %v344
        %662 = vmatmul.mubr.bf16.gmra.mrb[0].mxu0 %v343
        %v663 = vpop.f32.mrb[0].mxu0
        %v664 = vadd.f32 %v403, %v663
        %v665 = vpop.f32.mrb[0].mxu0
        %v666 = vpop.f32.mrb[0].mxu0
        %v667 = vadd.f32 %v403, %v666
        %v668 = vpop.f32.mrb[0].mxu0
        %669 = vmatprep.mubr.bf16.mxu0 %v345
        %670 = vmatmul.mubr.bf16.gmra.mrb[0].mxu0 %v344
        %v671 = vpop.f32.mrb[0].mxu0
        %v672 = vadd.f32 %v403, %v671
        %v673 = vpop.f32.mrb[0].mxu0
        %v674 = vpop.f32.mrb[0].mxu0
        %v675 = vadd.f32 %v403, %v674
        %v676 = vpop.f32.mrb[0].mxu0
        %677 = vmatprep.mubr.bf16.mxu0 %v346
        %678 = vmatmul.mubr.bf16.gmra.mrb[0].mxu0 %v345
        %v679 = vpop.f32.mrb[0].mxu0
        %v680 = vadd.f32 %v403, %v679
        %v681 = vpop.f32.mrb[0].mxu0
        %v682 = vpop.f32.mrb[0].mxu0
        %v683 = vadd.f32 %v403, %v682
        %v684 = vpop.f32.mrb[0].mxu0
        %685 = vmatprep.mubr.bf16.mxu0 %v347
        %686 = vmatmul.mubr.bf16.gmra.mrb[0].mxu0 %v346
        %v687 = vpop.f32.mrb[0].mxu0
        %v688 = vadd.f32 %v403, %v687
        %v689 = vpop.f32.mrb[0].mxu0
        %v690 = vpop.f32.mrb[0].mxu0
        %v691 = vadd.f32 %v403, %v690
        %v692 = vpop.f32.mrb[0].mxu0
        %693 = vmatprep.mubr.bf16.mxu0 %v348
        %694 = vmatmul.mubr.bf16.gmra.mrb[0].mxu0 %v347
        %v695 = vpop.f32.mrb[0].mxu0
        %v696 = vadd.f32 %v403, %v695
        %v697 = vpop.f32.mrb[0].mxu0
        %v698 = vpop.f32.mrb[0].mxu0
        %v699 = vadd.f32 %v403, %v698
        %v700 = vpop.f32.mrb[0].mxu0
        %701 = vmatprep.mubr.bf16.mxu0 %v349
        %702 = vmatmul.mubr.bf16.gmra.mrb[0].mxu0 %v348
        %v703 = vpop.f32.mrb[0].mxu0
        %v704 = vadd.f32 %v403, %v703
        %v705 = vpop.f32.mrb[0].mxu0
        %v706 = vpop.f32.mrb[0].mxu0
        %v707 = vadd.f32 %v403, %v706
        %v708 = vpop.f32.mrb[0].mxu0
        %709 = vdwg.mxu0
        %710 = vmatprep.subr.bf16.mxu0 0
        %711 = vmatpush1.bf16.msra.mxu0 %v517
        %712 = vmatprep.subr.bf16.mxu0 0
        %713 = vmatpush1.bf16.msra.mxu0 %v518
        %714 = vmatprep.subr.bf16.mxu0 0
        %715 = vmatpush1.bf16.msra.mxu0 %v519
        %716 = vmatprep.subr.bf16.mxu0 0
        %717 = vmatpush1.bf16.msra.mxu0 %v520
        %718 = vmatprep.subr.bf16.mxu0 0
        %719 = vmatpush1.bf16.msra.mxu0 %v521
        %720 = vmatprep.subr.bf16.mxu0 0
        %721 = vmatpush1.bf16.msra.mxu0 %v522
        %722 = vmatprep.subr.bf16.mxu0 0
        %723 = vmatpush1.bf16.msra.mxu0 %v523
        %724 = vmatprep.subr.bf16.mxu0 0
        %725 = vmatpush1.bf16.msra.mxu0 %v524
        %726 = vmatprep.subr.bf16.mxu0 0
        %727 = vmatpush1.bf16.msra.mxu0 0
        %728 = vmatprep.subr.bf16.mxu0 0
        %729 = vmatpush1.bf16.msra.mxu0 0
        %730 = vmatprep.subr.bf16.mxu0 0
        %731 = vmatpush1.bf16.msra.mxu0 0
        %732 = vmatprep.subr.bf16.mxu0 0
        %733 = vmatpush1.bf16.msra.mxu0 0
        %734 = vmatprep.subr.bf16.mxu0 0
        %735 = vmatpush1.bf16.msra.mxu0 0
        %736 = vmatprep.subr.bf16.mxu0 0
        %737 = vmatpush1.bf16.msra.mxu0 0
        %738 = vmatprep.subr.bf16.mxu0 0
        %739 = vmatpush1.bf16.msra.mxu0 0
        %740 = vmatprep.subr.bf16.mxu0 0
        %741 = vmatpush1.bf16.msra.mxu0 0
        %742 = vmatprep.mubr.bf16.mxu0 0
        %743 = vmatmul.mubr.bf16.gmra.mrb[0].mxu0 %v335
        %v744 = vpop.f32.mrb[0].mxu0
        %v745 = vadd.f32 %v584, %v744
        %v746 = vpop.f32.mrb[0].mxu0
        %v747 = vpop.f32.mrb[0].mxu0
        %v748 = vadd.f32 %v587, %v747
        %v749 = vpop.f32.mrb[0].mxu0
        %750 = vmatprep.mubr.bf16.mxu0 0
        %751 = vmatmul.mubr.bf16.gmra.mrb[0].mxu0 %v336
        %v752 = vpop.f32.mrb[0].mxu0
        %v753 = vadd.f32 %v592, %v752
        %v754 = vpop.f32.mrb[0].mxu0
        %v755 = vpop.f32.mrb[0].mxu0
        %v756 = vadd.f32 %v595, %v755
        %v757 = vpop.f32.mrb[0].mxu0
        %758 = vmatprep.mubr.bf16.mxu0 0
        %759 = vmatmul.mubr.bf16.gmra.mrb[0].mxu0 %v337
        %v760 = vpop.f32.mrb[0].mxu0
        %v761 = vadd.f32 %v600, %v760
        %v762 = vpop.f32.mrb[0].mxu0
        %v763 = vpop.f32.mrb[0].mxu0
        %v764 = vadd.f32 %v603, %v763
        %v765 = vpop.f32.mrb[0].mxu0
        %766 = vmatprep.mubr.bf16.mxu0 0
        %767 = vmatmul.mubr.bf16.gmra.mrb[0].mxu0 %v338
        %v768 = vpop.f32.mrb[0].mxu0
        %v769 = vadd.f32 %v608, %v768
        %v770 = vpop.f32.mrb[0].mxu0
        %v771 = vpop.f32.mrb[0].mxu0
        %v772 = vadd.f32 %v611, %v771
        %v773 = vpop.f32.mrb[0].mxu0
        %774 = vmatprep.mubr.bf16.mxu0 0
        %775 = vmatmul.mubr.bf16.gmra.mrb[0].mxu0 %v339
        %v776 = vpop.f32.mrb[0].mxu0
        %v777 = vadd.f32 %v616, %v776
        %v778 = vpop.f32.mrb[0].mxu0
        %v779 = vpop.f32.mrb[0].mxu0
        %v780 = vadd.f32 %v619, %v779
        %v781 = vpop.f32.mrb[0].mxu0
        %782 = vmatprep.mubr.bf16.mxu0 0
        %783 = vmatmul.mubr.bf16.gmra.mrb[0].mxu0 %v340
        %v784 = vpop.f32.mrb[0].mxu0
        %v785 = vadd.f32 %v624, %v784
        %v786 = vpop.f32.mrb[0].mxu0
        %v787 = vpop.f32.mrb[0].mxu0
        %v788 = vadd.f32 %v627, %v787
        %v789 = vpop.f32.mrb[0].mxu0
        %790 = vmatprep.mubr.bf16.mxu0 0
        %791 = vmatmul.mubr.bf16.gmra.mrb[0].mxu0 %v341
        %v792 = vpop.f32.mrb[0].mxu0
        %v793 = vadd.f32 %v632, %v792
        %v794 = vpop.f32.mrb[0].mxu0
        %v795 = vpop.f32.mrb[0].mxu0
        %v796 = vadd.f32 %v635, %v795
        %v797 = vpop.f32.mrb[0].mxu0
        %798 = vmatprep.mubr.bf16.mxu0 0
        %799 = vmatmul.mubr.bf16.gmra.mrb[0].mxu0 %v342
        %v800 = vpop.f32.mrb[0].mxu0
        %v801 = vadd.f32 %v640, %v800
        %v802 = vpop.f32.mrb[0].mxu0
        %v803 = vpop.f32.mrb[0].mxu0
        %v804 = vadd.f32 %v643, %v803
        %v805 = vpop.f32.mrb[0].mxu0
        %806 = vmatprep.mubr.bf16.mxu0 0
        %807 = vmatmul.mubr.bf16.gmra.mrb[0].mxu0 %v343
        %v808 = vpop.f32.mrb[0].mxu0
        %v809 = vadd.f32 %v648, %v808
        %v810 = vpop.f32.mrb[0].mxu0
        %v811 = vpop.f32.mrb[0].mxu0
        %v812 = vadd.f32 %v651, %v811
        %v813 = vpop.f32.mrb[0].mxu0
        %814 = vmatprep.mubr.bf16.mxu0 0
        %815 = vmatmul.mubr.bf16.gmra.mrb[0].mxu0 %v344
        %v816 = vpop.f32.mrb[0].mxu0
        %v817 = vadd.f32 %v656, %v816
        %v818 = vpop.f32.mrb[0].mxu0
        %v819 = vpop.f32.mrb[0].mxu0
        %v820 = vadd.f32 %v659, %v819
        %v821 = vpop.f32.mrb[0].mxu0
        %822 = vmatprep.mubr.bf16.mxu0 0
        %823 = vmatmul.mubr.bf16.gmra.mrb[0].mxu0 %v345
        %v824 = vpop.f32.mrb[0].mxu0
        %v825 = vadd.f32 %v664, %v824
        %v826 = vpop.f32.mrb[0].mxu0
        %v827 = vpop.f32.mrb[0].mxu0
        %v828 = vadd.f32 %v667, %v827
        %v829 = vpop.f32.mrb[0].mxu0
        %830 = vmatprep.mubr.bf16.mxu0 0
        %831 = vmatmul.mubr.bf16.gmra.mrb[0].mxu0 %v346
        %v832 = vpop.f32.mrb[0].mxu0
        %v833 = vadd.f32 %v672, %v832
        %v834 = vpop.f32.mrb[0].mxu0
        %v835 = vpop.f32.mrb[0].mxu0
        %v836 = vadd.f32 %v675, %v835
        %v837 = vpop.f32.mrb[0].mxu0
        %838 = vmatprep.mubr.bf16.mxu0 0
        %839 = vmatmul.mubr.bf16.gmra.mrb[0].mxu0 %v347
        %v840 = vpop.f32.mrb[0].mxu0
        %v841 = vadd.f32 %v680, %v840
        %v842 = vpop.f32.mrb[0].mxu0
        %v843 = vpop.f32.mrb[0].mxu0
        %v844 = vadd.f32 %v683, %v843
        %v845 = vpop.f32.mrb[0].mxu0
        %846 = vmatprep.mubr.bf16.mxu0 0
        %847 = vmatmul.mubr.bf16.gmra.mrb[0].mxu0 %v348
        %v848 = vpop.f32.mrb[0].mxu0
        %v849 = vadd.f32 %v688, %v848
        %v850 = vpop.f32.mrb[0].mxu0
        %v851 = vpop.f32.mrb[0].mxu0
        %v852 = vadd.f32 %v691, %v851
        %v853 = vpop.f32.mrb[0].mxu0
        %854 = vmatprep.mubr.bf16.mxu0 0
        %855 = vmatmul.mubr.bf16.gmra.mrb[0].mxu0 %v349
        %v856 = vpop.f32.mrb[0].mxu0
        %v857 = vadd.f32 %v696, %v856
        %v858 = vpop.f32.mrb[0].mxu0
        %v859 = vpop.f32.mrb[0].mxu0
        %v860 = vadd.f32 %v699, %v859
        %v861 = vpop.f32.mrb[0].mxu0
        %862 = vmatprep.mubr.bf16.mxu0 0
        %863 = vmatmul.mubr.bf16.gmra.mrb[0].mxu0 %v350
        %v864 = vpop.f32.mrb[0].mxu0
        %v865 = vadd.f32 %v704, %v864
        %v866 = vpop.f32.mrb[0].mxu0
        %v867 = vpop.f32.mrb[0].mxu0
        %v868 = vadd.f32 %v707, %v867
        %v869 = vpop.f32.mrb[0].mxu0
        %870 = vdwg.mxu0
        %v871 = vpack.c.bf16 %v280, %v280
        %v872 = vpack.c.bf16 %v283, %v283
        %v873 = vpack.c.bf16 %v286, %v286
        %v874 = vpack.c.bf16 %v289, %v289
        %v875 = vpack.c.bf16 %v292, %v292
        %v876 = vpack.c.bf16 %v295, %v295
        %v877 = vpack.c.bf16 %v298, %v298
        %v878 = vpack.c.bf16 %v301, %v301
        %v879 = vpack.c.bf16 %v304, %v304
        %v880 = vpack.c.bf16 %v307, %v307
        %v881 = vpack.c.bf16 %v310, %v310
        %v882 = vpack.c.bf16 %v313, %v313
        %v883 = vpack.c.bf16 %v316, %v316
        %v884 = vpack.c.bf16 %v319, %v319
        %v885 = vpack.c.bf16 %v322, %v322
        %v886 = vpack.c.bf16 %v325, %v325
        %v887 = vpack.c.bf16 %v328, %v328
        %v888 = vpack.c.bf16 %v331, %v331
        %vm889 = vsmask.f32 7424
        %v891 = vshrl.u32 %v333, 16
        %v893 = vshll.u32 %v333, 16
        %v895 = vrot.slane %v893, 1
        %v896 = vor.u32 %v891, %v895
        %v898 = vshll.u32 %v871, 16
        %v900 = vrot.slane %v898, 1
        %v901 = vsel %vm889, %v896, %v900
        %v903 = vshrl.u32 %v334, 16
        %v905 = vshll.u32 %v334, 16
        %v907 = vrot.slane %v905, 1
        %v908 = vor.u32 %v903, %v907
        %v910 = vshll.u32 %v872, 16
        %v912 = vrot.slane %v910, 1
        %v913 = vsel %vm889, %v908, %v912
        %v915 = vshrl.u32 %v335, 16
        %v917 = vshll.u32 %v335, 16
        %v919 = vrot.slane %v917, 1
        %v920 = vor.u32 %v915, %v919
        %v922 = vshll.u32 %v873, 16
        %v924 = vrot.slane %v922, 1
        %v925 = vsel %vm889, %v920, %v924
        %v927 = vshrl.u32 %v336, 16
        %v929 = vshll.u32 %v336, 16
        %v931 = vrot.slane %v929, 1
        %v932 = vor.u32 %v927, %v931
        %v934 = vshll.u32 %v874, 16
        %v936 = vrot.slane %v934, 1
        %v937 = vsel %vm889, %v932, %v936
        %v939 = vshrl.u32 %v337, 16
        %v941 = vshll.u32 %v337, 16
        %v943 = vrot.slane %v941, 1
        %v944 = vor.u32 %v939, %v943
        %v946 = vshll.u32 %v875, 16
        %v948 = vrot.slane %v946, 1
        %v949 = vsel %vm889, %v944, %v948
        %v951 = vshrl.u32 %v338, 16
        %v953 = vshll.u32 %v338, 16
        %v955 = vrot.slane %v953, 1
        %v956 = vor.u32 %v951, %v955
        %v958 = vshll.u32 %v876, 16
        %v960 = vrot.slane %v958, 1
        %v961 = vsel %vm889, %v956, %v960
        %v963 = vshrl.u32 %v339, 16
        %v965 = vshll.u32 %v339, 16
        %v967 = vrot.slane %v965, 1
        %v968 = vor.u32 %v963, %v967
        %v970 = vshll.u32 %v877, 16
        %v972 = vrot.slane %v970, 1
        %v973 = vsel %vm889, %v968, %v972
        %v975 = vshrl.u32 %v340, 16
        %v977 = vshll.u32 %v340, 16
        %v979 = vrot.slane %v977, 1
        %v980 = vor.u32 %v975, %v979
        %v982 = vshll.u32 %v878, 16
        %v984 = vrot.slane %v982, 1
        %v985 = vsel %vm889, %v980, %v984
        %v987 = vshrl.u32 %v341, 16
        %v989 = vshll.u32 %v341, 16
        %v991 = vrot.slane %v989, 1
        %v992 = vor.u32 %v987, %v991
        %v994 = vshll.u32 %v879, 16
        %v996 = vrot.slane %v994, 1
        %v997 = vsel %vm889, %v992, %v996
        %v999 = vshrl.u32 %v342, 16
        %v1001 = vshll.u32 %v342, 16
        %v1003 = vrot.slane %v1001, 1
        %v1004 = vor.u32 %v999, %v1003
        %v1006 = vshll.u32 %v880, 16
        %v1008 = vrot.slane %v1006, 1
        %v1009 = vsel %vm889, %v1004, %v1008
        %v1011 = vshrl.u32 %v343, 16
        %v1013 = vshll.u32 %v343, 16
        %v1015 = vrot.slane %v1013, 1
        %v1016 = vor.u32 %v1011, %v1015
        %v1018 = vshll.u32 %v881, 16
        %v1020 = vrot.slane %v1018, 1
        %v1021 = vsel %vm889, %v1016, %v1020
        %v1023 = vshrl.u32 %v344, 16
        %v1025 = vshll.u32 %v344, 16
        %v1027 = vrot.slane %v1025, 1
        %v1028 = vor.u32 %v1023, %v1027
        %v1030 = vshll.u32 %v882, 16
        %v1032 = vrot.slane %v1030, 1
        %v1033 = vsel %vm889, %v1028, %v1032
        %v1035 = vshrl.u32 %v345, 16
        %v1037 = vshll.u32 %v345, 16
        %v1039 = vrot.slane %v1037, 1
        %v1040 = vor.u32 %v1035, %v1039
        %v1042 = vshll.u32 %v883, 16
        %v1044 = vrot.slane %v1042, 1
        %v1045 = vsel %vm889, %v1040, %v1044
        %v1047 = vshrl.u32 %v346, 16
        %v1049 = vshll.u32 %v346, 16
        %v1051 = vrot.slane %v1049, 1
        %v1052 = vor.u32 %v1047, %v1051
        %v1054 = vshll.u32 %v884, 16
        %v1056 = vrot.slane %v1054, 1
        %v1057 = vsel %vm889, %v1052, %v1056
        %v1059 = vshrl.u32 %v347, 16
        %v1061 = vshll.u32 %v347, 16
        %v1063 = vrot.slane %v1061, 1
        %v1064 = vor.u32 %v1059, %v1063
        %v1066 = vshll.u32 %v885, 16
        %v1068 = vrot.slane %v1066, 1
        %v1069 = vsel %vm889, %v1064, %v1068
        %v1071 = vshrl.u32 %v348, 16
        %v1073 = vshll.u32 %v348, 16
        %v1075 = vrot.slane %v1073, 1
        %v1076 = vor.u32 %v1071, %v1075
        %v1078 = vshll.u32 %v886, 16
        %v1080 = vrot.slane %v1078, 1
        %v1081 = vsel %vm889, %v1076, %v1080
        %v1083 = vshrl.u32 %v349, 16
        %v1085 = vshll.u32 %v349, 16
        %v1087 = vrot.slane %v1085, 1
        %v1088 = vor.u32 %v1083, %v1087
        %v1090 = vshll.u32 %v887, 16
        %v1092 = vrot.slane %v1090, 1
        %v1093 = vsel %vm889, %v1088, %v1092
        %v1095 = vshrl.u32 %v350, 16
        %v1097 = vshll.u32 %v350, 16
        %v1099 = vrot.slane %v1097, 1
        %v1100 = vor.u32 %v1095, %v1099
        %v1102 = vshll.u32 %v888, 16
        %v1104 = vrot.slane %v1102, 1
        %v1105 = vsel %vm889, %v1100, %v1104
        %s1124 = scalar_lea.vmem %s1, 192
        %v1125 = vld [vmem:[%s1124] sm:$0xf]
        %v1126 = vld [vmem:[%s1124 + $0x4] sm:$0xf]
        %v1127 = vld [vmem:[%s1124 + $0x8] sm:$0xf]
        %v1128 = vld [vmem:[%s1124 + $0xc] sm:$0xf]
        %v1129 = vld [vmem:[%s1124 + $0x10] sm:$0xf]
        %v1130 = vld [vmem:[%s1124 + $0x14] sm:$0xf]
        %v1131 = vld [vmem:[%s1124 + $0x18] sm:$0xf]
        %v1132 = vld [vmem:[%s1124 + $0x1c] sm:$0xf]
        %v1133 = vld [vmem:[%s1124 + $0x20] sm:$0xf]
        %v1134 = vld [vmem:[%s1124 + $0x24] sm:$0xf]
        %v1135 = vld [vmem:[%s1124 + $0x28] sm:$0xf]
        %v1136 = vld [vmem:[%s1124 + $0x2c] sm:$0xf]
        %v1137 = vld [vmem:[%s1124 + $0x30] sm:$0xf]
        %v1138 = vld [vmem:[%s1124 + $0x34] sm:$0xf]
        %v1139 = vld [vmem:[%s1124 + $0x38] sm:$0xf]
        %v1140 = vld [vmem:[%s1124 + $0x3c] sm:$0xf]
        %v1141 = vld [vmem:[%s1124 + $0x40] sm:$0xf]
        %v1142 = vld [vmem:[%s1124 + $0x44] sm:$0xf]
        %v1143 = vld [vmem:[%s1124 + $0x48] sm:$0xf]
        %v1144 = vld [vmem:[%s1124 + $0x4c] sm:$0xf]
        %v1145 = vld [vmem:[%s1124 + $0x50] sm:$0xf]
        %v1146 = vld [vmem:[%s1124 + $0x54] sm:$0xf]
        %v1147 = vld [vmem:[%s1124 + $0x58] sm:$0xf]
        %v1148 = vld [vmem:[%s1124 + $0x5c] sm:$0xf]
        %v1149 = vld [vmem:[%s1124 + $0x60] sm:$0xf]
        %v1150 = vld [vmem:[%s1124 + $0x64] sm:$0xf]
        %v1151 = vld [vmem:[%s1124 + $0x68] sm:$0xf]
        %v1152 = vld [vmem:[%s1124 + $0x6c] sm:$0xf]
        %v1153 = vld [vmem:[%s1124 + $0x70] sm:$0xf]
        %v1154 = vld [vmem:[%s1124 + $0x74] sm:$0xf]
        %v1155 = vld [vmem:[%s1124 + $0x78] sm:$0xf]
        %v1156 = vld [vmem:[%s1124 + $0x7c] sm:$0xf]
        %v1157 = vld [vmem:[%s1124 + $0x80] sm:$0xf]
        %v1158 = vld [vmem:[%s1124 + $0x84] sm:$0xf]
        %v1159 = vld [vmem:[%s1124 + $0x88] sm:$0xf]
        %v1160 = vld [vmem:[%s1124 + $0x8c] sm:$0xf]
        %v1161 = vld [vmem:[%s1124 + $0x90] sm:$0xf]
        %v1162 = vld [vmem:[%s1124 + $0x94] sm:$0xf]
        %v1163 = vld [vmem:[%s1124 + $0x98] sm:$0xf]
        %v1164 = vld [vmem:[%s1124 + $0x9c] sm:$0xf]
        %v1165 = vld [vmem:[%s1124 + $0xa0] sm:$0xf]
        %v1166 = vld [vmem:[%s1124 + $0xa4] sm:$0xf]
        %v1167 = vld [vmem:[%s1124 + $0xa8] sm:$0xf]
        %v1168 = vld [vmem:[%s1124 + $0xac] sm:$0xf]
        %v1169 = vld [vmem:[%s1124 + $0xb0] sm:$0xf]
        %v1170 = vld [vmem:[%s1124 + $0xb4] sm:$0xf]
        %v1171 = vld [vmem:[%s1124 + $0xb8] sm:$0xf]
        %v1172 = vld [vmem:[%s1124 + $0xbc] sm:$0xf]
        %v1221 = vunpack.c.l.b16 %v1125
        %v1222 = vunpack.c.l.b16 %v1126
        %v1223 = vunpack.c.l.b16 %v1127
        %v1224 = vunpack.c.l.b16 %v1128
        %v1225 = vunpack.c.l.b16 %v1129
        %v1226 = vunpack.c.l.b16 %v1130
        %v1227 = vunpack.c.l.b16 %v1131
        %v1228 = vunpack.c.l.b16 %v1132
        %v1229 = vunpack.c.l.b16 %v1133
        %v1230 = vunpack.c.l.b16 %v1134
        %v1231 = vunpack.c.l.b16 %v1135
        %v1232 = vunpack.c.l.b16 %v1136
        %v1233 = vunpack.c.l.b16 %v1137
        %v1234 = vunpack.c.l.b16 %v1138
        %v1235 = vunpack.c.l.b16 %v1139
        %v1236 = vunpack.c.l.b16 %v1140
        %v1237 = vunpack.c.l.b16 %v1141
        %v1238 = vunpack.c.l.b16 %v1142
        %v1239 = vunpack.c.l.b16 %v1143
        %v1240 = vunpack.c.l.b16 %v1144
        %v1241 = vunpack.c.l.b16 %v1145
        %v1242 = vunpack.c.l.b16 %v1146
        %v1243 = vunpack.c.l.b16 %v1147
        %v1244 = vunpack.c.l.b16 %v1148
        %v1245 = vunpack.c.l.b16 %v1149
        %v1246 = vunpack.c.l.b16 %v1150
        %v1247 = vunpack.c.l.b16 %v1151
        %v1248 = vunpack.c.l.b16 %v1152
        %v1249 = vunpack.c.l.b16 %v1153
        %v1250 = vunpack.c.l.b16 %v1154
        %v1251 = vunpack.c.l.b16 %v1155
        %v1252 = vunpack.c.l.b16 %v1156
        %v1253 = vunpack.c.l.b16 %v1157
        %v1254 = vunpack.c.l.b16 %v1158
        %v1255 = vunpack.c.l.b16 %v1159
        %v1256 = vunpack.c.l.b16 %v1160
        %v1257 = vunpack.c.l.b16 %v1161
        %v1258 = vunpack.c.l.b16 %v1162
        %v1259 = vunpack.c.l.b16 %v1163
        %v1260 = vunpack.c.l.b16 %v1164
        %v1261 = vunpack.c.l.b16 %v1165
        %v1262 = vunpack.c.l.b16 %v1166
        %v1263 = vunpack.c.l.b16 %v1167
        %v1264 = vunpack.c.l.b16 %v1168
        %v1265 = vunpack.c.l.b16 %v1169
        %v1266 = vunpack.c.l.b16 %v1170
        %v1267 = vunpack.c.l.b16 %v1171
        %v1268 = vunpack.c.l.b16 %v1172
        %v1269 = vpack.c.b16 %v1222, %v1221
        %v1270 = vpack.c.b16 %v1224, %v1223
        %v1271 = vpack.c.b16 %v1226, %v1225
        %v1272 = vpack.c.b16 %v1228, %v1227
        %v1273 = vpack.c.b16 %v1230, %v1229
        %v1274 = vpack.c.b16 %v1232, %v1231
        %v1275 = vpack.c.b16 %v1234, %v1233
        %v1276 = vpack.c.b16 %v1236, %v1235
        %v1277 = vpack.c.b16 %v1238, %v1237
        %v1278 = vpack.c.b16 %v1240, %v1239
        %v1279 = vpack.c.b16 %v1242, %v1241
        %v1280 = vpack.c.b16 %v1244, %v1243
        %v1281 = vpack.c.b16 %v1246, %v1245
        %v1282 = vpack.c.b16 %v1248, %v1247
        %v1283 = vpack.c.b16 %v1250, %v1249
        %v1284 = vpack.c.b16 %v1252, %v1251
        %v1285 = vpack.c.b16 %v1254, %v1253
        %v1286 = vpack.c.b16 %v1256, %v1255
        %v1287 = vpack.c.b16 %v1258, %v1257
        %v1288 = vpack.c.b16 %v1260, %v1259
        %v1289 = vpack.c.b16 %v1262, %v1261
        %v1290 = vpack.c.b16 %v1264, %v1263
        %v1291 = vpack.c.b16 %v1266, %v1265
        %v1292 = vpack.c.b16 %v1268, %v1267
        %1317 = vmatprep.subr.bf16.mxu0 0
        %1318 = vmatpush1.bf16.msra.mxu0 %v1269
        %1319 = vmatprep.subr.bf16.mxu0 0
        %1320 = vmatpush1.bf16.msra.mxu0 %v1270
        %1321 = vmatprep.subr.bf16.mxu0 0
        %1322 = vmatpush1.bf16.msra.mxu0 %v1271
        %1323 = vmatprep.subr.bf16.mxu0 0
        %1324 = vmatpush1.bf16.msra.mxu0 %v1272
        %1325 = vmatprep.subr.bf16.mxu0 0
        %1326 = vmatpush1.bf16.msra.mxu0 %v1273
        %1327 = vmatprep.subr.bf16.mxu0 0
        %1328 = vmatpush1.bf16.msra.mxu0 %v1274
        %1329 = vmatprep.subr.bf16.mxu0 0
        %1330 = vmatpush1.bf16.msra.mxu0 %v1275
        %1331 = vmatprep.subr.bf16.mxu0 0
        %1332 = vmatpush1.bf16.msra.mxu0 %v1276
        %1333 = vmatprep.subr.bf16.mxu0 0
        %1334 = vmatpush1.bf16.msra.mxu0 %v1277
        %1335 = vmatprep.subr.bf16.mxu0 0
        %1336 = vmatpush1.bf16.msra.mxu0 %v1278
        %1337 = vmatprep.subr.bf16.mxu0 0
        %1338 = vmatpush1.bf16.msra.mxu0 %v1279
        %1339 = vmatprep.subr.bf16.mxu0 0
        %1340 = vmatpush1.bf16.msra.mxu0 %v1280
        %1341 = vmatprep.subr.bf16.mxu0 0
        %1342 = vmatpush1.bf16.msra.mxu0 %v1281
        %1343 = vmatprep.subr.bf16.mxu0 0
        %1344 = vmatpush1.bf16.msra.mxu0 %v1282
        %1345 = vmatprep.subr.bf16.mxu0 0
        %1346 = vmatpush1.bf16.msra.mxu0 %v1283
        %1347 = vmatprep.subr.bf16.mxu0 0
        %1348 = vmatpush1.bf16.msra.mxu0 %v1284
        %1349 = vmatprep.mubr.bf16.mxu0 %v913
        %1350 = vmatmul.mubr.bf16.gmra.mrb[0].mxu0 %v901
        %v1351 = vpop.f32.mrb[0].mxu0
        %v1352 = vadd.f32 0.0, %v1351
        %v1353 = vpop.f32.mrb[0].mxu0
        %v1354 = vpop.f32.mrb[0].mxu0
        %v1355 = vadd.f32 0.0, %v1354
        %v1356 = vpop.f32.mrb[0].mxu0
        %1357 = vmatprep.mubr.bf16.mxu0 %v925
        %1358 = vmatmul.mubr.bf16.gmra.mrb[0].mxu0 %v913
        %v1359 = vpop.f32.mrb[0].mxu0
        %v1360 = vadd.f32 0.0, %v1359
        %v1361 = vpop.f32.mrb[0].mxu0
        %v1362 = vpop.f32.mrb[0].mxu0
        %v1363 = vadd.f32 0.0, %v1362
        %v1364 = vpop.f32.mrb[0].mxu0
        %1365 = vmatprep.mubr.bf16.mxu0 %v937
        %1366 = vmatmul.mubr.bf16.gmra.mrb[0].mxu0 %v925
        %v1367 = vpop.f32.mrb[0].mxu0
        %v1368 = vadd.f32 0.0, %v1367
        %v1369 = vpop.f32.mrb[0].mxu0
        %v1370 = vpop.f32.mrb[0].mxu0
        %v1371 = vadd.f32 0.0, %v1370
        %v1372 = vpop.f32.mrb[0].mxu0
        %1373 = vmatprep.mubr.bf16.mxu0 %v949
        %1374 = vmatmul.mubr.bf16.gmra.mrb[0].mxu0 %v937
        %v1375 = vpop.f32.mrb[0].mxu0
        %v1376 = vadd.f32 0.0, %v1375
        %v1377 = vpop.f32.mrb[0].mxu0
        %v1378 = vpop.f32.mrb[0].mxu0
        %v1379 = vadd.f32 0.0, %v1378
        %v1380 = vpop.f32.mrb[0].mxu0
        %1381 = vmatprep.mubr.bf16.mxu0 %v961
        %1382 = vmatmul.mubr.bf16.gmra.mrb[0].mxu0 %v949
        %v1383 = vpop.f32.mrb[0].mxu0
        %v1384 = vadd.f32 0.0, %v1383
        %v1385 = vpop.f32.mrb[0].mxu0
        %v1386 = vpop.f32.mrb[0].mxu0
        %v1387 = vadd.f32 0.0, %v1386
        %v1388 = vpop.f32.mrb[0].mxu0
        %1389 = vmatprep.mubr.bf16.mxu0 %v973
        %1390 = vmatmul.mubr.bf16.gmra.mrb[0].mxu0 %v961
        %v1391 = vpop.f32.mrb[0].mxu0
        %v1392 = vadd.f32 0.0, %v1391
        %v1393 = vpop.f32.mrb[0].mxu0
        %v1394 = vpop.f32.mrb[0].mxu0
        %v1395 = vadd.f32 0.0, %v1394
        %v1396 = vpop.f32.mrb[0].mxu0
        %1397 = vmatprep.mubr.bf16.mxu0 %v985
        %1398 = vmatmul.mubr.bf16.gmra.mrb[0].mxu0 %v973
        %v1399 = vpop.f32.mrb[0].mxu0
        %v1400 = vadd.f32 0.0, %v1399
        %v1401 = vpop.f32.mrb[0].mxu0
        %v1402 = vpop.f32.mrb[0].mxu0
        %v1403 = vadd.f32 0.0, %v1402
        %v1404 = vpop.f32.mrb[0].mxu0
        %1405 = vmatprep.mubr.bf16.mxu0 %v997
        %1406 = vmatmul.mubr.bf16.gmra.mrb[0].mxu0 %v985
        %v1407 = vpop.f32.mrb[0].mxu0
        %v1408 = vadd.f32 0.0, %v1407
        %v1409 = vpop.f32.mrb[0].mxu0
        %v1410 = vpop.f32.mrb[0].mxu0
        %v1411 = vadd.f32 0.0, %v1410
        %v1412 = vpop.f32.mrb[0].mxu0
        %1413 = vmatprep.mubr.bf16.mxu0 %v1009
        %1414 = vmatmul.mubr.bf16.gmra.mrb[0].mxu0 %v997
        %v1415 = vpop.f32.mrb[0].mxu0
        %v1416 = vadd.f32 0.0, %v1415
        %v1417 = vpop.f32.mrb[0].mxu0
        %v1418 = vpop.f32.mrb[0].mxu0
        %v1419 = vadd.f32 0.0, %v1418
        %v1420 = vpop.f32.mrb[0].mxu0
        %1421 = vmatprep.mubr.bf16.mxu0 %v1021
        %1422 = vmatmul.mubr.bf16.gmra.mrb[0].mxu0 %v1009
        %v1423 = vpop.f32.mrb[0].mxu0
        %v1424 = vadd.f32 0.0, %v1423
        %v1425 = vpop.f32.mrb[0].mxu0
        %v1426 = vpop.f32.mrb[0].mxu0
        %v1427 = vadd.f32 0.0, %v1426
        %v1428 = vpop.f32.mrb[0].mxu0
        %1429 = vmatprep.mubr.bf16.mxu0 %v1033
        %1430 = vmatmul.mubr.bf16.gmra.mrb[0].mxu0 %v1021
        %v1431 = vpop.f32.mrb[0].mxu0
        %v1432 = vadd.f32 0.0, %v1431
        %v1433 = vpop.f32.mrb[0].mxu0
        %v1434 = vpop.f32.mrb[0].mxu0
        %v1435 = vadd.f32 0.0, %v1434
        %v1436 = vpop.f32.mrb[0].mxu0
        %1437 = vmatprep.mubr.bf16.mxu0 %v1045
        %1438 = vmatmul.mubr.bf16.gmra.mrb[0].mxu0 %v1033
        %v1439 = vpop.f32.mrb[0].mxu0
        %v1440 = vadd.f32 0.0, %v1439
        %v1441 = vpop.f32.mrb[0].mxu0
        %v1442 = vpop.f32.mrb[0].mxu0
        %v1443 = vadd.f32 0.0, %v1442
        %v1444 = vpop.f32.mrb[0].mxu0
        %1445 = vmatprep.mubr.bf16.mxu0 %v1057
        %1446 = vmatmul.mubr.bf16.gmra.mrb[0].mxu0 %v1045
        %v1447 = vpop.f32.mrb[0].mxu0
        %v1448 = vadd.f32 0.0, %v1447
        %v1449 = vpop.f32.mrb[0].mxu0
        %v1450 = vpop.f32.mrb[0].mxu0
        %v1451 = vadd.f32 0.0, %v1450
        %v1452 = vpop.f32.mrb[0].mxu0
        %1453 = vmatprep.mubr.bf16.mxu0 %v1069
        %1454 = vmatmul.mubr.bf16.gmra.mrb[0].mxu0 %v1057
        %v1455 = vpop.f32.mrb[0].mxu0
        %v1456 = vadd.f32 0.0, %v1455
        %v1457 = vpop.f32.mrb[0].mxu0
        %v1458 = vpop.f32.mrb[0].mxu0
        %v1459 = vadd.f32 0.0, %v1458
        %v1460 = vpop.f32.mrb[0].mxu0
        %1461 = vmatprep.mubr.bf16.mxu0 %v1081
        %1462 = vmatmul.mubr.bf16.gmra.mrb[0].mxu0 %v1069
        %v1463 = vpop.f32.mrb[0].mxu0
        %v1464 = vadd.f32 0.0, %v1463
        %v1465 = vpop.f32.mrb[0].mxu0
        %v1466 = vpop.f32.mrb[0].mxu0
        %v1467 = vadd.f32 0.0, %v1466
        %v1468 = vpop.f32.mrb[0].mxu0
        %1469 = vmatprep.mubr.bf16.mxu0 %v1093
        %1470 = vmatmul.mubr.bf16.gmra.mrb[0].mxu0 %v1081
        %v1471 = vpop.f32.mrb[0].mxu0
        %v1472 = vadd.f32 0.0, %v1471
        %v1473 = vpop.f32.mrb[0].mxu0
        %v1474 = vpop.f32.mrb[0].mxu0
        %v1475 = vadd.f32 0.0, %v1474
        %v1476 = vpop.f32.mrb[0].mxu0
        %1477 = vdwg.mxu0
        %1478 = vmatprep.subr.bf16.mxu0 0
        %1479 = vmatpush1.bf16.msra.mxu0 %v1285
        %1480 = vmatprep.subr.bf16.mxu0 0
        %1481 = vmatpush1.bf16.msra.mxu0 %v1286
        %1482 = vmatprep.subr.bf16.mxu0 0
        %1483 = vmatpush1.bf16.msra.mxu0 %v1287
        %1484 = vmatprep.subr.bf16.mxu0 0
        %1485 = vmatpush1.bf16.msra.mxu0 %v1288
        %1486 = vmatprep.subr.bf16.mxu0 0
        %1487 = vmatpush1.bf16.msra.mxu0 %v1289
        %1488 = vmatprep.subr.bf16.mxu0 0
        %1489 = vmatpush1.bf16.msra.mxu0 %v1290
        %1490 = vmatprep.subr.bf16.mxu0 0
        %1491 = vmatpush1.bf16.msra.mxu0 %v1291
        %1492 = vmatprep.subr.bf16.mxu0 0
        %1493 = vmatpush1.bf16.msra.mxu0 %v1292
        %1494 = vmatprep.subr.bf16.mxu0 0
        %1495 = vmatpush1.bf16.msra.mxu0 0
        %1496 = vmatprep.subr.bf16.mxu0 0
        %1497 = vmatpush1.bf16.msra.mxu0 0
        %1498 = vmatprep.subr.bf16.mxu0 0
        %1499 = vmatpush1.bf16.msra.mxu0 0
        %1500 = vmatprep.subr.bf16.mxu0 0
        %1501 = vmatpush1.bf16.msra.mxu0 0
        %1502 = vmatprep.subr.bf16.mxu0 0
        %1503 = vmatpush1.bf16.msra.mxu0 0
        %1504 = vmatprep.subr.bf16.mxu0 0
        %1505 = vmatpush1.bf16.msra.mxu0 0
        %1506 = vmatprep.subr.bf16.mxu0 0
        %1507 = vmatpush1.bf16.msra.mxu0 0
        %1508 = vmatprep.subr.bf16.mxu0 0
        %1509 = vmatpush1.bf16.msra.mxu0 0
        %1510 = vmatprep.mubr.bf16.mxu0 0
        %1511 = vmatmul.mubr.bf16.gmra.mrb[0].mxu0 %v925
        %v1512 = vpop.f32.mrb[0].mxu0
        %v1513 = vadd.f32 %v1352, %v1512
        %v1514 = vpop.f32.mrb[0].mxu0
        %v1515 = vpop.f32.mrb[0].mxu0
        %v1516 = vadd.f32 %v1355, %v1515
        %v1517 = vpop.f32.mrb[0].mxu0
        %1518 = vmatprep.mubr.bf16.mxu0 0
        %1519 = vmatmul.mubr.bf16.gmra.mrb[0].mxu0 %v937
        %v1520 = vpop.f32.mrb[0].mxu0
        %v1521 = vadd.f32 %v1360, %v1520
        %v1522 = vpop.f32.mrb[0].mxu0
        %v1523 = vpop.f32.mrb[0].mxu0
        %v1524 = vadd.f32 %v1363, %v1523
        %v1525 = vpop.f32.mrb[0].mxu0
        %1526 = vmatprep.mubr.bf16.mxu0 0
        %1527 = vmatmul.mubr.bf16.gmra.mrb[0].mxu0 %v949
        %v1528 = vpop.f32.mrb[0].mxu0
        %v1529 = vadd.f32 %v1368, %v1528
        %v1530 = vpop.f32.mrb[0].mxu0
        %v1531 = vpop.f32.mrb[0].mxu0
        %v1532 = vadd.f32 %v1371, %v1531
        %v1533 = vpop.f32.mrb[0].mxu0
        %1534 = vmatprep.mubr.bf16.mxu0 0
        %1535 = vmatmul.mubr.bf16.gmra.mrb[0].mxu0 %v961
        %v1536 = vpop.f32.mrb[0].mxu0
        %v1537 = vadd.f32 %v1376, %v1536
        %v1538 = vpop.f32.mrb[0].mxu0
        %v1539 = vpop.f32.mrb[0].mxu0
        %v1540 = vadd.f32 %v1379, %v1539
        %v1541 = vpop.f32.mrb[0].mxu0
        %1542 = vmatprep.mubr.bf16.mxu0 0
        %1543 = vmatmul.mubr.bf16.gmra.mrb[0].mxu0 %v973
        %v1544 = vpop.f32.mrb[0].mxu0
        %v1545 = vadd.f32 %v1384, %v1544
        %v1546 = vpop.f32.mrb[0].mxu0
        %v1547 = vpop.f32.mrb[0].mxu0
        %v1548 = vadd.f32 %v1387, %v1547
        %v1549 = vpop.f32.mrb[0].mxu0
        %1550 = vmatprep.mubr.bf16.mxu0 0
        %1551 = vmatmul.mubr.bf16.gmra.mrb[0].mxu0 %v985
        %v1552 = vpop.f32.mrb[0].mxu0
        %v1553 = vadd.f32 %v1392, %v1552
        %v1554 = vpop.f32.mrb[0].mxu0
        %v1555 = vpop.f32.mrb[0].mxu0
        %v1556 = vadd.f32 %v1395, %v1555
        %v1557 = vpop.f32.mrb[0].mxu0
        %1558 = vmatprep.mubr.bf16.mxu0 0
        %1559 = vmatmul.mubr.bf16.gmra.mrb[0].mxu0 %v997
        %v1560 = vpop.f32.mrb[0].mxu0
        %v1561 = vadd.f32 %v1400, %v1560
        %v1562 = vpop.f32.mrb[0].mxu0
        %v1563 = vpop.f32.mrb[0].mxu0
        %v1564 = vadd.f32 %v1403, %v1563
        %v1565 = vpop.f32.mrb[0].mxu0
        %1566 = vmatprep.mubr.bf16.mxu0 0
        %1567 = vmatmul.mubr.bf16.gmra.mrb[0].mxu0 %v1009
        %v1568 = vpop.f32.mrb[0].mxu0
        %v1569 = vadd.f32 %v1408, %v1568
        %v1570 = vpop.f32.mrb[0].mxu0
        %v1571 = vpop.f32.mrb[0].mxu0
        %v1572 = vadd.f32 %v1411, %v1571
        %v1573 = vpop.f32.mrb[0].mxu0
        %1574 = vmatprep.mubr.bf16.mxu0 0
        %1575 = vmatmul.mubr.bf16.gmra.mrb[0].mxu0 %v1021
        %v1576 = vpop.f32.mrb[0].mxu0
        %v1577 = vadd.f32 %v1416, %v1576
        %v1578 = vpop.f32.mrb[0].mxu0
        %v1579 = vpop.f32.mrb[0].mxu0
        %v1580 = vadd.f32 %v1419, %v1579
        %v1581 = vpop.f32.mrb[0].mxu0
        %1582 = vmatprep.mubr.bf16.mxu0 0
        %1583 = vmatmul.mubr.bf16.gmra.mrb[0].mxu0 %v1033
        %v1584 = vpop.f32.mrb[0].mxu0
        %v1585 = vadd.f32 %v1424, %v1584
        %v1586 = vpop.f32.mrb[0].mxu0
        %v1587 = vpop.f32.mrb[0].mxu0
        %v1588 = vadd.f32 %v1427, %v1587
        %v1589 = vpop.f32.mrb[0].mxu0
        %1590 = vmatprep.mubr.bf16.mxu0 0
        %1591 = vmatmul.mubr.bf16.gmra.mrb[0].mxu0 %v1045
        %v1592 = vpop.f32.mrb[0].mxu0
        %v1593 = vadd.f32 %v1432, %v1592
        %v1594 = vpop.f32.mrb[0].mxu0
        %v1595 = vpop.f32.mrb[0].mxu0
        %v1596 = vadd.f32 %v1435, %v1595
        %v1597 = vpop.f32.mrb[0].mxu0
        %1598 = vmatprep.mubr.bf16.mxu0 0
        %1599 = vmatmul.mubr.bf16.gmra.mrb[0].mxu0 %v1057
        %v1600 = vpop.f32.mrb[0].mxu0
        %v1601 = vadd.f32 %v1440, %v1600
        %v1602 = vpop.f32.mrb[0].mxu0
        %v1603 = vpop.f32.mrb[0].mxu0
        %v1604 = vadd.f32 %v1443, %v1603
        %v1605 = vpop.f32.mrb[0].mxu0
        %1606 = vmatprep.mubr.bf16.mxu0 0
        %1607 = vmatmul.mubr.bf16.gmra.mrb[0].mxu0 %v1069
        %v1608 = vpop.f32.mrb[0].mxu0
        %v1609 = vadd.f32 %v1448, %v1608
        %v1610 = vpop.f32.mrb[0].mxu0
        %v1611 = vpop.f32.mrb[0].mxu0
        %v1612 = vadd.f32 %v1451, %v1611
        %v1613 = vpop.f32.mrb[0].mxu0
        %1614 = vmatprep.mubr.bf16.mxu0 0
        %1615 = vmatmul.mubr.bf16.gmra.mrb[0].mxu0 %v1081
        %v1616 = vpop.f32.mrb[0].mxu0
        %v1617 = vadd.f32 %v1456, %v1616
        %v1618 = vpop.f32.mrb[0].mxu0
        %v1619 = vpop.f32.mrb[0].mxu0
        %v1620 = vadd.f32 %v1459, %v1619
        %v1621 = vpop.f32.mrb[0].mxu0
        %1622 = vmatprep.mubr.bf16.mxu0 0
        %1623 = vmatmul.mubr.bf16.gmra.mrb[0].mxu0 %v1093
        %v1624 = vpop.f32.mrb[0].mxu0
        %v1625 = vadd.f32 %v1464, %v1624
        %v1626 = vpop.f32.mrb[0].mxu0
        %v1627 = vpop.f32.mrb[0].mxu0
        %v1628 = vadd.f32 %v1467, %v1627
        %v1629 = vpop.f32.mrb[0].mxu0
        %1630 = vmatprep.mubr.bf16.mxu0 0
        %1631 = vmatmul.mubr.bf16.gmra.mrb[0].mxu0 %v1105
        %v1632 = vpop.f32.mrb[0].mxu0
        %v1633 = vadd.f32 %v1472, %v1632
        %v1634 = vpop.f32.mrb[0].mxu0
        %v1635 = vpop.f32.mrb[0].mxu0
        %v1636 = vadd.f32 %v1475, %v1635
        %v1637 = vpop.f32.mrb[0].mxu0
        %1638 = vdwg.mxu0
        %v1639 = vadd.f32 %v745, %v1513
        %v1640 = vadd.f32 %v748, %v1516
        %v1641 = vadd.f32 %v753, %v1521
        %v1642 = vadd.f32 %v756, %v1524
        %v1643 = vadd.f32 %v761, %v1529
        %v1644 = vadd.f32 %v764, %v1532
        %v1645 = vadd.f32 %v769, %v1537
        %v1646 = vadd.f32 %v772, %v1540
        %v1647 = vadd.f32 %v777, %v1545
        %v1648 = vadd.f32 %v780, %v1548
        %v1649 = vadd.f32 %v785, %v1553
        %v1650 = vadd.f32 %v788, %v1556
        %v1651 = vadd.f32 %v793, %v1561
        %v1652 = vadd.f32 %v796, %v1564
        %v1653 = vadd.f32 %v801, %v1569
        %v1654 = vadd.f32 %v804, %v1572
        %v1655 = vadd.f32 %v809, %v1577
        %v1656 = vadd.f32 %v812, %v1580
        %v1657 = vadd.f32 %v817, %v1585
        %v1658 = vadd.f32 %v820, %v1588
        %v1659 = vadd.f32 %v825, %v1593
        %v1660 = vadd.f32 %v828, %v1596
        %v1661 = vadd.f32 %v833, %v1601
        %v1662 = vadd.f32 %v836, %v1604
        %v1663 = vadd.f32 %v841, %v1609
        %v1664 = vadd.f32 %v844, %v1612
        %v1665 = vadd.f32 %v849, %v1617
        %v1666 = vadd.f32 %v852, %v1620
        %v1667 = vadd.f32 %v857, %v1625
        %v1668 = vadd.f32 %v860, %v1628
        %v1669 = vadd.f32 %v865, %v1633
        %v1670 = vadd.f32 %v868, %v1636
        %vm1707 = vcmask 1046528
        %v1708 = vrot.slane %v333, 1
        %v1709 = vrot.slane %v871, 1
        %v1710 = vsel %vm1707, %v1708, %v1709
        %v1711 = vrot.slane %v334, 1
        %v1712 = vrot.slane %v872, 1
        %v1713 = vsel %vm1707, %v1711, %v1712
        %v1714 = vrot.slane %v335, 1
        %v1715 = vrot.slane %v873, 1
        %v1716 = vsel %vm1707, %v1714, %v1715
        %v1717 = vrot.slane %v336, 1
        %v1718 = vrot.slane %v874, 1
        %v1719 = vsel %vm1707, %v1717, %v1718
        %v1720 = vrot.slane %v337, 1
        %v1721 = vrot.slane %v875, 1
        %v1722 = vsel %vm1707, %v1720, %v1721
        %v1723 = vrot.slane %v338, 1
        %v1724 = vrot.slane %v876, 1
        %v1725 = vsel %vm1707, %v1723, %v1724
        %v1726 = vrot.slane %v339, 1
        %v1727 = vrot.slane %v877, 1
        %v1728 = vsel %vm1707, %v1726, %v1727
        %v1729 = vrot.slane %v340, 1
        %v1730 = vrot.slane %v878, 1
        %v1731 = vsel %vm1707, %v1729, %v1730
        %v1732 = vrot.slane %v341, 1
        %v1733 = vrot.slane %v879, 1
        %v1734 = vsel %vm1707, %v1732, %v1733
        %v1735 = vrot.slane %v342, 1
        %v1736 = vrot.slane %v880, 1
        %v1737 = vsel %vm1707, %v1735, %v1736
        %v1738 = vrot.slane %v343, 1
        %v1739 = vrot.slane %v881, 1
        %v1740 = vsel %vm1707, %v1738, %v1739
        %v1741 = vrot.slane %v344, 1
        %v1742 = vrot.slane %v882, 1
        %v1743 = vsel %vm1707, %v1741, %v1742
        %v1744 = vrot.slane %v345, 1
        %v1745 = vrot.slane %v883, 1
        %v1746 = vsel %vm1707, %v1744, %v1745
        %v1747 = vrot.slane %v346, 1
        %v1748 = vrot.slane %v884, 1
        %v1749 = vsel %vm1707, %v1747, %v1748
        %v1750 = vrot.slane %v347, 1
        %v1751 = vrot.slane %v885, 1
        %v1752 = vsel %vm1707, %v1750, %v1751
        %v1753 = vrot.slane %v348, 1
        %v1754 = vrot.slane %v886, 1
        %v1755 = vsel %vm1707, %v1753, %v1754
        %v1756 = vrot.slane %v349, 1
        %v1757 = vrot.slane %v887, 1
        %v1758 = vsel %vm1707, %v1756, %v1757
        %v1759 = vrot.slane %v350, 1
        %v1760 = vrot.slane %v888, 1
        %v1761 = vsel %vm1707, %v1759, %v1760
        %s1780 = scalar_lea.vmem %s1, 384
        %v1781 = vld [vmem:[%s1780] sm:$0xf]
        %v1782 = vld [vmem:[%s1780 + $0x4] sm:$0xf]
        %v1783 = vld [vmem:[%s1780 + $0x8] sm:$0xf]
        %v1784 = vld [vmem:[%s1780 + $0xc] sm:$0xf]
        %v1785 = vld [vmem:[%s1780 + $0x10] sm:$0xf]
        %v1786 = vld [vmem:[%s1780 + $0x14] sm:$0xf]
        %v1787 = vld [vmem:[%s1780 + $0x18] sm:$0xf]
        %v1788 = vld [vmem:[%s1780 + $0x1c] sm:$0xf]
        %v1789 = vld [vmem:[%s1780 + $0x20] sm:$0xf]
        %v1790 = vld [vmem:[%s1780 + $0x24] sm:$0xf]
        %v1791 = vld [vmem:[%s1780 + $0x28] sm:$0xf]
        %v1792 = vld [vmem:[%s1780 + $0x2c] sm:$0xf]
        %v1793 = vld [vmem:[%s1780 + $0x30] sm:$0xf]
        %v1794 = vld [vmem:[%s1780 + $0x34] sm:$0xf]
        %v1795 = vld [vmem:[%s1780 + $0x38] sm:$0xf]
        %v1796 = vld [vmem:[%s1780 + $0x3c] sm:$0xf]
        %v1797 = vld [vmem:[%s1780 + $0x40] sm:$0xf]
        %v1798 = vld [vmem:[%s1780 + $0x44] sm:$0xf]
        %v1799 = vld [vmem:[%s1780 + $0x48] sm:$0xf]
        %v1800 = vld [vmem:[%s1780 + $0x4c] sm:$0xf]
        %v1801 = vld [vmem:[%s1780 + $0x50] sm:$0xf]
        %v1802 = vld [vmem:[%s1780 + $0x54] sm:$0xf]
        %v1803 = vld [vmem:[%s1780 + $0x58] sm:$0xf]
        %v1804 = vld [vmem:[%s1780 + $0x5c] sm:$0xf]
        %v1805 = vld [vmem:[%s1780 + $0x60] sm:$0xf]
        %v1806 = vld [vmem:[%s1780 + $0x64] sm:$0xf]
        %v1807 = vld [vmem:[%s1780 + $0x68] sm:$0xf]
        %v1808 = vld [vmem:[%s1780 + $0x6c] sm:$0xf]
        %v1809 = vld [vmem:[%s1780 + $0x70] sm:$0xf]
        %v1810 = vld [vmem:[%s1780 + $0x74] sm:$0xf]
        %v1811 = vld [vmem:[%s1780 + $0x78] sm:$0xf]
        %v1812 = vld [vmem:[%s1780 + $0x7c] sm:$0xf]
        %v1813 = vld [vmem:[%s1780 + $0x80] sm:$0xf]
        %v1814 = vld [vmem:[%s1780 + $0x84] sm:$0xf]
        %v1815 = vld [vmem:[%s1780 + $0x88] sm:$0xf]
        %v1816 = vld [vmem:[%s1780 + $0x8c] sm:$0xf]
        %v1817 = vld [vmem:[%s1780 + $0x90] sm:$0xf]
        %v1818 = vld [vmem:[%s1780 + $0x94] sm:$0xf]
        %v1819 = vld [vmem:[%s1780 + $0x98] sm:$0xf]
        %v1820 = vld [vmem:[%s1780 + $0x9c] sm:$0xf]
        %v1821 = vld [vmem:[%s1780 + $0xa0] sm:$0xf]
        %v1822 = vld [vmem:[%s1780 + $0xa4] sm:$0xf]
        %v1823 = vld [vmem:[%s1780 + $0xa8] sm:$0xf]
        %v1824 = vld [vmem:[%s1780 + $0xac] sm:$0xf]
        %v1825 = vld [vmem:[%s1780 + $0xb0] sm:$0xf]
        %v1826 = vld [vmem:[%s1780 + $0xb4] sm:$0xf]
        %v1827 = vld [vmem:[%s1780 + $0xb8] sm:$0xf]
        %v1828 = vld [vmem:[%s1780 + $0xbc] sm:$0xf]
        %v1877 = vunpack.c.l.b16 %v1781
        %v1878 = vunpack.c.l.b16 %v1782
        %v1879 = vunpack.c.l.b16 %v1783
        %v1880 = vunpack.c.l.b16 %v1784
        %v1881 = vunpack.c.l.b16 %v1785
        %v1882 = vunpack.c.l.b16 %v1786
        %v1883 = vunpack.c.l.b16 %v1787
        %v1884 = vunpack.c.l.b16 %v1788
        %v1885 = vunpack.c.l.b16 %v1789
        %v1886 = vunpack.c.l.b16 %v1790
        %v1887 = vunpack.c.l.b16 %v1791
        %v1888 = vunpack.c.l.b16 %v1792
        %v1889 = vunpack.c.l.b16 %v1793
        %v1890 = vunpack.c.l.b16 %v1794
        %v1891 = vunpack.c.l.b16 %v1795
        %v1892 = vunpack.c.l.b16 %v1796
        %v1893 = vunpack.c.l.b16 %v1797
        %v1894 = vunpack.c.l.b16 %v1798
        %v1895 = vunpack.c.l.b16 %v1799
        %v1896 = vunpack.c.l.b16 %v1800
        %v1897 = vunpack.c.l.b16 %v1801
        %v1898 = vunpack.c.l.b16 %v1802
        %v1899 = vunpack.c.l.b16 %v1803
        %v1900 = vunpack.c.l.b16 %v1804
        %v1901 = vunpack.c.l.b16 %v1805
        %v1902 = vunpack.c.l.b16 %v1806
        %v1903 = vunpack.c.l.b16 %v1807
        %v1904 = vunpack.c.l.b16 %v1808
        %v1905 = vunpack.c.l.b16 %v1809
        %v1906 = vunpack.c.l.b16 %v1810
        %v1907 = vunpack.c.l.b16 %v1811
        %v1908 = vunpack.c.l.b16 %v1812
        %v1909 = vunpack.c.l.b16 %v1813
        %v1910 = vunpack.c.l.b16 %v1814
        %v1911 = vunpack.c.l.b16 %v1815
        %v1912 = vunpack.c.l.b16 %v1816
        %v1913 = vunpack.c.l.b16 %v1817
        %v1914 = vunpack.c.l.b16 %v1818
        %v1915 = vunpack.c.l.b16 %v1819
        %v1916 = vunpack.c.l.b16 %v1820
        %v1917 = vunpack.c.l.b16 %v1821
        %v1918 = vunpack.c.l.b16 %v1822
        %v1919 = vunpack.c.l.b16 %v1823
        %v1920 = vunpack.c.l.b16 %v1824
        %v1921 = vunpack.c.l.b16 %v1825
        %v1922 = vunpack.c.l.b16 %v1826
        %v1923 = vunpack.c.l.b16 %v1827
        %v1924 = vunpack.c.l.b16 %v1828
        %v1925 = vpack.c.b16 %v1878, %v1877
        %v1926 = vpack.c.b16 %v1880, %v1879
        %v1927 = vpack.c.b16 %v1882, %v1881
        %v1928 = vpack.c.b16 %v1884, %v1883
        %v1929 = vpack.c.b16 %v1886, %v1885
        %v1930 = vpack.c.b16 %v1888, %v1887
        %v1931 = vpack.c.b16 %v1890, %v1889
        %v1932 = vpack.c.b16 %v1892, %v1891
        %v1933 = vpack.c.b16 %v1894, %v1893
        %v1934 = vpack.c.b16 %v1896, %v1895
        %v1935 = vpack.c.b16 %v1898, %v1897
        %v1936 = vpack.c.b16 %v1900, %v1899
        %v1937 = vpack.c.b16 %v1902, %v1901
        %v1938 = vpack.c.b16 %v1904, %v1903
        %v1939 = vpack.c.b16 %v1906, %v1905
        %v1940 = vpack.c.b16 %v1908, %v1907
        %v1941 = vpack.c.b16 %v1910, %v1909
        %v1942 = vpack.c.b16 %v1912, %v1911
        %v1943 = vpack.c.b16 %v1914, %v1913
        %v1944 = vpack.c.b16 %v1916, %v1915
        %v1945 = vpack.c.b16 %v1918, %v1917
        %v1946 = vpack.c.b16 %v1920, %v1919
        %v1947 = vpack.c.b16 %v1922, %v1921
        %v1948 = vpack.c.b16 %v1924, %v1923
        %1973 = vmatprep.subr.bf16.mxu0 0
        %1974 = vmatpush1.bf16.msra.mxu0 %v1925
        %1975 = vmatprep.subr.bf16.mxu0 0
        %1976 = vmatpush1.bf16.msra.mxu0 %v1926
        %1977 = vmatprep.subr.bf16.mxu0 0
        %1978 = vmatpush1.bf16.msra.mxu0 %v1927
        %1979 = vmatprep.subr.bf16.mxu0 0
        %1980 = vmatpush1.bf16.msra.mxu0 %v1928
        %1981 = vmatprep.subr.bf16.mxu0 0
        %1982 = vmatpush1.bf16.msra.mxu0 %v1929
        %1983 = vmatprep.subr.bf16.mxu0 0
        %1984 = vmatpush1.bf16.msra.mxu0 %v1930
        %1985 = vmatprep.subr.bf16.mxu0 0
        %1986 = vmatpush1.bf16.msra.mxu0 %v1931
        %1987 = vmatprep.subr.bf16.mxu0 0
        %1988 = vmatpush1.bf16.msra.mxu0 %v1932
        %1989 = vmatprep.subr.bf16.mxu0 0
        %1990 = vmatpush1.bf16.msra.mxu0 %v1933
        %1991 = vmatprep.subr.bf16.mxu0 0
        %1992 = vmatpush1.bf16.msra.mxu0 %v1934
        %1993 = vmatprep.subr.bf16.mxu0 0
        %1994 = vmatpush1.bf16.msra.mxu0 %v1935
        %1995 = vmatprep.subr.bf16.mxu0 0
        %1996 = vmatpush1.bf16.msra.mxu0 %v1936
        %1997 = vmatprep.subr.bf16.mxu0 0
        %1998 = vmatpush1.bf16.msra.mxu0 %v1937
        %1999 = vmatprep.subr.bf16.mxu0 0
        %2000 = vmatpush1.bf16.msra.mxu0 %v1938
        %2001 = vmatprep.subr.bf16.mxu0 0
        %2002 = vmatpush1.bf16.msra.mxu0 %v1939
        %2003 = vmatprep.subr.bf16.mxu0 0
        %2004 = vmatpush1.bf16.msra.mxu0 %v1940
        %2005 = vmatprep.mubr.bf16.mxu0 %v1713
        %2006 = vmatmul.mubr.bf16.gmra.mrb[0].mxu0 %v1710
        %v2007 = vpop.f32.mrb[0].mxu0
        %v2008 = vadd.f32 0.0, %v2007
        %v2009 = vpop.f32.mrb[0].mxu0
        %v2010 = vpop.f32.mrb[0].mxu0
        %v2011 = vadd.f32 0.0, %v2010
        %v2012 = vpop.f32.mrb[0].mxu0
        %2013 = vmatprep.mubr.bf16.mxu0 %v1716
        %2014 = vmatmul.mubr.bf16.gmra.mrb[0].mxu0 %v1713
        %v2015 = vpop.f32.mrb[0].mxu0
        %v2016 = vadd.f32 0.0, %v2015
        %v2017 = vpop.f32.mrb[0].mxu0
        %v2018 = vpop.f32.mrb[0].mxu0
        %v2019 = vadd.f32 0.0, %v2018
        %v2020 = vpop.f32.mrb[0].mxu0
        %2021 = vmatprep.mubr.bf16.mxu0 %v1719
        %2022 = vmatmul.mubr.bf16.gmra.mrb[0].mxu0 %v1716
        %v2023 = vpop.f32.mrb[0].mxu0
        %v2024 = vadd.f32 0.0, %v2023
        %v2025 = vpop.f32.mrb[0].mxu0
        %v2026 = vpop.f32.mrb[0].mxu0
        %v2027 = vadd.f32 0.0, %v2026
        %v2028 = vpop.f32.mrb[0].mxu0
        %2029 = vmatprep.mubr.bf16.mxu0 %v1722
        %2030 = vmatmul.mubr.bf16.gmra.mrb[0].mxu0 %v1719
        %v2031 = vpop.f32.mrb[0].mxu0
        %v2032 = vadd.f32 0.0, %v2031
        %v2033 = vpop.f32.mrb[0].mxu0
        %v2034 = vpop.f32.mrb[0].mxu0
        %v2035 = vadd.f32 0.0, %v2034
        %v2036 = vpop.f32.mrb[0].mxu0
        %2037 = vmatprep.mubr.bf16.mxu0 %v1725
        %2038 = vmatmul.mubr.bf16.gmra.mrb[0].mxu0 %v1722
        %v2039 = vpop.f32.mrb[0].mxu0
        %v2040 = vadd.f32 0.0, %v2039
        %v2041 = vpop.f32.mrb[0].mxu0
        %v2042 = vpop.f32.mrb[0].mxu0
        %v2043 = vadd.f32 0.0, %v2042
        %v2044 = vpop.f32.mrb[0].mxu0
        %2045 = vmatprep.mubr.bf16.mxu0 %v1728
        %2046 = vmatmul.mubr.bf16.gmra.mrb[0].mxu0 %v1725
        %v2047 = vpop.f32.mrb[0].mxu0
        %v2048 = vadd.f32 0.0, %v2047
        %v2049 = vpop.f32.mrb[0].mxu0
        %v2050 = vpop.f32.mrb[0].mxu0
        %v2051 = vadd.f32 0.0, %v2050
        %v2052 = vpop.f32.mrb[0].mxu0
        %2053 = vmatprep.mubr.bf16.mxu0 %v1731
        %2054 = vmatmul.mubr.bf16.gmra.mrb[0].mxu0 %v1728
        %v2055 = vpop.f32.mrb[0].mxu0
        %v2056 = vadd.f32 0.0, %v2055
        %v2057 = vpop.f32.mrb[0].mxu0
        %v2058 = vpop.f32.mrb[0].mxu0
        %v2059 = vadd.f32 0.0, %v2058
        %v2060 = vpop.f32.mrb[0].mxu0
        %2061 = vmatprep.mubr.bf16.mxu0 %v1734
        %2062 = vmatmul.mubr.bf16.gmra.mrb[0].mxu0 %v1731
        %v2063 = vpop.f32.mrb[0].mxu0
        %v2064 = vadd.f32 0.0, %v2063
        %v2065 = vpop.f32.mrb[0].mxu0
        %v2066 = vpop.f32.mrb[0].mxu0
        %v2067 = vadd.f32 0.0, %v2066
        %v2068 = vpop.f32.mrb[0].mxu0
        %2069 = vmatprep.mubr.bf16.mxu0 %v1737
        %2070 = vmatmul.mubr.bf16.gmra.mrb[0].mxu0 %v1734
        %v2071 = vpop.f32.mrb[0].mxu0
        %v2072 = vadd.f32 0.0, %v2071
        %v2073 = vpop.f32.mrb[0].mxu0
        %v2074 = vpop.f32.mrb[0].mxu0
        %v2075 = vadd.f32 0.0, %v2074
        %v2076 = vpop.f32.mrb[0].mxu0
        %2077 = vmatprep.mubr.bf16.mxu0 %v1740
        %2078 = vmatmul.mubr.bf16.gmra.mrb[0].mxu0 %v1737
        %v2079 = vpop.f32.mrb[0].mxu0
        %v2080 = vadd.f32 0.0, %v2079
        %v2081 = vpop.f32.mrb[0].mxu0
        %v2082 = vpop.f32.mrb[0].mxu0
        %v2083 = vadd.f32 0.0, %v2082
        %v2084 = vpop.f32.mrb[0].mxu0
        %2085 = vmatprep.mubr.bf16.mxu0 %v1743
        %2086 = vmatmul.mubr.bf16.gmra.mrb[0].mxu0 %v1740
        %v2087 = vpop.f32.mrb[0].mxu0
        %v2088 = vadd.f32 0.0, %v2087
        %v2089 = vpop.f32.mrb[0].mxu0
        %v2090 = vpop.f32.mrb[0].mxu0
        %v2091 = vadd.f32 0.0, %v2090
        %v2092 = vpop.f32.mrb[0].mxu0
        %2093 = vmatprep.mubr.bf16.mxu0 %v1746
        %2094 = vmatmul.mubr.bf16.gmra.mrb[0].mxu0 %v1743
        %v2095 = vpop.f32.mrb[0].mxu0
        %v2096 = vadd.f32 0.0, %v2095
        %v2097 = vpop.f32.mrb[0].mxu0
        %v2098 = vpop.f32.mrb[0].mxu0
        %v2099 = vadd.f32 0.0, %v2098
        %v2100 = vpop.f32.mrb[0].mxu0
        %2101 = vmatprep.mubr.bf16.mxu0 %v1749
        %2102 = vmatmul.mubr.bf16.gmra.mrb[0].mxu0 %v1746
        %v2103 = vpop.f32.mrb[0].mxu0
        %v2104 = vadd.f32 0.0, %v2103
        %v2105 = vpop.f32.mrb[0].mxu0
        %v2106 = vpop.f32.mrb[0].mxu0
        %v2107 = vadd.f32 0.0, %v2106
        %v2108 = vpop.f32.mrb[0].mxu0
        %2109 = vmatprep.mubr.bf16.mxu0 %v1752
        %2110 = vmatmul.mubr.bf16.gmra.mrb[0].mxu0 %v1749
        %v2111 = vpop.f32.mrb[0].mxu0
        %v2112 = vadd.f32 0.0, %v2111
        %v2113 = vpop.f32.mrb[0].mxu0
        %v2114 = vpop.f32.mrb[0].mxu0
        %v2115 = vadd.f32 0.0, %v2114
        %v2116 = vpop.f32.mrb[0].mxu0
        %2117 = vmatprep.mubr.bf16.mxu0 %v1755
        %2118 = vmatmul.mubr.bf16.gmra.mrb[0].mxu0 %v1752
        %v2119 = vpop.f32.mrb[0].mxu0
        %v2120 = vadd.f32 0.0, %v2119
        %v2121 = vpop.f32.mrb[0].mxu0
        %v2122 = vpop.f32.mrb[0].mxu0
        %v2123 = vadd.f32 0.0, %v2122
        %v2124 = vpop.f32.mrb[0].mxu0
        %2125 = vmatprep.mubr.bf16.mxu0 %v1758
        %2126 = vmatmul.mubr.bf16.gmra.mrb[0].mxu0 %v1755
        %v2127 = vpop.f32.mrb[0].mxu0
        %v2128 = vadd.f32 0.0, %v2127
        %v2129 = vpop.f32.mrb[0].mxu0
        %v2130 = vpop.f32.mrb[0].mxu0
        %v2131 = vadd.f32 0.0, %v2130
        %v2132 = vpop.f32.mrb[0].mxu0
        %2133 = vdwg.mxu0
        %2134 = vmatprep.subr.bf16.mxu0 0
        %2135 = vmatpush1.bf16.msra.mxu0 %v1941
        %2136 = vmatprep.subr.bf16.mxu0 0
        %2137 = vmatpush1.bf16.msra.mxu0 %v1942
        %2138 = vmatprep.subr.bf16.mxu0 0
        %2139 = vmatpush1.bf16.msra.mxu0 %v1943
        %2140 = vmatprep.subr.bf16.mxu0 0
        %2141 = vmatpush1.bf16.msra.mxu0 %v1944
        %2142 = vmatprep.subr.bf16.mxu0 0
        %2143 = vmatpush1.bf16.msra.mxu0 %v1945
        %2144 = vmatprep.subr.bf16.mxu0 0
        %2145 = vmatpush1.bf16.msra.mxu0 %v1946
        %2146 = vmatprep.subr.bf16.mxu0 0
        %2147 = vmatpush1.bf16.msra.mxu0 %v1947
        %2148 = vmatprep.subr.bf16.mxu0 0
        %2149 = vmatpush1.bf16.msra.mxu0 %v1948
        %2150 = vmatprep.subr.bf16.mxu0 0
        %2151 = vmatpush1.bf16.msra.mxu0 0
        %2152 = vmatprep.subr.bf16.mxu0 0
        %2153 = vmatpush1.bf16.msra.mxu0 0
        %2154 = vmatprep.subr.bf16.mxu0 0
        %2155 = vmatpush1.bf16.msra.mxu0 0
        %2156 = vmatprep.subr.bf16.mxu0 0
        %2157 = vmatpush1.bf16.msra.mxu0 0
        %2158 = vmatprep.subr.bf16.mxu0 0
        %2159 = vmatpush1.bf16.msra.mxu0 0
        %2160 = vmatprep.subr.bf16.mxu0 0
        %2161 = vmatpush1.bf16.msra.mxu0 0
        %2162 = vmatprep.subr.bf16.mxu0 0
        %2163 = vmatpush1.bf16.msra.mxu0 0
        %2164 = vmatprep.subr.bf16.mxu0 0
        %2165 = vmatpush1.bf16.msra.mxu0 0
        %2166 = vmatprep.mubr.bf16.mxu0 0
        %2167 = vmatmul.mubr.bf16.gmra.mrb[0].mxu0 %v1716
        %v2168 = vpop.f32.mrb[0].mxu0
        %v2169 = vadd.f32 %v2008, %v2168
        %v2170 = vpop.f32.mrb[0].mxu0
        %v2171 = vpop.f32.mrb[0].mxu0
        %v2172 = vadd.f32 %v2011, %v2171
        %v2173 = vpop.f32.mrb[0].mxu0
        %2174 = vmatprep.mubr.bf16.mxu0 0
        %2175 = vmatmul.mubr.bf16.gmra.mrb[0].mxu0 %v1719
        %v2176 = vpop.f32.mrb[0].mxu0
        %v2177 = vadd.f32 %v2016, %v2176
        %v2178 = vpop.f32.mrb[0].mxu0
        %v2179 = vpop.f32.mrb[0].mxu0
        %v2180 = vadd.f32 %v2019, %v2179
        %v2181 = vpop.f32.mrb[0].mxu0
        %2182 = vmatprep.mubr.bf16.mxu0 0
        %2183 = vmatmul.mubr.bf16.gmra.mrb[0].mxu0 %v1722
        %v2184 = vpop.f32.mrb[0].mxu0
        %v2185 = vadd.f32 %v2024, %v2184
        %v2186 = vpop.f32.mrb[0].mxu0
        %v2187 = vpop.f32.mrb[0].mxu0
        %v2188 = vadd.f32 %v2027, %v2187
        %v2189 = vpop.f32.mrb[0].mxu0
        %2190 = vmatprep.mubr.bf16.mxu0 0
        %2191 = vmatmul.mubr.bf16.gmra.mrb[0].mxu0 %v1725
        %v2192 = vpop.f32.mrb[0].mxu0
        %v2193 = vadd.f32 %v2032, %v2192
        %v2194 = vpop.f32.mrb[0].mxu0
        %v2195 = vpop.f32.mrb[0].mxu0
        %v2196 = vadd.f32 %v2035, %v2195
        %v2197 = vpop.f32.mrb[0].mxu0
        %2198 = vmatprep.mubr.bf16.mxu0 0
        %2199 = vmatmul.mubr.bf16.gmra.mrb[0].mxu0 %v1728
        %v2200 = vpop.f32.mrb[0].mxu0
        %v2201 = vadd.f32 %v2040, %v2200
        %v2202 = vpop.f32.mrb[0].mxu0
        %v2203 = vpop.f32.mrb[0].mxu0
        %v2204 = vadd.f32 %v2043, %v2203
        %v2205 = vpop.f32.mrb[0].mxu0
        %2206 = vmatprep.mubr.bf16.mxu0 0
        %2207 = vmatmul.mubr.bf16.gmra.mrb[0].mxu0 %v1731
        %v2208 = vpop.f32.mrb[0].mxu0
        %v2209 = vadd.f32 %v2048, %v2208
        %v2210 = vpop.f32.mrb[0].mxu0
        %v2211 = vpop.f32.mrb[0].mxu0
        %v2212 = vadd.f32 %v2051, %v2211
        %v2213 = vpop.f32.mrb[0].mxu0
        %2214 = vmatprep.mubr.bf16.mxu0 0
        %2215 = vmatmul.mubr.bf16.gmra.mrb[0].mxu0 %v1734
        %v2216 = vpop.f32.mrb[0].mxu0
        %v2217 = vadd.f32 %v2056, %v2216
        %v2218 = vpop.f32.mrb[0].mxu0
        %v2219 = vpop.f32.mrb[0].mxu0
        %v2220 = vadd.f32 %v2059, %v2219
        %v2221 = vpop.f32.mrb[0].mxu0
        %2222 = vmatprep.mubr.bf16.mxu0 0
        %2223 = vmatmul.mubr.bf16.gmra.mrb[0].mxu0 %v1737
        %v2224 = vpop.f32.mrb[0].mxu0
        %v2225 = vadd.f32 %v2064, %v2224
        %v2226 = vpop.f32.mrb[0].mxu0
        %v2227 = vpop.f32.mrb[0].mxu0
        %v2228 = vadd.f32 %v2067, %v2227
        %v2229 = vpop.f32.mrb[0].mxu0
        %2230 = vmatprep.mubr.bf16.mxu0 0
        %2231 = vmatmul.mubr.bf16.gmra.mrb[0].mxu0 %v1740
        %v2232 = vpop.f32.mrb[0].mxu0
        %v2233 = vadd.f32 %v2072, %v2232
        %v2234 = vpop.f32.mrb[0].mxu0
        %v2235 = vpop.f32.mrb[0].mxu0
        %v2236 = vadd.f32 %v2075, %v2235
        %v2237 = vpop.f32.mrb[0].mxu0
        %2238 = vmatprep.mubr.bf16.mxu0 0
        %2239 = vmatmul.mubr.bf16.gmra.mrb[0].mxu0 %v1743
        %v2240 = vpop.f32.mrb[0].mxu0
        %v2241 = vadd.f32 %v2080, %v2240
        %v2242 = vpop.f32.mrb[0].mxu0
        %v2243 = vpop.f32.mrb[0].mxu0
        %v2244 = vadd.f32 %v2083, %v2243
        %v2245 = vpop.f32.mrb[0].mxu0
        %2246 = vmatprep.mubr.bf16.mxu0 0
        %2247 = vmatmul.mubr.bf16.gmra.mrb[0].mxu0 %v1746
        %v2248 = vpop.f32.mrb[0].mxu0
        %v2249 = vadd.f32 %v2088, %v2248
        %v2250 = vpop.f32.mrb[0].mxu0
        %v2251 = vpop.f32.mrb[0].mxu0
        %v2252 = vadd.f32 %v2091, %v2251
        %v2253 = vpop.f32.mrb[0].mxu0
        %2254 = vmatprep.mubr.bf16.mxu0 0
        %2255 = vmatmul.mubr.bf16.gmra.mrb[0].mxu0 %v1749
        %v2256 = vpop.f32.mrb[0].mxu0
        %v2257 = vadd.f32 %v2096, %v2256
        %v2258 = vpop.f32.mrb[0].mxu0
        %v2259 = vpop.f32.mrb[0].mxu0
        %v2260 = vadd.f32 %v2099, %v2259
        %v2261 = vpop.f32.mrb[0].mxu0
        %2262 = vmatprep.mubr.bf16.mxu0 0
        %2263 = vmatmul.mubr.bf16.gmra.mrb[0].mxu0 %v1752
        %v2264 = vpop.f32.mrb[0].mxu0
        %v2265 = vadd.f32 %v2104, %v2264
        %v2266 = vpop.f32.mrb[0].mxu0
        %v2267 = vpop.f32.mrb[0].mxu0
        %v2268 = vadd.f32 %v2107, %v2267
        %v2269 = vpop.f32.mrb[0].mxu0
        %2270 = vmatprep.mubr.bf16.mxu0 0
        %2271 = vmatmul.mubr.bf16.gmra.mrb[0].mxu0 %v1755
        %v2272 = vpop.f32.mrb[0].mxu0
        %v2273 = vadd.f32 %v2112, %v2272
        %v2274 = vpop.f32.mrb[0].mxu0
        %v2275 = vpop.f32.mrb[0].mxu0
        %v2276 = vadd.f32 %v2115, %v2275
        %v2277 = vpop.f32.mrb[0].mxu0
        %2278 = vmatprep.mubr.bf16.mxu0 0
        %2279 = vmatmul.mubr.bf16.gmra.mrb[0].mxu0 %v1758
        %v2280 = vpop.f32.mrb[0].mxu0
        %v2281 = vadd.f32 %v2120, %v2280
        %v2282 = vpop.f32.mrb[0].mxu0
        %v2283 = vpop.f32.mrb[0].mxu0
        %v2284 = vadd.f32 %v2123, %v2283
        %v2285 = vpop.f32.mrb[0].mxu0
        %2286 = vmatprep.mubr.bf16.mxu0 0
        %2287 = vmatmul.mubr.bf16.gmra.mrb[0].mxu0 %v1761
        %v2288 = vpop.f32.mrb[0].mxu0
        %v2289 = vadd.f32 %v2128, %v2288
        %v2290 = vpop.f32.mrb[0].mxu0
        %v2291 = vpop.f32.mrb[0].mxu0
        %v2292 = vadd.f32 %v2131, %v2291
        %v2293 = vpop.f32.mrb[0].mxu0
        %2294 = vdwg.mxu0
        %v2295 = vadd.f32 %v1639, %v2169
        %v2296 = vadd.f32 %v1640, %v2172
        %v2297 = vadd.f32 %v1641, %v2177
        %v2298 = vadd.f32 %v1642, %v2180
        %v2299 = vadd.f32 %v1643, %v2185
        %v2300 = vadd.f32 %v1644, %v2188
        %v2301 = vadd.f32 %v1645, %v2193
        %v2302 = vadd.f32 %v1646, %v2196
        %v2303 = vadd.f32 %v1647, %v2201
        %v2304 = vadd.f32 %v1648, %v2204
        %v2305 = vadd.f32 %v1649, %v2209
        %v2306 = vadd.f32 %v1650, %v2212
        %v2307 = vadd.f32 %v1651, %v2217
        %v2308 = vadd.f32 %v1652, %v2220
        %v2309 = vadd.f32 %v1653, %v2225
        %v2310 = vadd.f32 %v1654, %v2228
        %v2311 = vadd.f32 %v1655, %v2233
        %v2312 = vadd.f32 %v1656, %v2236
        %v2313 = vadd.f32 %v1657, %v2241
        %v2314 = vadd.f32 %v1658, %v2244
        %v2315 = vadd.f32 %v1659, %v2249
        %v2316 = vadd.f32 %v1660, %v2252
        %v2317 = vadd.f32 %v1661, %v2257
        %v2318 = vadd.f32 %v1662, %v2260
        %v2319 = vadd.f32 %v1663, %v2265
        %v2320 = vadd.f32 %v1664, %v2268
        %v2321 = vadd.f32 %v1665, %v2273
        %v2322 = vadd.f32 %v1666, %v2276
        %v2323 = vadd.f32 %v1667, %v2281
        %v2324 = vadd.f32 %v1668, %v2284
        %v2325 = vadd.f32 %v1669, %v2289
        %v2326 = vadd.f32 %v1670, %v2292
        %v2327 = vmax.f32 %v2295, 0.0
        %v2328 = vmax.f32 %v2296, 0.0
        %v2329 = vmax.f32 %v2297, 0.0
        %v2330 = vmax.f32 %v2298, 0.0
        %v2331 = vmax.f32 %v2299, 0.0
        %v2332 = vmax.f32 %v2300, 0.0
        %v2333 = vmax.f32 %v2301, 0.0
        %v2334 = vmax.f32 %v2302, 0.0
        %v2335 = vmax.f32 %v2303, 0.0
        %v2336 = vmax.f32 %v2304, 0.0
        %v2337 = vmax.f32 %v2305, 0.0
        %v2338 = vmax.f32 %v2306, 0.0
        %v2339 = vmax.f32 %v2307, 0.0
        %v2340 = vmax.f32 %v2308, 0.0
        %v2341 = vmax.f32 %v2309, 0.0
        %v2342 = vmax.f32 %v2310, 0.0
        %v2343 = vmax.f32 %v2311, 0.0
        %v2344 = vmax.f32 %v2312, 0.0
        %v2345 = vmax.f32 %v2313, 0.0
        %v2346 = vmax.f32 %v2314, 0.0
        %v2347 = vmax.f32 %v2315, 0.0
        %v2348 = vmax.f32 %v2316, 0.0
        %v2349 = vmax.f32 %v2317, 0.0
        %v2350 = vmax.f32 %v2318, 0.0
        %v2351 = vmax.f32 %v2319, 0.0
        %v2352 = vmax.f32 %v2320, 0.0
        %v2353 = vmax.f32 %v2321, 0.0
        %v2354 = vmax.f32 %v2322, 0.0
        %v2355 = vmax.f32 %v2323, 0.0
        %v2356 = vmax.f32 %v2324, 0.0
        %v2357 = vmax.f32 %v2325, 0.0
        %v2358 = vmax.f32 %v2326, 0.0
        %2359 = vst [vmem:[#allocation2] sm:$0xff] 0.0
        %2360 = vst [vmem:[#allocation2 + $0x8] sm:$0xff] 0.0
        %2361 = vst [vmem:[#allocation2 + $0x10] sm:$0x3] 0.0
        %s2362 = scalar_lea.vmem [#allocation2], 408
        %2363 = vst [vmem:[%s2362] sm:$0xff] 0.0
        %2364 = vst [vmem:[%s2362 + $0x8] sm:$0xff] 0.0
        %2365 = vst [vmem:[%s2362 + $0x10] sm:$0x3] 0.0
        %2366 = vst [vmem:[#allocation2] sm:$0x1] 0.0
        %2367 = vst [vmem:[#allocation2 + $0x18] sm:$0x1] 0.0
        %2368 = vst [vmem:[#allocation2 + $0x30] sm:$0x1] 0.0
        %2369 = vst [vmem:[#allocation2 + $0x48] sm:$0x1] 0.0
        %2370 = vst [vmem:[#allocation2 + $0x60] sm:$0x1] 0.0
        %2371 = vst [vmem:[#allocation2 + $0x78] sm:$0x1] 0.0
        %2372 = vst [vmem:[#allocation2 + $0x90] sm:$0x1] 0.0
        %2373 = vst [vmem:[#allocation2 + $0xa8] sm:$0x1] 0.0
        %2374 = vst [vmem:[#allocation2 + $0xc0] sm:$0x1] 0.0
        %2375 = vst [vmem:[#allocation2 + $0xd8] sm:$0x1] 0.0
        %2376 = vst [vmem:[#allocation2 + $0xf0] sm:$0x1] 0.0
        %2377 = vst [vmem:[#allocation2 + $0x108] sm:$0x1] 0.0
        %2378 = vst [vmem:[#allocation2 + $0x120] sm:$0x1] 0.0
        %2379 = vst [vmem:[#allocation2 + $0x138] sm:$0x1] 0.0
        %2380 = vst [vmem:[#allocation2 + $0x150] sm:$0x1] 0.0
        %2381 = vst [vmem:[#allocation2 + $0x168] sm:$0x1] 0.0
        %2382 = vst [vmem:[#allocation2 + $0x180] sm:$0x1] 0.0
        %2383 = vst [vmem:[#allocation2 + $0x198] sm:$0x1] 0.0
        %2384 = vst [vmem:[#allocation2 + $0x11] sm:$0x1] 0.0
        %2385 = vst [vmem:[#allocation2 + $0x29] sm:$0x1] 0.0
        %2386 = vst [vmem:[#allocation2 + $0x41] sm:$0x1] 0.0
        %2387 = vst [vmem:[#allocation2 + $0x59] sm:$0x1] 0.0
        %2388 = vst [vmem:[#allocation2 + $0x71] sm:$0x1] 0.0
        %2389 = vst [vmem:[#allocation2 + $0x89] sm:$0x1] 0.0
        %2390 = vst [vmem:[#allocation2 + $0xa1] sm:$0x1] 0.0
        %2391 = vst [vmem:[#allocation2 + $0xb9] sm:$0x1] 0.0
        %2392 = vst [vmem:[#allocation2 + $0xd1] sm:$0x1] 0.0
        %2393 = vst [vmem:[#allocation2 + $0xe9] sm:$0x1] 0.0
        %2394 = vst [vmem:[#allocation2 + $0x101] sm:$0x1] 0.0
        %2395 = vst [vmem:[#allocation2 + $0x119] sm:$0x1] 0.0
        %2396 = vst [vmem:[#allocation2 + $0x131] sm:$0x1] 0.0
        %2397 = vst [vmem:[#allocation2 + $0x149] sm:$0x1] 0.0
        %2398 = vst [vmem:[#allocation2 + $0x161] sm:$0x1] 0.0
        %2399 = vst [vmem:[#allocation2 + $0x179] sm:$0x1] 0.0
        %2400 = vst [vmem:[#allocation2 + $0x191] sm:$0x1] 0.0
        %2401 = vst [vmem:[#allocation2 + $0x1a9] sm:$0x1] 0.0
        %s2402 = scalar_lea.vmem [#allocation2], 24
        %2403 = vst [vmem:[%s2402 + $0x1] sm:$0xff] %v2327
        %2404 = vst [vmem:[%s2402 + $0x9] sm:$0xff] %v2328
        %2405 = vst [vmem:[%s2402 + $0x19] sm:$0xff] %v2329
        %2406 = vst [vmem:[%s2402 + $0x21] sm:$0xff] %v2330
        %2407 = vst [vmem:[%s2402 + $0x31] sm:$0xff] %v2331
        %2408 = vst [vmem:[%s2402 + $0x39] sm:$0xff] %v2332
        %2409 = vst [vmem:[%s2402 + $0x49] sm:$0xff] %v2333
        %2410 = vst [vmem:[%s2402 + $0x51] sm:$0xff] %v2334
        %2411 = vst [vmem:[%s2402 + $0x61] sm:$0xff] %v2335
        %2412 = vst [vmem:[%s2402 + $0x69] sm:$0xff] %v2336
        %2413 = vst [vmem:[%s2402 + $0x79] sm:$0xff] %v2337
        %2414 = vst [vmem:[%s2402 + $0x81] sm:$0xff] %v2338
        %2415 = vst [vmem:[%s2402 + $0x91] sm:$0xff] %v2339
        %2416 = vst [vmem:[%s2402 + $0x99] sm:$0xff] %v2340
        %2417 = vst [vmem:[%s2402 + $0xa9] sm:$0xff] %v2341
        %2418 = vst [vmem:[%s2402 + $0xb1] sm:$0xff] %v2342
        %2419 = vst [vmem:[%s2402 + $0xc1] sm:$0xff] %v2343
        %2420 = vst [vmem:[%s2402 + $0xc9] sm:$0xff] %v2344
        %2421 = vst [vmem:[%s2402 + $0xd9] sm:$0xff] %v2345
        %2422 = vst [vmem:[%s2402 + $0xe1] sm:$0xff] %v2346
        %2423 = vst [vmem:[%s2402 + $0xf1] sm:$0xff] %v2347
        %2424 = vst [vmem:[%s2402 + $0xf9] sm:$0xff] %v2348
        %2425 = vst [vmem:[%s2402 + $0x109] sm:$0xff] %v2349
        %2426 = vst [vmem:[%s2402 + $0x111] sm:$0xff] %v2350
        %2427 = vst [vmem:[%s2402 + $0x121] sm:$0xff] %v2351
        %2428 = vst [vmem:[%s2402 + $0x129] sm:$0xff] %v2352
        %2429 = vst [vmem:[%s2402 + $0x139] sm:$0xff] %v2353
        %2430 = vst [vmem:[%s2402 + $0x141] sm:$0xff] %v2354
        %2431 = vst [vmem:[%s2402 + $0x151] sm:$0xff] %v2355
        %2432 = vst [vmem:[%s2402 + $0x159] sm:$0xff] %v2356
        %2433 = vst [vmem:[%s2402 + $0x169] sm:$0xff] %v2357
        %2434 = vst [vmem:[%s2402 + $0x171] sm:$0xff] %v2358
        %v2435 = vld [vmem:[#allocation2] sm:$0xff]
        %v2436 = vld [vmem:[#allocation2 + $0x8] sm:$0xff]
        %v2437 = vld [vmem:[#allocation2 + $0x10] sm:$0x3]
        %v2438 = vld [vmem:[#allocation2 + $0x18] sm:$0xff]
        %v2439 = vld [vmem:[#allocation2 + $0x20] sm:$0xff]
        %v2440 = vld [vmem:[#allocation2 + $0x28] sm:$0x3]
        %v2441 = vld [vmem:[#allocation2 + $0x30] sm:$0xff]
        %v2442 = vld [vmem:[#allocation2 + $0x38] sm:$0xff]
        %v2443 = vld [vmem:[#allocation2 + $0x40] sm:$0x3]
        %v2444 = vld [vmem:[#allocation2 + $0x48] sm:$0xff]
        %v2445 = vld [vmem:[#allocation2 + $0x50] sm:$0xff]
        %v2446 = vld [vmem:[#allocation2 + $0x58] sm:$0x3]
        %v2447 = vld [vmem:[#allocation2 + $0x60] sm:$0xff]
        %v2448 = vld [vmem:[#allocation2 + $0x68] sm:$0xff]
        %v2449 = vld [vmem:[#allocation2 + $0x70] sm:$0x3]
        %v2450 = vld [vmem:[#allocation2 + $0x78] sm:$0xff]
        %v2451 = vld [vmem:[#allocation2 + $0x80] sm:$0xff]
        %v2452 = vld [vmem:[#allocation2 + $0x88] sm:$0x3]
        %v2453 = vld [vmem:[#allocation2 + $0x90] sm:$0xff]
        %v2454 = vld [vmem:[#allocation2 + $0x98] sm:$0xff]
        %v2455 = vld [vmem:[#allocation2 + $0xa0] sm:$0x3]
        %v2456 = vld [vmem:[#allocation2 + $0xa8] sm:$0xff]
        %v2457 = vld [vmem:[#allocation2 + $0xb0] sm:$0xff]
        %v2458 = vld [vmem:[#allocation2 + $0xb8] sm:$0x3]
        %v2459 = vld [vmem:[#allocation2 + $0xc0] sm:$0xff]
        %v2460 = vld [vmem:[#allocation2 + $0xc8] sm:$0xff]
        %v2461 = vld [vmem:[#allocation2 + $0xd0] sm:$0x3]
        %v2462 = vld [vmem:[#allocation2 + $0xd8] sm:$0xff]
        %v2463 = vld [vmem:[#allocation2 + $0xe0] sm:$0xff]
        %v2464 = vld [vmem:[#allocation2 + $0xe8] sm:$0x3]
        %v2465 = vld [vmem:[#allocation2 + $0xf0] sm:$0xff]
        %v2466 = vld [vmem:[#allocation2 + $0xf8] sm:$0xff]
        %v2467 = vld [vmem:[#allocation2 + $0x100] sm:$0x3]
        %v2468 = vld [vmem:[#allocation2 + $0x108] sm:$0xff]
        %v2469 = vld [vmem:[#allocation2 + $0x110] sm:$0xff]
        %v2470 = vld [vmem:[#allocation2 + $0x118] sm:$0x3]
        %v2471 = vld [vmem:[#allocation2 + $0x120] sm:$0xff]
        %v2472 = vld [vmem:[#allocation2 + $0x128] sm:$0xff]
        %v2473 = vld [vmem:[#allocation2 + $0x130] sm:$0x3]
        %v2474 = vld [vmem:[#allocation2 + $0x138] sm:$0xff]
        %v2475 = vld [vmem:[#allocation2 + $0x140] sm:$0xff]
        %v2476 = vld [vmem:[#allocation2 + $0x148] sm:$0x3]
        %v2477 = vld [vmem:[#allocation2 + $0x150] sm:$0xff]
        %v2478 = vld [vmem:[#allocation2 + $0x158] sm:$0xff]
        %v2479 = vld [vmem:[#allocation2 + $0x160] sm:$0x3]
        %v2480 = vld [vmem:[#allocation2 + $0x168] sm:$0xff]
        %v2481 = vld [vmem:[#allocation2 + $0x170] sm:$0xff]
        %v2482 = vld [vmem:[#allocation2 + $0x178] sm:$0x3]
        %v2483 = vld [vmem:[#allocation2 + $0x180] sm:$0xff]
        %v2484 = vld [vmem:[#allocation2 + $0x188] sm:$0xff]
        %v2485 = vld [vmem:[#allocation2 + $0x190] sm:$0x3]
        %v2486 = vld [vmem:[#allocation2 + $0x198] sm:$0xff]
        %v2487 = vld [vmem:[#allocation2 + $0x1a0] sm:$0xff]
        %v2488 = vld [vmem:[#allocation2 + $0x1a8] sm:$0x3]
        %v2489 = vld [vmem:[%s5] sm:$0x1]
        %v2490 = vpack.c.bf16 %v2436, %v2435
        %v2491 = vpack.c.bf16 %v2439, %v2438
        %v2492 = vpack.c.bf16 %v2442, %v2441
        %v2493 = vpack.c.bf16 %v2445, %v2444
        %v2494 = vpack.c.bf16 %v2448, %v2447
        %v2495 = vpack.c.bf16 %v2451, %v2450
        %v2496 = vpack.c.bf16 %v2454, %v2453
        %v2497 = vpack.c.bf16 %v2457, %v2456
        %v2498 = vpack.c.bf16 %v2460, %v2459
        %v2499 = vpack.c.bf16 %v2463, %v2462
        %v2500 = vpack.c.bf16 %v2466, %v2465
        %v2501 = vpack.c.bf16 %v2469, %v2468
        %v2502 = vpack.c.bf16 %v2472, %v2471
        %v2503 = vpack.c.bf16 %v2475, %v2474
        %v2504 = vpack.c.bf16 %v2478, %v2477
        %v2505 = vpack.c.bf16 %v2481, %v2480
        %v2506 = vpack.c.bf16 %v2484, %v2483
        %v2507 = vpack.c.bf16 %v2487, %v2486
        %v2508 = vld [vmem:[%s2] sm:$0xf]
        %v2509 = vld [vmem:[%s2 + $0x4] sm:$0xf]
        %v2510 = vld [vmem:[%s2 + $0x8] sm:$0xf]
        %v2511 = vld [vmem:[%s2 + $0xc] sm:$0xf]
        %v2512 = vld [vmem:[%s2 + $0x10] sm:$0xf]
        %v2513 = vld [vmem:[%s2 + $0x14] sm:$0xf]
        %v2514 = vld [vmem:[%s2 + $0x18] sm:$0xf]
        %v2515 = vld [vmem:[%s2 + $0x1c] sm:$0xf]
        %v2516 = vld [vmem:[%s2 + $0x20] sm:$0xf]
        %v2517 = vld [vmem:[%s2 + $0x24] sm:$0xf]
        %v2518 = vld [vmem:[%s2 + $0x28] sm:$0xf]
        %v2519 = vld [vmem:[%s2 + $0x2c] sm:$0xf]
        %v2520 = vld [vmem:[%s2 + $0x30] sm:$0xf]
        %v2521 = vld [vmem:[%s2 + $0x34] sm:$0xf]
        %v2522 = vld [vmem:[%s2 + $0x38] sm:$0xf]
        %v2523 = vld [vmem:[%s2 + $0x3c] sm:$0xf]
        %v2524 = vld [vmem:[%s2 + $0x40] sm:$0xf]
        %v2525 = vld [vmem:[%s2 + $0x44] sm:$0xf]
        %v2526 = vld [vmem:[%s2 + $0x48] sm:$0xf]
        %v2527 = vld [vmem:[%s2 + $0x4c] sm:$0xf]
        %v2528 = vld [vmem:[%s2 + $0x50] sm:$0xf]
        %v2529 = vld [vmem:[%s2 + $0x54] sm:$0xf]
        %v2530 = vld [vmem:[%s2 + $0x58] sm:$0xf]
        %v2531 = vld [vmem:[%s2 + $0x5c] sm:$0xf]
        %v2532 = vld [vmem:[%s2 + $0x60] sm:$0xf]
        %v2533 = vld [vmem:[%s2 + $0x64] sm:$0xf]
        %v2534 = vld [vmem:[%s2 + $0x68] sm:$0xf]
        %v2535 = vld [vmem:[%s2 + $0x6c] sm:$0xf]
        %v2536 = vld [vmem:[%s2 + $0x70] sm:$0xf]
        %v2537 = vld [vmem:[%s2 + $0x74] sm:$0xf]
        %v2538 = vld [vmem:[%s2 + $0x78] sm:$0xf]
        %v2539 = vld [vmem:[%s2 + $0x7c] sm:$0xf]
        %v2540 = vld [vmem:[%s2 + $0x80] sm:$0xf]
        %v2541 = vld [vmem:[%s2 + $0x84] sm:$0xf]
        %v2542 = vld [vmem:[%s2 + $0x88] sm:$0xf]
        %v2543 = vld [vmem:[%s2 + $0x8c] sm:$0xf]
        %v2544 = vld [vmem:[%s2 + $0x90] sm:$0xf]
        %v2545 = vld [vmem:[%s2 + $0x94] sm:$0xf]
        %v2546 = vld [vmem:[%s2 + $0x98] sm:$0xf]
        %v2547 = vld [vmem:[%s2 + $0x9c] sm:$0xf]
        %v2548 = vld [vmem:[%s2 + $0xa0] sm:$0xf]
        %v2549 = vld [vmem:[%s2 + $0xa4] sm:$0xf]
        %v2550 = vld [vmem:[%s2 + $0xa8] sm:$0xf]
        %v2551 = vld [vmem:[%s2 + $0xac] sm:$0xf]
        %v2552 = vld [vmem:[%s2 + $0xb0] sm:$0xf]
        %v2553 = vld [vmem:[%s2 + $0xb4] sm:$0xf]
        %v2554 = vld [vmem:[%s2 + $0xb8] sm:$0xf]
        %v2555 = vld [vmem:[%s2 + $0xbc] sm:$0xf]
        %v2557 = vlaneseq
        %v2558 = vshrl.u32 %v2557, 7
        %v2559 = vsub.s32 0, %v2558
        %v2560 = vrot.slane %v2489, %v2559
        %v2610 = vunpack.c.l.b16 %v2508
        %v2611 = vunpack.c.l.b16 %v2509
        %v2612 = vunpack.c.l.b16 %v2510
        %v2613 = vunpack.c.l.b16 %v2511
        %v2614 = vunpack.c.l.b16 %v2512
        %v2615 = vunpack.c.l.b16 %v2513
        %v2616 = vunpack.c.l.b16 %v2514
        %v2617 = vunpack.c.l.b16 %v2515
        %v2618 = vunpack.c.l.b16 %v2516
        %v2619 = vunpack.c.l.b16 %v2517
        %v2620 = vunpack.c.l.b16 %v2518
        %v2621 = vunpack.c.l.b16 %v2519
        %v2622 = vunpack.c.l.b16 %v2520
        %v2623 = vunpack.c.l.b16 %v2521
        %v2624 = vunpack.c.l.b16 %v2522
        %v2625 = vunpack.c.l.b16 %v2523
        %v2626 = vunpack.c.l.b16 %v2524
        %v2627 = vunpack.c.l.b16 %v2525
        %v2628 = vunpack.c.l.b16 %v2526
        %v2629 = vunpack.c.l.b16 %v2527
        %v2630 = vunpack.c.l.b16 %v2528
        %v2631 = vunpack.c.l.b16 %v2529
        %v2632 = vunpack.c.l.b16 %v2530
        %v2633 = vunpack.c.l.b16 %v2531
        %v2634 = vunpack.c.l.b16 %v2532
        %v2635 = vunpack.c.l.b16 %v2533
        %v2636 = vunpack.c.l.b16 %v2534
        %v2637 = vunpack.c.l.b16 %v2535
        %v2638 = vunpack.c.l.b16 %v2536
        %v2639 = vunpack.c.l.b16 %v2537
        %v2640 = vunpack.c.l.b16 %v2538
        %v2641 = vunpack.c.l.b16 %v2539
        %v2642 = vunpack.c.l.b16 %v2540
        %v2643 = vunpack.c.l.b16 %v2541
        %v2644 = vunpack.c.l.b16 %v2542
        %v2645 = vunpack.c.l.b16 %v2543
        %v2646 = vunpack.c.l.b16 %v2544
        %v2647 = vunpack.c.l.b16 %v2545
        %v2648 = vunpack.c.l.b16 %v2546
        %v2649 = vunpack.c.l.b16 %v2547
        %v2650 = vunpack.c.l.b16 %v2548
        %v2651 = vunpack.c.l.b16 %v2549
        %v2652 = vunpack.c.l.b16 %v2550
        %v2653 = vunpack.c.l.b16 %v2551
        %v2654 = vunpack.c.l.b16 %v2552
        %v2655 = vunpack.c.l.b16 %v2553
        %v2656 = vunpack.c.l.b16 %v2554
        %v2657 = vunpack.c.l.b16 %v2555
        %v2658 = vpack.c.b16 %v2611, %v2610
        %v2659 = vpack.c.b16 %v2613, %v2612
        %v2660 = vpack.c.b16 %v2615, %v2614
        %v2661 = vpack.c.b16 %v2617, %v2616
        %v2662 = vpack.c.b16 %v2619, %v2618
        %v2663 = vpack.c.b16 %v2621, %v2620
        %v2664 = vpack.c.b16 %v2623, %v2622
        %v2665 = vpack.c.b16 %v2625, %v2624
        %v2666 = vpack.c.b16 %v2627, %v2626
        %v2667 = vpack.c.b16 %v2629, %v2628
        %v2668 = vpack.c.b16 %v2631, %v2630
        %v2669 = vpack.c.b16 %v2633, %v2632
        %v2670 = vpack.c.b16 %v2635, %v2634
        %v2671 = vpack.c.b16 %v2637, %v2636
        %v2672 = vpack.c.b16 %v2639, %v2638
        %v2673 = vpack.c.b16 %v2641, %v2640
        %v2674 = vpack.c.b16 %v2643, %v2642
        %v2675 = vpack.c.b16 %v2645, %v2644
        %v2676 = vpack.c.b16 %v2647, %v2646
        %v2677 = vpack.c.b16 %v2649, %v2648
        %v2678 = vpack.c.b16 %v2651, %v2650
        %v2679 = vpack.c.b16 %v2653, %v2652
        %v2680 = vpack.c.b16 %v2655, %v2654
        %v2681 = vpack.c.b16 %v2657, %v2656
        %2706 = vmatprep.subr.bf16.mxu0 0
        %2707 = vmatpush1.bf16.msra.mxu0 %v2658
        %2708 = vmatprep.subr.bf16.mxu0 0
        %2709 = vmatpush1.bf16.msra.mxu0 %v2659
        %2710 = vmatprep.subr.bf16.mxu0 0
        %2711 = vmatpush1.bf16.msra.mxu0 %v2660
        %2712 = vmatprep.subr.bf16.mxu0 0
        %2713 = vmatpush1.bf16.msra.mxu0 %v2661
        %2714 = vmatprep.subr.bf16.mxu0 0
        %2715 = vmatpush1.bf16.msra.mxu0 %v2662
        %2716 = vmatprep.subr.bf16.mxu0 0
        %2717 = vmatpush1.bf16.msra.mxu0 %v2663
        %2718 = vmatprep.subr.bf16.mxu0 0
        %2719 = vmatpush1.bf16.msra.mxu0 %v2664
        %2720 = vmatprep.subr.bf16.mxu0 0
        %2721 = vmatpush1.bf16.msra.mxu0 %v2665
        %2722 = vmatprep.subr.bf16.mxu0 0
        %2723 = vmatpush1.bf16.msra.mxu0 %v2666
        %2724 = vmatprep.subr.bf16.mxu0 0
        %2725 = vmatpush1.bf16.msra.mxu0 %v2667
        %2726 = vmatprep.subr.bf16.mxu0 0
        %2727 = vmatpush1.bf16.msra.mxu0 %v2668
        %2728 = vmatprep.subr.bf16.mxu0 0
        %2729 = vmatpush1.bf16.msra.mxu0 %v2669
        %2730 = vmatprep.subr.bf16.mxu0 0
        %2731 = vmatpush1.bf16.msra.mxu0 %v2670
        %2732 = vmatprep.subr.bf16.mxu0 0
        %2733 = vmatpush1.bf16.msra.mxu0 %v2671
        %2734 = vmatprep.subr.bf16.mxu0 0
        %2735 = vmatpush1.bf16.msra.mxu0 %v2672
        %2736 = vmatprep.subr.bf16.mxu0 0
        %2737 = vmatpush1.bf16.msra.mxu0 %v2673
        %2738 = vmatprep.mubr.bf16.mxu0 %v2491
        %2739 = vmatmul.mubr.bf16.gmra.mrb[0].mxu0 %v2490
        %v2740 = vpop.f32.mrb[0].mxu0
        %v2741 = vadd.f32 %v2560, %v2740
        %v2742 = vpop.f32.mrb[0].mxu0
        %v2743 = vpop.f32.mrb[0].mxu0
        %v2744 = vadd.f32 %v2560, %v2743
        %v2745 = vpop.f32.mrb[0].mxu0
        %2746 = vmatprep.mubr.bf16.mxu0 %v2492
        %2747 = vmatmul.mubr.bf16.gmra.mrb[0].mxu0 %v2491
        %v2748 = vpop.f32.mrb[0].mxu0
        %v2749 = vadd.f32 %v2560, %v2748
        %v2750 = vpop.f32.mrb[0].mxu0
        %v2751 = vpop.f32.mrb[0].mxu0
        %v2752 = vadd.f32 %v2560, %v2751
        %v2753 = vpop.f32.mrb[0].mxu0
        %2754 = vmatprep.mubr.bf16.mxu0 %v2493
        %2755 = vmatmul.mubr.bf16.gmra.mrb[0].mxu0 %v2492
        %v2756 = vpop.f32.mrb[0].mxu0
        %v2757 = vadd.f32 %v2560, %v2756
        %v2758 = vpop.f32.mrb[0].mxu0
        %v2759 = vpop.f32.mrb[0].mxu0
        %v2760 = vadd.f32 %v2560, %v2759
        %v2761 = vpop.f32.mrb[0].mxu0
        %2762 = vmatprep.mubr.bf16.mxu0 %v2494
        %2763 = vmatmul.mubr.bf16.gmra.mrb[0].mxu0 %v2493
        %v2764 = vpop.f32.mrb[0].mxu0
        %v2765 = vadd.f32 %v2560, %v2764
        %v2766 = vpop.f32.mrb[0].mxu0
        %v2767 = vpop.f32.mrb[0].mxu0
        %v2768 = vadd.f32 %v2560, %v2767
        %v2769 = vpop.f32.mrb[0].mxu0
        %2770 = vmatprep.mubr.bf16.mxu0 %v2495
        %2771 = vmatmul.mubr.bf16.gmra.mrb[0].mxu0 %v2494
        %v2772 = vpop.f32.mrb[0].mxu0
        %v2773 = vadd.f32 %v2560, %v2772
        %v2774 = vpop.f32.mrb[0].mxu0
        %v2775 = vpop.f32.mrb[0].mxu0
        %v2776 = vadd.f32 %v2560, %v2775
        %v2777 = vpop.f32.mrb[0].mxu0
        %2778 = vmatprep.mubr.bf16.mxu0 %v2496
        %2779 = vmatmul.mubr.bf16.gmra.mrb[0].mxu0 %v2495
        %v2780 = vpop.f32.mrb[0].mxu0
        %v2781 = vadd.f32 %v2560, %v2780
        %v2782 = vpop.f32.mrb[0].mxu0
        %v2783 = vpop.f32.mrb[0].mxu0
        %v2784 = vadd.f32 %v2560, %v2783
        %v2785 = vpop.f32.mrb[0].mxu0
        %2786 = vmatprep.mubr.bf16.mxu0 %v2497
        %2787 = vmatmul.mubr.bf16.gmra.mrb[0].mxu0 %v2496
        %v2788 = vpop.f32.mrb[0].mxu0
        %v2789 = vadd.f32 %v2560, %v2788
        %v2790 = vpop.f32.mrb[0].mxu0
        %v2791 = vpop.f32.mrb[0].mxu0
        %v2792 = vadd.f32 %v2560, %v2791
        %v2793 = vpop.f32.mrb[0].mxu0
        %2794 = vmatprep.mubr.bf16.mxu0 %v2498
        %2795 = vmatmul.mubr.bf16.gmra.mrb[0].mxu0 %v2497
        %v2796 = vpop.f32.mrb[0].mxu0
        %v2797 = vadd.f32 %v2560, %v2796
        %v2798 = vpop.f32.mrb[0].mxu0
        %v2799 = vpop.f32.mrb[0].mxu0
        %v2800 = vadd.f32 %v2560, %v2799
        %v2801 = vpop.f32.mrb[0].mxu0
        %2802 = vmatprep.mubr.bf16.mxu0 %v2499
        %2803 = vmatmul.mubr.bf16.gmra.mrb[0].mxu0 %v2498
        %v2804 = vpop.f32.mrb[0].mxu0
        %v2805 = vadd.f32 %v2560, %v2804
        %v2806 = vpop.f32.mrb[0].mxu0
        %v2807 = vpop.f32.mrb[0].mxu0
        %v2808 = vadd.f32 %v2560, %v2807
        %v2809 = vpop.f32.mrb[0].mxu0
        %2810 = vmatprep.mubr.bf16.mxu0 %v2500
        %2811 = vmatmul.mubr.bf16.gmra.mrb[0].mxu0 %v2499
        %v2812 = vpop.f32.mrb[0].mxu0
        %v2813 = vadd.f32 %v2560, %v2812
        %v2814 = vpop.f32.mrb[0].mxu0
        %v2815 = vpop.f32.mrb[0].mxu0
        %v2816 = vadd.f32 %v2560, %v2815
        %v2817 = vpop.f32.mrb[0].mxu0
        %2818 = vmatprep.mubr.bf16.mxu0 %v2501
        %2819 = vmatmul.mubr.bf16.gmra.mrb[0].mxu0 %v2500
        %v2820 = vpop.f32.mrb[0].mxu0
        %v2821 = vadd.f32 %v2560, %v2820
        %v2822 = vpop.f32.mrb[0].mxu0
        %v2823 = vpop.f32.mrb[0].mxu0
        %v2824 = vadd.f32 %v2560, %v2823
        %v2825 = vpop.f32.mrb[0].mxu0
        %2826 = vmatprep.mubr.bf16.mxu0 %v2502
        %2827 = vmatmul.mubr.bf16.gmra.mrb[0].mxu0 %v2501
        %v2828 = vpop.f32.mrb[0].mxu0
        %v2829 = vadd.f32 %v2560, %v2828
        %v2830 = vpop.f32.mrb[0].mxu0
        %v2831 = vpop.f32.mrb[0].mxu0
        %v2832 = vadd.f32 %v2560, %v2831
        %v2833 = vpop.f32.mrb[0].mxu0
        %2834 = vmatprep.mubr.bf16.mxu0 %v2503
        %2835 = vmatmul.mubr.bf16.gmra.mrb[0].mxu0 %v2502
        %v2836 = vpop.f32.mrb[0].mxu0
        %v2837 = vadd.f32 %v2560, %v2836
        %v2838 = vpop.f32.mrb[0].mxu0
        %v2839 = vpop.f32.mrb[0].mxu0
        %v2840 = vadd.f32 %v2560, %v2839
        %v2841 = vpop.f32.mrb[0].mxu0
        %2842 = vmatprep.mubr.bf16.mxu0 %v2504
        %2843 = vmatmul.mubr.bf16.gmra.mrb[0].mxu0 %v2503
        %v2844 = vpop.f32.mrb[0].mxu0
        %v2845 = vadd.f32 %v2560, %v2844
        %v2846 = vpop.f32.mrb[0].mxu0
        %v2847 = vpop.f32.mrb[0].mxu0
        %v2848 = vadd.f32 %v2560, %v2847
        %v2849 = vpop.f32.mrb[0].mxu0
        %2850 = vmatprep.mubr.bf16.mxu0 %v2505
        %2851 = vmatmul.mubr.bf16.gmra.mrb[0].mxu0 %v2504
        %v2852 = vpop.f32.mrb[0].mxu0
        %v2853 = vadd.f32 %v2560, %v2852
        %v2854 = vpop.f32.mrb[0].mxu0
        %v2855 = vpop.f32.mrb[0].mxu0
        %v2856 = vadd.f32 %v2560, %v2855
        %v2857 = vpop.f32.mrb[0].mxu0
        %2858 = vmatprep.mubr.bf16.mxu0 %v2506
        %2859 = vmatmul.mubr.bf16.gmra.mrb[0].mxu0 %v2505
        %v2860 = vpop.f32.mrb[0].mxu0
        %v2861 = vadd.f32 %v2560, %v2860
        %v2862 = vpop.f32.mrb[0].mxu0
        %v2863 = vpop.f32.mrb[0].mxu0
        %v2864 = vadd.f32 %v2560, %v2863
        %v2865 = vpop.f32.mrb[0].mxu0
        %2866 = vdwg.mxu0
        %2867 = vmatprep.subr.bf16.mxu0 0
        %2868 = vmatpush1.bf16.msra.mxu0 %v2674
        %2869 = vmatprep.subr.bf16.mxu0 0
        %2870 = vmatpush1.bf16.msra.mxu0 %v2675
        %2871 = vmatprep.subr.bf16.mxu0 0
        %2872 = vmatpush1.bf16.msra.mxu0 %v2676
        %2873 = vmatprep.subr.bf16.mxu0 0
        %2874 = vmatpush1.bf16.msra.mxu0 %v2677
        %2875 = vmatprep.subr.bf16.mxu0 0
        %2876 = vmatpush1.bf16.msra.mxu0 %v2678
        %2877 = vmatprep.subr.bf16.mxu0 0
        %2878 = vmatpush1.bf16.msra.mxu0 %v2679
        %2879 = vmatprep.subr.bf16.mxu0 0
        %2880 = vmatpush1.bf16.msra.mxu0 %v2680
        %2881 = vmatprep.subr.bf16.mxu0 0
        %2882 = vmatpush1.bf16.msra.mxu0 %v2681
        %2883 = vmatprep.subr.bf16.mxu0 0
        %2884 = vmatpush1.bf16.msra.mxu0 0
        %2885 = vmatprep.subr.bf16.mxu0 0
        %2886 = vmatpush1.bf16.msra.mxu0 0
        %2887 = vmatprep.subr.bf16.mxu0 0
        %2888 = vmatpush1.bf16.msra.mxu0 0
        %2889 = vmatprep.subr.bf16.mxu0 0
        %2890 = vmatpush1.bf16.msra.mxu0 0
        %2891 = vmatprep.subr.bf16.mxu0 0
        %2892 = vmatpush1.bf16.msra.mxu0 0
        %2893 = vmatprep.subr.bf16.mxu0 0
        %2894 = vmatpush1.bf16.msra.mxu0 0
        %2895 = vmatprep.subr.bf16.mxu0 0
        %2896 = vmatpush1.bf16.msra.mxu0 0
        %2897 = vmatprep.subr.bf16.mxu0 0
        %2898 = vmatpush1.bf16.msra.mxu0 0
        %2899 = vmatprep.mubr.bf16.mxu0 0
        %2900 = vmatmul.mubr.bf16.gmra.mrb[0].mxu0 %v2492
        %v2901 = vpop.f32.mrb[0].mxu0
        %v2902 = vadd.f32 %v2741, %v2901
        %v2903 = vpop.f32.mrb[0].mxu0
        %v2904 = vpop.f32.mrb[0].mxu0
        %v2905 = vadd.f32 %v2744, %v2904
        %v2906 = vpop.f32.mrb[0].mxu0
        %2907 = vmatprep.mubr.bf16.mxu0 0
        %2908 = vmatmul.mubr.bf16.gmra.mrb[0].mxu0 %v2493
        %v2909 = vpop.f32.mrb[0].mxu0
        %v2910 = vadd.f32 %v2749, %v2909
        %v2911 = vpop.f32.mrb[0].mxu0
        %v2912 = vpop.f32.mrb[0].mxu0
        %v2913 = vadd.f32 %v2752, %v2912
        %v2914 = vpop.f32.mrb[0].mxu0
        %2915 = vmatprep.mubr.bf16.mxu0 0
        %2916 = vmatmul.mubr.bf16.gmra.mrb[0].mxu0 %v2494
        %v2917 = vpop.f32.mrb[0].mxu0
        %v2918 = vadd.f32 %v2757, %v2917
        %v2919 = vpop.f32.mrb[0].mxu0
        %v2920 = vpop.f32.mrb[0].mxu0
        %v2921 = vadd.f32 %v2760, %v2920
        %v2922 = vpop.f32.mrb[0].mxu0
        %2923 = vmatprep.mubr.bf16.mxu0 0
        %2924 = vmatmul.mubr.bf16.gmra.mrb[0].mxu0 %v2495
        %v2925 = vpop.f32.mrb[0].mxu0
        %v2926 = vadd.f32 %v2765, %v2925
        %v2927 = vpop.f32.mrb[0].mxu0
        %v2928 = vpop.f32.mrb[0].mxu0
        %v2929 = vadd.f32 %v2768, %v2928
        %v2930 = vpop.f32.mrb[0].mxu0
        %2931 = vmatprep.mubr.bf16.mxu0 0
        %2932 = vmatmul.mubr.bf16.gmra.mrb[0].mxu0 %v2496
        %v2933 = vpop.f32.mrb[0].mxu0
        %v2934 = vadd.f32 %v2773, %v2933
        %v2935 = vpop.f32.mrb[0].mxu0
        %v2936 = vpop.f32.mrb[0].mxu0
        %v2937 = vadd.f32 %v2776, %v2936
        %v2938 = vpop.f32.mrb[0].mxu0
        %2939 = vmatprep.mubr.bf16.mxu0 0
        %2940 = vmatmul.mubr.bf16.gmra.mrb[0].mxu0 %v2497
        %v2941 = vpop.f32.mrb[0].mxu0
        %v2942 = vadd.f32 %v2781, %v2941
        %v2943 = vpop.f32.mrb[0].mxu0
        %v2944 = vpop.f32.mrb[0].mxu0
        %v2945 = vadd.f32 %v2784, %v2944
        %v2946 = vpop.f32.mrb[0].mxu0
        %2947 = vmatprep.mubr.bf16.mxu0 0
        %2948 = vmatmul.mubr.bf16.gmra.mrb[0].mxu0 %v2498
        %v2949 = vpop.f32.mrb[0].mxu0
        %v2950 = vadd.f32 %v2789, %v2949
        %v2951 = vpop.f32.mrb[0].mxu0
        %v2952 = vpop.f32.mrb[0].mxu0
        %v2953 = vadd.f32 %v2792, %v2952
        %v2954 = vpop.f32.mrb[0].mxu0
        %2955 = vmatprep.mubr.bf16.mxu0 0
        %2956 = vmatmul.mubr.bf16.gmra.mrb[0].mxu0 %v2499
        %v2957 = vpop.f32.mrb[0].mxu0
        %v2958 = vadd.f32 %v2797, %v2957
        %v2959 = vpop.f32.mrb[0].mxu0
        %v2960 = vpop.f32.mrb[0].mxu0
        %v2961 = vadd.f32 %v2800, %v2960
        %v2962 = vpop.f32.mrb[0].mxu0
        %2963 = vmatprep.mubr.bf16.mxu0 0
        %2964 = vmatmul.mubr.bf16.gmra.mrb[0].mxu0 %v2500
        %v2965 = vpop.f32.mrb[0].mxu0
        %v2966 = vadd.f32 %v2805, %v2965
        %v2967 = vpop.f32.mrb[0].mxu0
        %v2968 = vpop.f32.mrb[0].mxu0
        %v2969 = vadd.f32 %v2808, %v2968
        %v2970 = vpop.f32.mrb[0].mxu0
        %2971 = vmatprep.mubr.bf16.mxu0 0
        %2972 = vmatmul.mubr.bf16.gmra.mrb[0].mxu0 %v2501
        %v2973 = vpop.f32.mrb[0].mxu0
        %v2974 = vadd.f32 %v2813, %v2973
        %v2975 = vpop.f32.mrb[0].mxu0
        %v2976 = vpop.f32.mrb[0].mxu0
        %v2977 = vadd.f32 %v2816, %v2976
        %v2978 = vpop.f32.mrb[0].mxu0
        %2979 = vmatprep.mubr.bf16.mxu0 0
        %2980 = vmatmul.mubr.bf16.gmra.mrb[0].mxu0 %v2502
        %v2981 = vpop.f32.mrb[0].mxu0
        %v2982 = vadd.f32 %v2821, %v2981
        %v2983 = vpop.f32.mrb[0].mxu0
        %v2984 = vpop.f32.mrb[0].mxu0
        %v2985 = vadd.f32 %v2824, %v2984
        %v2986 = vpop.f32.mrb[0].mxu0
        %2987 = vmatprep.mubr.bf16.mxu0 0
        %2988 = vmatmul.mubr.bf16.gmra.mrb[0].mxu0 %v2503
        %v2989 = vpop.f32.mrb[0].mxu0
        %v2990 = vadd.f32 %v2829, %v2989
        %v2991 = vpop.f32.mrb[0].mxu0
        %v2992 = vpop.f32.mrb[0].mxu0
        %v2993 = vadd.f32 %v2832, %v2992
        %v2994 = vpop.f32.mrb[0].mxu0
        %2995 = vmatprep.mubr.bf16.mxu0 0
        %2996 = vmatmul.mubr.bf16.gmra.mrb[0].mxu0 %v2504
        %v2997 = vpop.f32.mrb[0].mxu0
        %v2998 = vadd.f32 %v2837, %v2997
        %v2999 = vpop.f32.mrb[0].mxu0
        %v3000 = vpop.f32.mrb[0].mxu0
        %v3001 = vadd.f32 %v2840, %v3000
        %v3002 = vpop.f32.mrb[0].mxu0
        %3003 = vmatprep.mubr.bf16.mxu0 0
        %3004 = vmatmul.mubr.bf16.gmra.mrb[0].mxu0 %v2505
        %v3005 = vpop.f32.mrb[0].mxu0
        %v3006 = vadd.f32 %v2845, %v3005
        %v3007 = vpop.f32.mrb[0].mxu0
        %v3008 = vpop.f32.mrb[0].mxu0
        %v3009 = vadd.f32 %v2848, %v3008
        %v3010 = vpop.f32.mrb[0].mxu0
        %3011 = vmatprep.mubr.bf16.mxu0 0
        %3012 = vmatmul.mubr.bf16.gmra.mrb[0].mxu0 %v2506
        %v3013 = vpop.f32.mrb[0].mxu0
        %v3014 = vadd.f32 %v2853, %v3013
        %v3015 = vpop.f32.mrb[0].mxu0
        %v3016 = vpop.f32.mrb[0].mxu0
        %v3017 = vadd.f32 %v2856, %v3016
        %v3018 = vpop.f32.mrb[0].mxu0
        %3019 = vmatprep.mubr.bf16.mxu0 0
        %3020 = vmatmul.mubr.bf16.gmra.mrb[0].mxu0 %v2507
        %v3021 = vpop.f32.mrb[0].mxu0
        %v3022 = vadd.f32 %v2861, %v3021
        %v3023 = vpop.f32.mrb[0].mxu0
        %v3024 = vpop.f32.mrb[0].mxu0
        %v3025 = vadd.f32 %v2864, %v3024
        %v3026 = vpop.f32.mrb[0].mxu0
        %3027 = vdwg.mxu0
        %v3028 = vpack.c.bf16 %v2437, %v2437
        %v3029 = vpack.c.bf16 %v2440, %v2440
        %v3030 = vpack.c.bf16 %v2443, %v2443
        %v3031 = vpack.c.bf16 %v2446, %v2446
        %v3032 = vpack.c.bf16 %v2449, %v2449
        %v3033 = vpack.c.bf16 %v2452, %v2452
        %v3034 = vpack.c.bf16 %v2455, %v2455
        %v3035 = vpack.c.bf16 %v2458, %v2458
        %v3036 = vpack.c.bf16 %v2461, %v2461
        %v3037 = vpack.c.bf16 %v2464, %v2464
        %v3038 = vpack.c.bf16 %v2467, %v2467
        %v3039 = vpack.c.bf16 %v2470, %v2470
        %v3040 = vpack.c.bf16 %v2473, %v2473
        %v3041 = vpack.c.bf16 %v2476, %v2476
        %v3042 = vpack.c.bf16 %v2479, %v2479
        %v3043 = vpack.c.bf16 %v2482, %v2482
        %v3044 = vpack.c.bf16 %v2485, %v2485
        %v3045 = vpack.c.bf16 %v2488, %v2488
        %v3047 = vshrl.u32 %v2490, 16
        %v3049 = vshll.u32 %v2490, 16
        %v3051 = vrot.slane %v3049, 1
        %v3052 = vor.u32 %v3047, %v3051
        %v3054 = vshll.u32 %v3028, 16
        %v3056 = vrot.slane %v3054, 1
        %v3057 = vsel %vm889, %v3052, %v3056
        %v3059 = vshrl.u32 %v2491, 16
        %v3061 = vshll.u32 %v2491, 16
        %v3063 = vrot.slane %v3061, 1
        %v3064 = vor.u32 %v3059, %v3063
        %v3066 = vshll.u32 %v3029, 16
        %v3068 = vrot.slane %v3066, 1
        %v3069 = vsel %vm889, %v3064, %v3068
        %v3071 = vshrl.u32 %v2492, 16
        %v3073 = vshll.u32 %v2492, 16
        %v3075 = vrot.slane %v3073, 1
        %v3076 = vor.u32 %v3071, %v3075
        %v3078 = vshll.u32 %v3030, 16
        %v3080 = vrot.slane %v3078, 1
        %v3081 = vsel %vm889, %v3076, %v3080
        %v3083 = vshrl.u32 %v2493, 16
        %v3085 = vshll.u32 %v2493, 16
        %v3087 = vrot.slane %v3085, 1
        %v3088 = vor.u32 %v3083, %v3087
        %v3090 = vshll.u32 %v3031, 16
        %v3092 = vrot.slane %v3090, 1
        %v3093 = vsel %vm889, %v3088, %v3092
        %v3095 = vshrl.u32 %v2494, 16
        %v3097 = vshll.u32 %v2494, 16
        %v3099 = vrot.slane %v3097, 1
        %v3100 = vor.u32 %v3095, %v3099
        %v3102 = vshll.u32 %v3032, 16
        %v3104 = vrot.slane %v3102, 1
        %v3105 = vsel %vm889, %v3100, %v3104
        %v3107 = vshrl.u32 %v2495, 16
        %v3109 = vshll.u32 %v2495, 16
        %v3111 = vrot.slane %v3109, 1
        %v3112 = vor.u32 %v3107, %v3111
        %v3114 = vshll.u32 %v3033, 16
        %v3116 = vrot.slane %v3114, 1
        %v3117 = vsel %vm889, %v3112, %v3116
        %v3119 = vshrl.u32 %v2496, 16
        %v3121 = vshll.u32 %v2496, 16
        %v3123 = vrot.slane %v3121, 1
        %v3124 = vor.u32 %v3119, %v3123
        %v3126 = vshll.u32 %v3034, 16
        %v3128 = vrot.slane %v3126, 1
        %v3129 = vsel %vm889, %v3124, %v3128
        %v3131 = vshrl.u32 %v2497, 16
        %v3133 = vshll.u32 %v2497, 16
        %v3135 = vrot.slane %v3133, 1
        %v3136 = vor.u32 %v3131, %v3135
        %v3138 = vshll.u32 %v3035, 16
        %v3140 = vrot.slane %v3138, 1
        %v3141 = vsel %vm889, %v3136, %v3140
        %v3143 = vshrl.u32 %v2498, 16
        %v3145 = vshll.u32 %v2498, 16
        %v3147 = vrot.slane %v3145, 1
        %v3148 = vor.u32 %v3143, %v3147
        %v3150 = vshll.u32 %v3036, 16
        %v3152 = vrot.slane %v3150, 1
        %v3153 = vsel %vm889, %v3148, %v3152
        %v3155 = vshrl.u32 %v2499, 16
        %v3157 = vshll.u32 %v2499, 16
        %v3159 = vrot.slane %v3157, 1
        %v3160 = vor.u32 %v3155, %v3159
        %v3162 = vshll.u32 %v3037, 16
        %v3164 = vrot.slane %v3162, 1
        %v3165 = vsel %vm889, %v3160, %v3164
        %v3167 = vshrl.u32 %v2500, 16
        %v3169 = vshll.u32 %v2500, 16
        %v3171 = vrot.slane %v3169, 1
        %v3172 = vor.u32 %v3167, %v3171
        %v3174 = vshll.u32 %v3038, 16
        %v3176 = vrot.slane %v3174, 1
        %v3177 = vsel %vm889, %v3172, %v3176
        %v3179 = vshrl.u32 %v2501, 16
        %v3181 = vshll.u32 %v2501, 16
        %v3183 = vrot.slane %v3181, 1
        %v3184 = vor.u32 %v3179, %v3183
        %v3186 = vshll.u32 %v3039, 16
        %v3188 = vrot.slane %v3186, 1
        %v3189 = vsel %vm889, %v3184, %v3188
        %v3191 = vshrl.u32 %v2502, 16
        %v3193 = vshll.u32 %v2502, 16
        %v3195 = vrot.slane %v3193, 1
        %v3196 = vor.u32 %v3191, %v3195
        %v3198 = vshll.u32 %v3040, 16
        %v3200 = vrot.slane %v3198, 1
        %v3201 = vsel %vm889, %v3196, %v3200
        %v3203 = vshrl.u32 %v2503, 16
        %v3205 = vshll.u32 %v2503, 16
        %v3207 = vrot.slane %v3205, 1
        %v3208 = vor.u32 %v3203, %v3207
        %v3210 = vshll.u32 %v3041, 16
        %v3212 = vrot.slane %v3210, 1
        %v3213 = vsel %vm889, %v3208, %v3212
        %v3215 = vshrl.u32 %v2504, 16
        %v3217 = vshll.u32 %v2504, 16
        %v3219 = vrot.slane %v3217, 1
        %v3220 = vor.u32 %v3215, %v3219
        %v3222 = vshll.u32 %v3042, 16
        %v3224 = vrot.slane %v3222, 1
        %v3225 = vsel %vm889, %v3220, %v3224
        %v3227 = vshrl.u32 %v2505, 16
        %v3229 = vshll.u32 %v2505, 16
        %v3231 = vrot.slane %v3229, 1
        %v3232 = vor.u32 %v3227, %v3231
        %v3234 = vshll.u32 %v3043, 16
        %v3236 = vrot.slane %v3234, 1
        %v3237 = vsel %vm889, %v3232, %v3236
        %v3239 = vshrl.u32 %v2506, 16
        %v3241 = vshll.u32 %v2506, 16
        %v3243 = vrot.slane %v3241, 1
        %v3244 = vor.u32 %v3239, %v3243
        %v3246 = vshll.u32 %v3044, 16
        %v3248 = vrot.slane %v3246, 1
        %v3249 = vsel %vm889, %v3244, %v3248
        %v3251 = vshrl.u32 %v2507, 16
        %v3253 = vshll.u32 %v2507, 16
        %v3255 = vrot.slane %v3253, 1
        %v3256 = vor.u32 %v3251, %v3255
        %v3258 = vshll.u32 %v3045, 16
        %v3260 = vrot.slane %v3258, 1
        %v3261 = vsel %vm889, %v3256, %v3260
        %s3280 = scalar_lea.vmem %s2, 192
        %v3281 = vld [vmem:[%s3280] sm:$0xf]
        %v3282 = vld [vmem:[%s3280 + $0x4] sm:$0xf]
        %v3283 = vld [vmem:[%s3280 + $0x8] sm:$0xf]
        %v3284 = vld [vmem:[%s3280 + $0xc] sm:$0xf]
        %v3285 = vld [vmem:[%s3280 + $0x10] sm:$0xf]
        %v3286 = vld [vmem:[%s3280 + $0x14] sm:$0xf]
        %v3287 = vld [vmem:[%s3280 + $0x18] sm:$0xf]
        %v3288 = vld [vmem:[%s3280 + $0x1c] sm:$0xf]
        %v3289 = vld [vmem:[%s3280 + $0x20] sm:$0xf]
        %v3290 = vld [vmem:[%s3280 + $0x24] sm:$0xf]
        %v3291 = vld [vmem:[%s3280 + $0x28] sm:$0xf]
        %v3292 = vld [vmem:[%s3280 + $0x2c] sm:$0xf]
        %v3293 = vld [vmem:[%s3280 + $0x30] sm:$0xf]
        %v3294 = vld [vmem:[%s3280 + $0x34] sm:$0xf]
        %v3295 = vld [vmem:[%s3280 + $0x38] sm:$0xf]
        %v3296 = vld [vmem:[%s3280 + $0x3c] sm:$0xf]
        %v3297 = vld [vmem:[%s3280 + $0x40] sm:$0xf]
        %v3298 = vld [vmem:[%s3280 + $0x44] sm:$0xf]
        %v3299 = vld [vmem:[%s3280 + $0x48] sm:$0xf]
        %v3300 = vld [vmem:[%s3280 + $0x4c] sm:$0xf]
        %v3301 = vld [vmem:[%s3280 + $0x50] sm:$0xf]
        %v3302 = vld [vmem:[%s3280 + $0x54] sm:$0xf]
        %v3303 = vld [vmem:[%s3280 + $0x58] sm:$0xf]
        %v3304 = vld [vmem:[%s3280 + $0x5c] sm:$0xf]
        %v3305 = vld [vmem:[%s3280 + $0x60] sm:$0xf]
        %v3306 = vld [vmem:[%s3280 + $0x64] sm:$0xf]
        %v3307 = vld [vmem:[%s3280 + $0x68] sm:$0xf]
        %v3308 = vld [vmem:[%s3280 + $0x6c] sm:$0xf]
        %v3309 = vld [vmem:[%s3280 + $0x70] sm:$0xf]
        %v3310 = vld [vmem:[%s3280 + $0x74] sm:$0xf]
        %v3311 = vld [vmem:[%s3280 + $0x78] sm:$0xf]
        %v3312 = vld [vmem:[%s3280 + $0x7c] sm:$0xf]
        %v3313 = vld [vmem:[%s3280 + $0x80] sm:$0xf]
        %v3314 = vld [vmem:[%s3280 + $0x84] sm:$0xf]
        %v3315 = vld [vmem:[%s3280 + $0x88] sm:$0xf]
        %v3316 = vld [vmem:[%s3280 + $0x8c] sm:$0xf]
        %v3317 = vld [vmem:[%s3280 + $0x90] sm:$0xf]
        %v3318 = vld [vmem:[%s3280 + $0x94] sm:$0xf]
        %v3319 = vld [vmem:[%s3280 + $0x98] sm:$0xf]
        %v3320 = vld [vmem:[%s3280 + $0x9c] sm:$0xf]
        %v3321 = vld [vmem:[%s3280 + $0xa0] sm:$0xf]
        %v3322 = vld [vmem:[%s3280 + $0xa4] sm:$0xf]
        %v3323 = vld [vmem:[%s3280 + $0xa8] sm:$0xf]
        %v3324 = vld [vmem:[%s3280 + $0xac] sm:$0xf]
        %v3325 = vld [vmem:[%s3280 + $0xb0] sm:$0xf]
        %v3326 = vld [vmem:[%s3280 + $0xb4] sm:$0xf]
        %v3327 = vld [vmem:[%s3280 + $0xb8] sm:$0xf]
        %v3328 = vld [vmem:[%s3280 + $0xbc] sm:$0xf]
        %v3377 = vunpack.c.l.b16 %v3281
        %v3378 = vunpack.c.l.b16 %v3282
        %v3379 = vunpack.c.l.b16 %v3283
        %v3380 = vunpack.c.l.b16 %v3284
        %v3381 = vunpack.c.l.b16 %v3285
        %v3382 = vunpack.c.l.b16 %v3286
        %v3383 = vunpack.c.l.b16 %v3287
        %v3384 = vunpack.c.l.b16 %v3288
        %v3385 = vunpack.c.l.b16 %v3289
        %v3386 = vunpack.c.l.b16 %v3290
        %v3387 = vunpack.c.l.b16 %v3291
        %v3388 = vunpack.c.l.b16 %v3292
        %v3389 = vunpack.c.l.b16 %v3293
        %v3390 = vunpack.c.l.b16 %v3294
        %v3391 = vunpack.c.l.b16 %v3295
        %v3392 = vunpack.c.l.b16 %v3296
        %v3393 = vunpack.c.l.b16 %v3297
        %v3394 = vunpack.c.l.b16 %v3298
        %v3395 = vunpack.c.l.b16 %v3299
        %v3396 = vunpack.c.l.b16 %v3300
        %v3397 = vunpack.c.l.b16 %v3301
        %v3398 = vunpack.c.l.b16 %v3302
        %v3399 = vunpack.c.l.b16 %v3303
        %v3400 = vunpack.c.l.b16 %v3304
        %v3401 = vunpack.c.l.b16 %v3305
        %v3402 = vunpack.c.l.b16 %v3306
        %v3403 = vunpack.c.l.b16 %v3307
        %v3404 = vunpack.c.l.b16 %v3308
        %v3405 = vunpack.c.l.b16 %v3309
        %v3406 = vunpack.c.l.b16 %v3310
        %v3407 = vunpack.c.l.b16 %v3311
        %v3408 = vunpack.c.l.b16 %v3312
        %v3409 = vunpack.c.l.b16 %v3313
        %v3410 = vunpack.c.l.b16 %v3314
        %v3411 = vunpack.c.l.b16 %v3315
        %v3412 = vunpack.c.l.b16 %v3316
        %v3413 = vunpack.c.l.b16 %v3317
        %v3414 = vunpack.c.l.b16 %v3318
        %v3415 = vunpack.c.l.b16 %v3319
        %v3416 = vunpack.c.l.b16 %v3320
        %v3417 = vunpack.c.l.b16 %v3321
        %v3418 = vunpack.c.l.b16 %v3322
        %v3419 = vunpack.c.l.b16 %v3323
        %v3420 = vunpack.c.l.b16 %v3324
        %v3421 = vunpack.c.l.b16 %v3325
        %v3422 = vunpack.c.l.b16 %v3326
        %v3423 = vunpack.c.l.b16 %v3327
        %v3424 = vunpack.c.l.b16 %v3328
        %v3425 = vpack.c.b16 %v3378, %v3377
        %v3426 = vpack.c.b16 %v3380, %v3379
        %v3427 = vpack.c.b16 %v3382, %v3381
        %v3428 = vpack.c.b16 %v3384, %v3383
        %v3429 = vpack.c.b16 %v3386, %v3385
        %v3430 = vpack.c.b16 %v3388, %v3387
        %v3431 = vpack.c.b16 %v3390, %v3389
        %v3432 = vpack.c.b16 %v3392, %v3391
        %v3433 = vpack.c.b16 %v3394, %v3393
        %v3434 = vpack.c.b16 %v3396, %v3395
        %v3435 = vpack.c.b16 %v3398, %v3397
        %v3436 = vpack.c.b16 %v3400, %v3399
        %v3437 = vpack.c.b16 %v3402, %v3401
        %v3438 = vpack.c.b16 %v3404, %v3403
        %v3439 = vpack.c.b16 %v3406, %v3405
        %v3440 = vpack.c.b16 %v3408, %v3407
        %v3441 = vpack.c.b16 %v3410, %v3409
        %v3442 = vpack.c.b16 %v3412, %v3411
        %v3443 = vpack.c.b16 %v3414, %v3413
        %v3444 = vpack.c.b16 %v3416, %v3415
        %v3445 = vpack.c.b16 %v3418, %v3417
        %v3446 = vpack.c.b16 %v3420, %v3419
        %v3447 = vpack.c.b16 %v3422, %v3421
        %v3448 = vpack.c.b16 %v3424, %v3423
        %3473 = vmatprep.subr.bf16.mxu0 0
        %3474 = vmatpush1.bf16.msra.mxu0 %v3425
        %3475 = vmatprep.subr.bf16.mxu0 0
        %3476 = vmatpush1.bf16.msra.mxu0 %v3426
        %3477 = vmatprep.subr.bf16.mxu0 0
        %3478 = vmatpush1.bf16.msra.mxu0 %v3427
        %3479 = vmatprep.subr.bf16.mxu0 0
        %3480 = vmatpush1.bf16.msra.mxu0 %v3428
        %3481 = vmatprep.subr.bf16.mxu0 0
        %3482 = vmatpush1.bf16.msra.mxu0 %v3429
        %3483 = vmatprep.subr.bf16.mxu0 0
        %3484 = vmatpush1.bf16.msra.mxu0 %v3430
        %3485 = vmatprep.subr.bf16.mxu0 0
        %3486 = vmatpush1.bf16.msra.mxu0 %v3431
        %3487 = vmatprep.subr.bf16.mxu0 0
        %3488 = vmatpush1.bf16.msra.mxu0 %v3432
        %3489 = vmatprep.subr.bf16.mxu0 0
        %3490 = vmatpush1.bf16.msra.mxu0 %v3433
        %3491 = vmatprep.subr.bf16.mxu0 0
        %3492 = vmatpush1.bf16.msra.mxu0 %v3434
        %3493 = vmatprep.subr.bf16.mxu0 0
        %3494 = vmatpush1.bf16.msra.mxu0 %v3435
        %3495 = vmatprep.subr.bf16.mxu0 0
        %3496 = vmatpush1.bf16.msra.mxu0 %v3436
        %3497 = vmatprep.subr.bf16.mxu0 0
        %3498 = vmatpush1.bf16.msra.mxu0 %v3437
        %3499 = vmatprep.subr.bf16.mxu0 0
        %3500 = vmatpush1.bf16.msra.mxu0 %v3438
        %3501 = vmatprep.subr.bf16.mxu0 0
        %3502 = vmatpush1.bf16.msra.mxu0 %v3439
        %3503 = vmatprep.subr.bf16.mxu0 0
        %3504 = vmatpush1.bf16.msra.mxu0 %v3440
        %3505 = vmatprep.mubr.bf16.mxu0 %v3069
        %3506 = vmatmul.mubr.bf16.gmra.mrb[0].mxu0 %v3057
        %v3507 = vpop.f32.mrb[0].mxu0
        %v3508 = vadd.f32 0.0, %v3507
        %v3509 = vpop.f32.mrb[0].mxu0
        %v3510 = vpop.f32.mrb[0].mxu0
        %v3511 = vadd.f32 0.0, %v3510
        %v3512 = vpop.f32.mrb[0].mxu0
        %3513 = vmatprep.mubr.bf16.mxu0 %v3081
        %3514 = vmatmul.mubr.bf16.gmra.mrb[0].mxu0 %v3069
        %v3515 = vpop.f32.mrb[0].mxu0
        %v3516 = vadd.f32 0.0, %v3515
        %v3517 = vpop.f32.mrb[0].mxu0
        %v3518 = vpop.f32.mrb[0].mxu0
        %v3519 = vadd.f32 0.0, %v3518
        %v3520 = vpop.f32.mrb[0].mxu0
        %3521 = vmatprep.mubr.bf16.mxu0 %v3093
        %3522 = vmatmul.mubr.bf16.gmra.mrb[0].mxu0 %v3081
        %v3523 = vpop.f32.mrb[0].mxu0
        %v3524 = vadd.f32 0.0, %v3523
        %v3525 = vpop.f32.mrb[0].mxu0
        %v3526 = vpop.f32.mrb[0].mxu0
        %v3527 = vadd.f32 0.0, %v3526
        %v3528 = vpop.f32.mrb[0].mxu0
        %3529 = vmatprep.mubr.bf16.mxu0 %v3105
        %3530 = vmatmul.mubr.bf16.gmra.mrb[0].mxu0 %v3093
        %v3531 = vpop.f32.mrb[0].mxu0
        %v3532 = vadd.f32 0.0, %v3531
        %v3533 = vpop.f32.mrb[0].mxu0
        %v3534 = vpop.f32.mrb[0].mxu0
        %v3535 = vadd.f32 0.0, %v3534
        %v3536 = vpop.f32.mrb[0].mxu0
        %3537 = vmatprep.mubr.bf16.mxu0 %v3117
        %3538 = vmatmul.mubr.bf16.gmra.mrb[0].mxu0 %v3105
        %v3539 = vpop.f32.mrb[0].mxu0
        %v3540 = vadd.f32 0.0, %v3539
        %v3541 = vpop.f32.mrb[0].mxu0
        %v3542 = vpop.f32.mrb[0].mxu0
        %v3543 = vadd.f32 0.0, %v3542
        %v3544 = vpop.f32.mrb[0].mxu0
        %3545 = vmatprep.mubr.bf16.mxu0 %v3129
        %3546 = vmatmul.mubr.bf16.gmra.mrb[0].mxu0 %v3117
        %v3547 = vpop.f32.mrb[0].mxu0
        %v3548 = vadd.f32 0.0, %v3547
        %v3549 = vpop.f32.mrb[0].mxu0
        %v3550 = vpop.f32.mrb[0].mxu0
        %v3551 = vadd.f32 0.0, %v3550
        %v3552 = vpop.f32.mrb[0].mxu0
        %3553 = vmatprep.mubr.bf16.mxu0 %v3141
        %3554 = vmatmul.mubr.bf16.gmra.mrb[0].mxu0 %v3129
        %v3555 = vpop.f32.mrb[0].mxu0
        %v3556 = vadd.f32 0.0, %v3555
        %v3557 = vpop.f32.mrb[0].mxu0
        %v3558 = vpop.f32.mrb[0].mxu0
        %v3559 = vadd.f32 0.0, %v3558
        %v3560 = vpop.f32.mrb[0].mxu0
        %3561 = vmatprep.mubr.bf16.mxu0 %v3153
        %3562 = vmatmul.mubr.bf16.gmra.mrb[0].mxu0 %v3141
        %v3563 = vpop.f32.mrb[0].mxu0
        %v3564 = vadd.f32 0.0, %v3563
        %v3565 = vpop.f32.mrb[0].mxu0
        %v3566 = vpop.f32.mrb[0].mxu0
        %v3567 = vadd.f32 0.0, %v3566
        %v3568 = vpop.f32.mrb[0].mxu0
        %3569 = vmatprep.mubr.bf16.mxu0 %v3165
        %3570 = vmatmul.mubr.bf16.gmra.mrb[0].mxu0 %v3153
        %v3571 = vpop.f32.mrb[0].mxu0
        %v3572 = vadd.f32 0.0, %v3571
        %v3573 = vpop.f32.mrb[0].mxu0
        %v3574 = vpop.f32.mrb[0].mxu0
        %v3575 = vadd.f32 0.0, %v3574
        %v3576 = vpop.f32.mrb[0].mxu0
        %3577 = vmatprep.mubr.bf16.mxu0 %v3177
        %3578 = vmatmul.mubr.bf16.gmra.mrb[0].mxu0 %v3165
        %v3579 = vpop.f32.mrb[0].mxu0
        %v3580 = vadd.f32 0.0, %v3579
        %v3581 = vpop.f32.mrb[0].mxu0
        %v3582 = vpop.f32.mrb[0].mxu0
        %v3583 = vadd.f32 0.0, %v3582
        %v3584 = vpop.f32.mrb[0].mxu0
        %3585 = vmatprep.mubr.bf16.mxu0 %v3189
        %3586 = vmatmul.mubr.bf16.gmra.mrb[0].mxu0 %v3177
        %v3587 = vpop.f32.mrb[0].mxu0
        %v3588 = vadd.f32 0.0, %v3587
        %v3589 = vpop.f32.mrb[0].mxu0
        %v3590 = vpop.f32.mrb[0].mxu0
        %v3591 = vadd.f32 0.0, %v3590
        %v3592 = vpop.f32.mrb[0].mxu0
        %3593 = vmatprep.mubr.bf16.mxu0 %v3201
        %3594 = vmatmul.mubr.bf16.gmra.mrb[0].mxu0 %v3189
        %v3595 = vpop.f32.mrb[0].mxu0
        %v3596 = vadd.f32 0.0, %v3595
        %v3597 = vpop.f32.mrb[0].mxu0
        %v3598 = vpop.f32.mrb[0].mxu0
        %v3599 = vadd.f32 0.0, %v3598
        %v3600 = vpop.f32.mrb[0].mxu0
        %3601 = vmatprep.mubr.bf16.mxu0 %v3213
        %3602 = vmatmul.mubr.bf16.gmra.mrb[0].mxu0 %v3201
        %v3603 = vpop.f32.mrb[0].mxu0
        %v3604 = vadd.f32 0.0, %v3603
        %v3605 = vpop.f32.mrb[0].mxu0
        %v3606 = vpop.f32.mrb[0].mxu0
        %v3607 = vadd.f32 0.0, %v3606
        %v3608 = vpop.f32.mrb[0].mxu0
        %3609 = vmatprep.mubr.bf16.mxu0 %v3225
        %3610 = vmatmul.mubr.bf16.gmra.mrb[0].mxu0 %v3213
        %v3611 = vpop.f32.mrb[0].mxu0
        %v3612 = vadd.f32 0.0, %v3611
        %v3613 = vpop.f32.mrb[0].mxu0
        %v3614 = vpop.f32.mrb[0].mxu0
        %v3615 = vadd.f32 0.0, %v3614
        %v3616 = vpop.f32.mrb[0].mxu0
        %3617 = vmatprep.mubr.bf16.mxu0 %v3237
        %3618 = vmatmul.mubr.bf16.gmra.mrb[0].mxu0 %v3225
        %v3619 = vpop.f32.mrb[0].mxu0
        %v3620 = vadd.f32 0.0, %v3619
        %v3621 = vpop.f32.mrb[0].mxu0
        %v3622 = vpop.f32.mrb[0].mxu0
        %v3623 = vadd.f32 0.0, %v3622
        %v3624 = vpop.f32.mrb[0].mxu0
        %3625 = vmatprep.mubr.bf16.mxu0 %v3249
        %3626 = vmatmul.mubr.bf16.gmra.mrb[0].mxu0 %v3237
        %v3627 = vpop.f32.mrb[0].mxu0
        %v3628 = vadd.f32 0.0, %v3627
        %v3629 = vpop.f32.mrb[0].mxu0
        %v3630 = vpop.f32.mrb[0].mxu0
        %v3631 = vadd.f32 0.0, %v3630
        %v3632 = vpop.f32.mrb[0].mxu0
        %3633 = vdwg.mxu0
        %3634 = vmatprep.subr.bf16.mxu0 0
        %3635 = vmatpush1.bf16.msra.mxu0 %v3441
        %3636 = vmatprep.subr.bf16.mxu0 0
        %3637 = vmatpush1.bf16.msra.mxu0 %v3442
        %3638 = vmatprep.subr.bf16.mxu0 0
        %3639 = vmatpush1.bf16.msra.mxu0 %v3443
        %3640 = vmatprep.subr.bf16.mxu0 0
        %3641 = vmatpush1.bf16.msra.mxu0 %v3444
        %3642 = vmatprep.subr.bf16.mxu0 0
        %3643 = vmatpush1.bf16.msra.mxu0 %v3445
        %3644 = vmatprep.subr.bf16.mxu0 0
        %3645 = vmatpush1.bf16.msra.mxu0 %v3446
        %3646 = vmatprep.subr.bf16.mxu0 0
        %3647 = vmatpush1.bf16.msra.mxu0 %v3447
        %3648 = vmatprep.subr.bf16.mxu0 0
        %3649 = vmatpush1.bf16.msra.mxu0 %v3448
        %3650 = vmatprep.subr.bf16.mxu0 0
        %3651 = vmatpush1.bf16.msra.mxu0 0
        %3652 = vmatprep.subr.bf16.mxu0 0
        %3653 = vmatpush1.bf16.msra.mxu0 0
        %3654 = vmatprep.subr.bf16.mxu0 0
        %3655 = vmatpush1.bf16.msra.mxu0 0
        %3656 = vmatprep.subr.bf16.mxu0 0
        %3657 = vmatpush1.bf16.msra.mxu0 0
        %3658 = vmatprep.subr.bf16.mxu0 0
        %3659 = vmatpush1.bf16.msra.mxu0 0
        %3660 = vmatprep.subr.bf16.mxu0 0
        %3661 = vmatpush1.bf16.msra.mxu0 0
        %3662 = vmatprep.subr.bf16.mxu0 0
        %3663 = vmatpush1.bf16.msra.mxu0 0
        %3664 = vmatprep.subr.bf16.mxu0 0
        %3665 = vmatpush1.bf16.msra.mxu0 0
        %3666 = vmatprep.mubr.bf16.mxu0 0
        %3667 = vmatmul.mubr.bf16.gmra.mrb[0].mxu0 %v3081
        %v3668 = vpop.f32.mrb[0].mxu0
        %v3669 = vadd.f32 %v3508, %v3668
        %v3670 = vpop.f32.mrb[0].mxu0
        %v3671 = vpop.f32.mrb[0].mxu0
        %v3672 = vadd.f32 %v3511, %v3671
        %v3673 = vpop.f32.mrb[0].mxu0
        %3674 = vmatprep.mubr.bf16.mxu0 0
        %3675 = vmatmul.mubr.bf16.gmra.mrb[0].mxu0 %v3093
        %v3676 = vpop.f32.mrb[0].mxu0
        %v3677 = vadd.f32 %v3516, %v3676
        %v3678 = vpop.f32.mrb[0].mxu0
        %v3679 = vpop.f32.mrb[0].mxu0
        %v3680 = vadd.f32 %v3519, %v3679
        %v3681 = vpop.f32.mrb[0].mxu0
        %3682 = vmatprep.mubr.bf16.mxu0 0
        %3683 = vmatmul.mubr.bf16.gmra.mrb[0].mxu0 %v3105
        %v3684 = vpop.f32.mrb[0].mxu0
        %v3685 = vadd.f32 %v3524, %v3684
        %v3686 = vpop.f32.mrb[0].mxu0
        %v3687 = vpop.f32.mrb[0].mxu0
        %v3688 = vadd.f32 %v3527, %v3687
        %v3689 = vpop.f32.mrb[0].mxu0
        %3690 = vmatprep.mubr.bf16.mxu0 0
        %3691 = vmatmul.mubr.bf16.gmra.mrb[0].mxu0 %v3117
        %v3692 = vpop.f32.mrb[0].mxu0
        %v3693 = vadd.f32 %v3532, %v3692
        %v3694 = vpop.f32.mrb[0].mxu0
        %v3695 = vpop.f32.mrb[0].mxu0
        %v3696 = vadd.f32 %v3535, %v3695
        %v3697 = vpop.f32.mrb[0].mxu0
        %3698 = vmatprep.mubr.bf16.mxu0 0
        %3699 = vmatmul.mubr.bf16.gmra.mrb[0].mxu0 %v3129
        %v3700 = vpop.f32.mrb[0].mxu0
        %v3701 = vadd.f32 %v3540, %v3700
        %v3702 = vpop.f32.mrb[0].mxu0
        %v3703 = vpop.f32.mrb[0].mxu0
        %v3704 = vadd.f32 %v3543, %v3703
        %v3705 = vpop.f32.mrb[0].mxu0
        %3706 = vmatprep.mubr.bf16.mxu0 0
        %3707 = vmatmul.mubr.bf16.gmra.mrb[0].mxu0 %v3141
        %v3708 = vpop.f32.mrb[0].mxu0
        %v3709 = vadd.f32 %v3548, %v3708
        %v3710 = vpop.f32.mrb[0].mxu0
        %v3711 = vpop.f32.mrb[0].mxu0
        %v3712 = vadd.f32 %v3551, %v3711
        %v3713 = vpop.f32.mrb[0].mxu0
        %3714 = vmatprep.mubr.bf16.mxu0 0
        %3715 = vmatmul.mubr.bf16.gmra.mrb[0].mxu0 %v3153
        %v3716 = vpop.f32.mrb[0].mxu0
        %v3717 = vadd.f32 %v3556, %v3716
        %v3718 = vpop.f32.mrb[0].mxu0
        %v3719 = vpop.f32.mrb[0].mxu0
        %v3720 = vadd.f32 %v3559, %v3719
        %v3721 = vpop.f32.mrb[0].mxu0
        %3722 = vmatprep.mubr.bf16.mxu0 0
        %3723 = vmatmul.mubr.bf16.gmra.mrb[0].mxu0 %v3165
        %v3724 = vpop.f32.mrb[0].mxu0
        %v3725 = vadd.f32 %v3564, %v3724
        %v3726 = vpop.f32.mrb[0].mxu0
        %v3727 = vpop.f32.mrb[0].mxu0
        %v3728 = vadd.f32 %v3567, %v3727
        %v3729 = vpop.f32.mrb[0].mxu0
        %3730 = vmatprep.mubr.bf16.mxu0 0
        %3731 = vmatmul.mubr.bf16.gmra.mrb[0].mxu0 %v3177
        %v3732 = vpop.f32.mrb[0].mxu0
        %v3733 = vadd.f32 %v3572, %v3732
        %v3734 = vpop.f32.mrb[0].mxu0
        %v3735 = vpop.f32.mrb[0].mxu0
        %v3736 = vadd.f32 %v3575, %v3735
        %v3737 = vpop.f32.mrb[0].mxu0
        %3738 = vmatprep.mubr.bf16.mxu0 0
        %3739 = vmatmul.mubr.bf16.gmra.mrb[0].mxu0 %v3189
        %v3740 = vpop.f32.mrb[0].mxu0
        %v3741 = vadd.f32 %v3580, %v3740
        %v3742 = vpop.f32.mrb[0].mxu0
        %v3743 = vpop.f32.mrb[0].mxu0
        %v3744 = vadd.f32 %v3583, %v3743
        %v3745 = vpop.f32.mrb[0].mxu0
        %3746 = vmatprep.mubr.bf16.mxu0 0
        %3747 = vmatmul.mubr.bf16.gmra.mrb[0].mxu0 %v3201
        %v3748 = vpop.f32.mrb[0].mxu0
        %v3749 = vadd.f32 %v3588, %v3748
        %v3750 = vpop.f32.mrb[0].mxu0
        %v3751 = vpop.f32.mrb[0].mxu0
        %v3752 = vadd.f32 %v3591, %v3751
        %v3753 = vpop.f32.mrb[0].mxu0
        %3754 = vmatprep.mubr.bf16.mxu0 0
        %3755 = vmatmul.mubr.bf16.gmra.mrb[0].mxu0 %v3213
        %v3756 = vpop.f32.mrb[0].mxu0
        %v3757 = vadd.f32 %v3596, %v3756
        %v3758 = vpop.f32.mrb[0].mxu0
        %v3759 = vpop.f32.mrb[0].mxu0
        %v3760 = vadd.f32 %v3599, %v3759
        %v3761 = vpop.f32.mrb[0].mxu0
        %3762 = vmatprep.mubr.bf16.mxu0 0
        %3763 = vmatmul.mubr.bf16.gmra.mrb[0].mxu0 %v3225
        %v3764 = vpop.f32.mrb[0].mxu0
        %v3765 = vadd.f32 %v3604, %v3764
        %v3766 = vpop.f32.mrb[0].mxu0
        %v3767 = vpop.f32.mrb[0].mxu0
        %v3768 = vadd.f32 %v3607, %v3767
        %v3769 = vpop.f32.mrb[0].mxu0
        %3770 = vmatprep.mubr.bf16.mxu0 0
        %3771 = vmatmul.mubr.bf16.gmra.mrb[0].mxu0 %v3237
        %v3772 = vpop.f32.mrb[0].mxu0
        %v3773 = vadd.f32 %v3612, %v3772
        %v3774 = vpop.f32.mrb[0].mxu0
        %v3775 = vpop.f32.mrb[0].mxu0
        %v3776 = vadd.f32 %v3615, %v3775
        %v3777 = vpop.f32.mrb[0].mxu0
        %3778 = vmatprep.mubr.bf16.mxu0 0
        %3779 = vmatmul.mubr.bf16.gmra.mrb[0].mxu0 %v3249
        %v3780 = vpop.f32.mrb[0].mxu0
        %v3781 = vadd.f32 %v3620, %v3780
        %v3782 = vpop.f32.mrb[0].mxu0
        %v3783 = vpop.f32.mrb[0].mxu0
        %v3784 = vadd.f32 %v3623, %v3783
        %v3785 = vpop.f32.mrb[0].mxu0
        %3786 = vmatprep.mubr.bf16.mxu0 0
        %3787 = vmatmul.mubr.bf16.gmra.mrb[0].mxu0 %v3261
        %v3788 = vpop.f32.mrb[0].mxu0
        %v3789 = vadd.f32 %v3628, %v3788
        %v3790 = vpop.f32.mrb[0].mxu0
        %v3791 = vpop.f32.mrb[0].mxu0
        %v3792 = vadd.f32 %v3631, %v3791
        %v3793 = vpop.f32.mrb[0].mxu0
        %3794 = vdwg.mxu0
        %v3795 = vadd.f32 %v2902, %v3669
        %v3796 = vadd.f32 %v2905, %v3672
        %v3797 = vadd.f32 %v2910, %v3677
        %v3798 = vadd.f32 %v2913, %v3680
        %v3799 = vadd.f32 %v2918, %v3685
        %v3800 = vadd.f32 %v2921, %v3688
        %v3801 = vadd.f32 %v2926, %v3693
        %v3802 = vadd.f32 %v2929, %v3696
        %v3803 = vadd.f32 %v2934, %v3701
        %v3804 = vadd.f32 %v2937, %v3704
        %v3805 = vadd.f32 %v2942, %v3709
        %v3806 = vadd.f32 %v2945, %v3712
        %v3807 = vadd.f32 %v2950, %v3717
        %v3808 = vadd.f32 %v2953, %v3720
        %v3809 = vadd.f32 %v2958, %v3725
        %v3810 = vadd.f32 %v2961, %v3728
        %v3811 = vadd.f32 %v2966, %v3733
        %v3812 = vadd.f32 %v2969, %v3736
        %v3813 = vadd.f32 %v2974, %v3741
        %v3814 = vadd.f32 %v2977, %v3744
        %v3815 = vadd.f32 %v2982, %v3749
        %v3816 = vadd.f32 %v2985, %v3752
        %v3817 = vadd.f32 %v2990, %v3757
        %v3818 = vadd.f32 %v2993, %v3760
        %v3819 = vadd.f32 %v2998, %v3765
        %v3820 = vadd.f32 %v3001, %v3768
        %v3821 = vadd.f32 %v3006, %v3773
        %v3822 = vadd.f32 %v3009, %v3776
        %v3823 = vadd.f32 %v3014, %v3781
        %v3824 = vadd.f32 %v3017, %v3784
        %v3825 = vadd.f32 %v3022, %v3789
        %v3826 = vadd.f32 %v3025, %v3792
        %v3863 = vrot.slane %v2490, 1
        %v3864 = vrot.slane %v3028, 1
        %v3865 = vsel %vm1707, %v3863, %v3864
        %v3866 = vrot.slane %v2491, 1
        %v3867 = vrot.slane %v3029, 1
        %v3868 = vsel %vm1707, %v3866, %v3867
        %v3869 = vrot.slane %v2492, 1
        %v3870 = vrot.slane %v3030, 1
        %v3871 = vsel %vm1707, %v3869, %v3870
        %v3872 = vrot.slane %v2493, 1
        %v3873 = vrot.slane %v3031, 1
        %v3874 = vsel %vm1707, %v3872, %v3873
        %v3875 = vrot.slane %v2494, 1
        %v3876 = vrot.slane %v3032, 1
        %v3877 = vsel %vm1707, %v3875, %v3876
        %v3878 = vrot.slane %v2495, 1
        %v3879 = vrot.slane %v3033, 1
        %v3880 = vsel %vm1707, %v3878, %v3879
        %v3881 = vrot.slane %v2496, 1
        %v3882 = vrot.slane %v3034, 1
        %v3883 = vsel %vm1707, %v3881, %v3882
        %v3884 = vrot.slane %v2497, 1
        %v3885 = vrot.slane %v3035, 1
        %v3886 = vsel %vm1707, %v3884, %v3885
        %v3887 = vrot.slane %v2498, 1
        %v3888 = vrot.slane %v3036, 1
        %v3889 = vsel %vm1707, %v3887, %v3888
        %v3890 = vrot.slane %v2499, 1
        %v3891 = vrot.slane %v3037, 1
        %v3892 = vsel %vm1707, %v3890, %v3891
        %v3893 = vrot.slane %v2500, 1
        %v3894 = vrot.slane %v3038, 1
        %v3895 = vsel %vm1707, %v3893, %v3894
        %v3896 = vrot.slane %v2501, 1
        %v3897 = vrot.slane %v3039, 1
        %v3898 = vsel %vm1707, %v3896, %v3897
        %v3899 = vrot.slane %v2502, 1
        %v3900 = vrot.slane %v3040, 1
        %v3901 = vsel %vm1707, %v3899, %v3900
        %v3902 = vrot.slane %v2503, 1
        %v3903 = vrot.slane %v3041, 1
        %v3904 = vsel %vm1707, %v3902, %v3903
        %v3905 = vrot.slane %v2504, 1
        %v3906 = vrot.slane %v3042, 1
        %v3907 = vsel %vm1707, %v3905, %v3906
        %v3908 = vrot.slane %v2505, 1
        %v3909 = vrot.slane %v3043, 1
        %v3910 = vsel %vm1707, %v3908, %v3909
        %v3911 = vrot.slane %v2506, 1
        %v3912 = vrot.slane %v3044, 1
        %v3913 = vsel %vm1707, %v3911, %v3912
        %v3914 = vrot.slane %v2507, 1
        %v3915 = vrot.slane %v3045, 1
        %v3916 = vsel %vm1707, %v3914, %v3915
        %s3935 = scalar_lea.vmem %s2, 384
        %v3936 = vld [vmem:[%s3935] sm:$0xf]
        %v3937 = vld [vmem:[%s3935 + $0x4] sm:$0xf]
        %v3938 = vld [vmem:[%s3935 + $0x8] sm:$0xf]
        %v3939 = vld [vmem:[%s3935 + $0xc] sm:$0xf]
        %v3940 = vld [vmem:[%s3935 + $0x10] sm:$0xf]
        %v3941 = vld [vmem:[%s3935 + $0x14] sm:$0xf]
        %v3942 = vld [vmem:[%s3935 + $0x18] sm:$0xf]
        %v3943 = vld [vmem:[%s3935 + $0x1c] sm:$0xf]
        %v3944 = vld [vmem:[%s3935 + $0x20] sm:$0xf]
        %v3945 = vld [vmem:[%s3935 + $0x24] sm:$0xf]
        %v3946 = vld [vmem:[%s3935 + $0x28] sm:$0xf]
        %v3947 = vld [vmem:[%s3935 + $0x2c] sm:$0xf]
        %v3948 = vld [vmem:[%s3935 + $0x30] sm:$0xf]
        %v3949 = vld [vmem:[%s3935 + $0x34] sm:$0xf]
        %v3950 = vld [vmem:[%s3935 + $0x38] sm:$0xf]
        %v3951 = vld [vmem:[%s3935 + $0x3c] sm:$0xf]
        %v3952 = vld [vmem:[%s3935 + $0x40] sm:$0xf]
        %v3953 = vld [vmem:[%s3935 + $0x44] sm:$0xf]
        %v3954 = vld [vmem:[%s3935 + $0x48] sm:$0xf]
        %v3955 = vld [vmem:[%s3935 + $0x4c] sm:$0xf]
        %v3956 = vld [vmem:[%s3935 + $0x50] sm:$0xf]
        %v3957 = vld [vmem:[%s3935 + $0x54] sm:$0xf]
        %v3958 = vld [vmem:[%s3935 + $0x58] sm:$0xf]
        %v3959 = vld [vmem:[%s3935 + $0x5c] sm:$0xf]
        %v3960 = vld [vmem:[%s3935 + $0x60] sm:$0xf]
        %v3961 = vld [vmem:[%s3935 + $0x64] sm:$0xf]
        %v3962 = vld [vmem:[%s3935 + $0x68] sm:$0xf]
        %v3963 = vld [vmem:[%s3935 + $0x6c] sm:$0xf]
        %v3964 = vld [vmem:[%s3935 + $0x70] sm:$0xf]
        %v3965 = vld [vmem:[%s3935 + $0x74] sm:$0xf]
        %v3966 = vld [vmem:[%s3935 + $0x78] sm:$0xf]
        %v3967 = vld [vmem:[%s3935 + $0x7c] sm:$0xf]
        %v3968 = vld [vmem:[%s3935 + $0x80] sm:$0xf]
        %v3969 = vld [vmem:[%s3935 + $0x84] sm:$0xf]
        %v3970 = vld [vmem:[%s3935 + $0x88] sm:$0xf]
        %v3971 = vld [vmem:[%s3935 + $0x8c] sm:$0xf]
        %v3972 = vld [vmem:[%s3935 + $0x90] sm:$0xf]
        %v3973 = vld [vmem:[%s3935 + $0x94] sm:$0xf]
        %v3974 = vld [vmem:[%s3935 + $0x98] sm:$0xf]
        %v3975 = vld [vmem:[%s3935 + $0x9c] sm:$0xf]
        %v3976 = vld [vmem:[%s3935 + $0xa0] sm:$0xf]
        %v3977 = vld [vmem:[%s3935 + $0xa4] sm:$0xf]
        %v3978 = vld [vmem:[%s3935 + $0xa8] sm:$0xf]
        %v3979 = vld [vmem:[%s3935 + $0xac] sm:$0xf]
        %v3980 = vld [vmem:[%s3935 + $0xb0] sm:$0xf]
        %v3981 = vld [vmem:[%s3935 + $0xb4] sm:$0xf]
        %v3982 = vld [vmem:[%s3935 + $0xb8] sm:$0xf]
        %v3983 = vld [vmem:[%s3935 + $0xbc] sm:$0xf]
        %v4032 = vunpack.c.l.b16 %v3936
        %v4033 = vunpack.c.l.b16 %v3937
        %v4034 = vunpack.c.l.b16 %v3938
        %v4035 = vunpack.c.l.b16 %v3939
        %v4036 = vunpack.c.l.b16 %v3940
        %v4037 = vunpack.c.l.b16 %v3941
        %v4038 = vunpack.c.l.b16 %v3942
        %v4039 = vunpack.c.l.b16 %v3943
        %v4040 = vunpack.c.l.b16 %v3944
        %v4041 = vunpack.c.l.b16 %v3945
        %v4042 = vunpack.c.l.b16 %v3946
        %v4043 = vunpack.c.l.b16 %v3947
        %v4044 = vunpack.c.l.b16 %v3948
        %v4045 = vunpack.c.l.b16 %v3949
        %v4046 = vunpack.c.l.b16 %v3950
        %v4047 = vunpack.c.l.b16 %v3951
        %v4048 = vunpack.c.l.b16 %v3952
        %v4049 = vunpack.c.l.b16 %v3953
        %v4050 = vunpack.c.l.b16 %v3954
        %v4051 = vunpack.c.l.b16 %v3955
        %v4052 = vunpack.c.l.b16 %v3956
        %v4053 = vunpack.c.l.b16 %v3957
        %v4054 = vunpack.c.l.b16 %v3958
        %v4055 = vunpack.c.l.b16 %v3959
        %v4056 = vunpack.c.l.b16 %v3960
        %v4057 = vunpack.c.l.b16 %v3961
        %v4058 = vunpack.c.l.b16 %v3962
        %v4059 = vunpack.c.l.b16 %v3963
        %v4060 = vunpack.c.l.b16 %v3964
        %v4061 = vunpack.c.l.b16 %v3965
        %v4062 = vunpack.c.l.b16 %v3966
        %v4063 = vunpack.c.l.b16 %v3967
        %v4064 = vunpack.c.l.b16 %v3968
        %v4065 = vunpack.c.l.b16 %v3969
        %v4066 = vunpack.c.l.b16 %v3970
        %v4067 = vunpack.c.l.b16 %v3971
        %v4068 = vunpack.c.l.b16 %v3972
        %v4069 = vunpack.c.l.b16 %v3973
        %v4070 = vunpack.c.l.b16 %v3974
        %v4071 = vunpack.c.l.b16 %v3975
        %v4072 = vunpack.c.l.b16 %v3976
        %v4073 = vunpack.c.l.b16 %v3977
        %v4074 = vunpack.c.l.b16 %v3978
        %v4075 = vunpack.c.l.b16 %v3979
        %v4076 = vunpack.c.l.b16 %v3980
        %v4077 = vunpack.c.l.b16 %v3981
        %v4078 = vunpack.c.l.b16 %v3982
        %v4079 = vunpack.c.l.b16 %v3983
        %v4080 = vpack.c.b16 %v4033, %v4032
        %v4081 = vpack.c.b16 %v4035, %v4034
        %v4082 = vpack.c.b16 %v4037, %v4036
        %v4083 = vpack.c.b16 %v4039, %v4038
        %v4084 = vpack.c.b16 %v4041, %v4040
        %v4085 = vpack.c.b16 %v4043, %v4042
        %v4086 = vpack.c.b16 %v4045, %v4044
        %v4087 = vpack.c.b16 %v4047, %v4046
        %v4088 = vpack.c.b16 %v4049, %v4048
        %v4089 = vpack.c.b16 %v4051, %v4050
        %v4090 = vpack.c.b16 %v4053, %v4052
        %v4091 = vpack.c.b16 %v4055, %v4054
        %v4092 = vpack.c.b16 %v4057, %v4056
        %v4093 = vpack.c.b16 %v4059, %v4058
        %v4094 = vpack.c.b16 %v4061, %v4060
        %v4095 = vpack.c.b16 %v4063, %v4062
        %v4096 = vpack.c.b16 %v4065, %v4064
        %v4097 = vpack.c.b16 %v4067, %v4066
        %v4098 = vpack.c.b16 %v4069, %v4068
        %v4099 = vpack.c.b16 %v4071, %v4070
        %v4100 = vpack.c.b16 %v4073, %v4072
        %v4101 = vpack.c.b16 %v4075, %v4074
        %v4102 = vpack.c.b16 %v4077, %v4076
        %v4103 = vpack.c.b16 %v4079, %v4078
        %4128 = vmatprep.subr.bf16.mxu0 0
        %4129 = vmatpush1.bf16.msra.mxu0 %v4080
        %4130 = vmatprep.subr.bf16.mxu0 0
        %4131 = vmatpush1.bf16.msra.mxu0 %v4081
        %4132 = vmatprep.subr.bf16.mxu0 0
        %4133 = vmatpush1.bf16.msra.mxu0 %v4082
        %4134 = vmatprep.subr.bf16.mxu0 0
        %4135 = vmatpush1.bf16.msra.mxu0 %v4083
        %4136 = vmatprep.subr.bf16.mxu0 0
        %4137 = vmatpush1.bf16.msra.mxu0 %v4084
        %4138 = vmatprep.subr.bf16.mxu0 0
        %4139 = vmatpush1.bf16.msra.mxu0 %v4085
        %4140 = vmatprep.subr.bf16.mxu0 0
        %4141 = vmatpush1.bf16.msra.mxu0 %v4086
        %4142 = vmatprep.subr.bf16.mxu0 0
        %4143 = vmatpush1.bf16.msra.mxu0 %v4087
        %4144 = vmatprep.subr.bf16.mxu0 0
        %4145 = vmatpush1.bf16.msra.mxu0 %v4088
        %4146 = vmatprep.subr.bf16.mxu0 0
        %4147 = vmatpush1.bf16.msra.mxu0 %v4089
        %4148 = vmatprep.subr.bf16.mxu0 0
        %4149 = vmatpush1.bf16.msra.mxu0 %v4090
        %4150 = vmatprep.subr.bf16.mxu0 0
        %4151 = vmatpush1.bf16.msra.mxu0 %v4091
        %4152 = vmatprep.subr.bf16.mxu0 0
        %4153 = vmatpush1.bf16.msra.mxu0 %v4092
        %4154 = vmatprep.subr.bf16.mxu0 0
        %4155 = vmatpush1.bf16.msra.mxu0 %v4093
        %4156 = vmatprep.subr.bf16.mxu0 0
        %4157 = vmatpush1.bf16.msra.mxu0 %v4094
        %4158 = vmatprep.subr.bf16.mxu0 0
        %4159 = vmatpush1.bf16.msra.mxu0 %v4095
        %4160 = vmatprep.mubr.bf16.mxu0 %v3868
        %4161 = vmatmul.mubr.bf16.gmra.mrb[0].mxu0 %v3865
        %v4162 = vpop.f32.mrb[0].mxu0
        %v4163 = vadd.f32 0.0, %v4162
        %v4164 = vpop.f32.mrb[0].mxu0
        %v4165 = vpop.f32.mrb[0].mxu0
        %v4166 = vadd.f32 0.0, %v4165
        %v4167 = vpop.f32.mrb[0].mxu0
        %4168 = vmatprep.mubr.bf16.mxu0 %v3871
        %4169 = vmatmul.mubr.bf16.gmra.mrb[0].mxu0 %v3868
        %v4170 = vpop.f32.mrb[0].mxu0
        %v4171 = vadd.f32 0.0, %v4170
        %v4172 = vpop.f32.mrb[0].mxu0
        %v4173 = vpop.f32.mrb[0].mxu0
        %v4174 = vadd.f32 0.0, %v4173
        %v4175 = vpop.f32.mrb[0].mxu0
        %4176 = vmatprep.mubr.bf16.mxu0 %v3874
        %4177 = vmatmul.mubr.bf16.gmra.mrb[0].mxu0 %v3871
        %v4178 = vpop.f32.mrb[0].mxu0
        %v4179 = vadd.f32 0.0, %v4178
        %v4180 = vpop.f32.mrb[0].mxu0
        %v4181 = vpop.f32.mrb[0].mxu0
        %v4182 = vadd.f32 0.0, %v4181
        %v4183 = vpop.f32.mrb[0].mxu0
        %4184 = vmatprep.mubr.bf16.mxu0 %v3877
        %4185 = vmatmul.mubr.bf16.gmra.mrb[0].mxu0 %v3874
        %v4186 = vpop.f32.mrb[0].mxu0
        %v4187 = vadd.f32 0.0, %v4186
        %v4188 = vpop.f32.mrb[0].mxu0
        %v4189 = vpop.f32.mrb[0].mxu0
        %v4190 = vadd.f32 0.0, %v4189
        %v4191 = vpop.f32.mrb[0].mxu0
        %4192 = vmatprep.mubr.bf16.mxu0 %v3880
        %4193 = vmatmul.mubr.bf16.gmra.mrb[0].mxu0 %v3877
        %v4194 = vpop.f32.mrb[0].mxu0
        %v4195 = vadd.f32 0.0, %v4194
        %v4196 = vpop.f32.mrb[0].mxu0
        %v4197 = vpop.f32.mrb[0].mxu0
        %v4198 = vadd.f32 0.0, %v4197
        %v4199 = vpop.f32.mrb[0].mxu0
        %4200 = vmatprep.mubr.bf16.mxu0 %v3883
        %4201 = vmatmul.mubr.bf16.gmra.mrb[0].mxu0 %v3880
        %v4202 = vpop.f32.mrb[0].mxu0
        %v4203 = vadd.f32 0.0, %v4202
        %v4204 = vpop.f32.mrb[0].mxu0
        %v4205 = vpop.f32.mrb[0].mxu0
        %v4206 = vadd.f32 0.0, %v4205
        %v4207 = vpop.f32.mrb[0].mxu0
        %4208 = vmatprep.mubr.bf16.mxu0 %v3886
        %4209 = vmatmul.mubr.bf16.gmra.mrb[0].mxu0 %v3883
        %v4210 = vpop.f32.mrb[0].mxu0
        %v4211 = vadd.f32 0.0, %v4210
        %v4212 = vpop.f32.mrb[0].mxu0
        %v4213 = vpop.f32.mrb[0].mxu0
        %v4214 = vadd.f32 0.0, %v4213
        %v4215 = vpop.f32.mrb[0].mxu0
        %4216 = vmatprep.mubr.bf16.mxu0 %v3889
        %4217 = vmatmul.mubr.bf16.gmra.mrb[0].mxu0 %v3886
        %v4218 = vpop.f32.mrb[0].mxu0
        %v4219 = vadd.f32 0.0, %v4218
        %v4220 = vpop.f32.mrb[0].mxu0
        %v4221 = vpop.f32.mrb[0].mxu0
        %v4222 = vadd.f32 0.0, %v4221
        %v4223 = vpop.f32.mrb[0].mxu0
        %4224 = vmatprep.mubr.bf16.mxu0 %v3892
        %4225 = vmatmul.mubr.bf16.gmra.mrb[0].mxu0 %v3889
        %v4226 = vpop.f32.mrb[0].mxu0
        %v4227 = vadd.f32 0.0, %v4226
        %v4228 = vpop.f32.mrb[0].mxu0
        %v4229 = vpop.f32.mrb[0].mxu0
        %v4230 = vadd.f32 0.0, %v4229
        %v4231 = vpop.f32.mrb[0].mxu0
        %4232 = vmatprep.mubr.bf16.mxu0 %v3895
        %4233 = vmatmul.mubr.bf16.gmra.mrb[0].mxu0 %v3892
        %v4234 = vpop.f32.mrb[0].mxu0
        %v4235 = vadd.f32 0.0, %v4234
        %v4236 = vpop.f32.mrb[0].mxu0
        %v4237 = vpop.f32.mrb[0].mxu0
        %v4238 = vadd.f32 0.0, %v4237
        %v4239 = vpop.f32.mrb[0].mxu0
        %4240 = vmatprep.mubr.bf16.mxu0 %v3898
        %4241 = vmatmul.mubr.bf16.gmra.mrb[0].mxu0 %v3895
        %v4242 = vpop.f32.mrb[0].mxu0
        %v4243 = vadd.f32 0.0, %v4242
        %v4244 = vpop.f32.mrb[0].mxu0
        %v4245 = vpop.f32.mrb[0].mxu0
        %v4246 = vadd.f32 0.0, %v4245
        %v4247 = vpop.f32.mrb[0].mxu0
        %4248 = vmatprep.mubr.bf16.mxu0 %v3901
        %4249 = vmatmul.mubr.bf16.gmra.mrb[0].mxu0 %v3898
        %v4250 = vpop.f32.mrb[0].mxu0
        %v4251 = vadd.f32 0.0, %v4250
        %v4252 = vpop.f32.mrb[0].mxu0
        %v4253 = vpop.f32.mrb[0].mxu0
        %v4254 = vadd.f32 0.0, %v4253
        %v4255 = vpop.f32.mrb[0].mxu0
        %4256 = vmatprep.mubr.bf16.mxu0 %v3904
        %4257 = vmatmul.mubr.bf16.gmra.mrb[0].mxu0 %v3901
        %v4258 = vpop.f32.mrb[0].mxu0
        %v4259 = vadd.f32 0.0, %v4258
        %v4260 = vpop.f32.mrb[0].mxu0
        %v4261 = vpop.f32.mrb[0].mxu0
        %v4262 = vadd.f32 0.0, %v4261
        %v4263 = vpop.f32.mrb[0].mxu0
        %4264 = vmatprep.mubr.bf16.mxu0 %v3907
        %4265 = vmatmul.mubr.bf16.gmra.mrb[0].mxu0 %v3904
        %v4266 = vpop.f32.mrb[0].mxu0
        %v4267 = vadd.f32 0.0, %v4266
        %v4268 = vpop.f32.mrb[0].mxu0
        %v4269 = vpop.f32.mrb[0].mxu0
        %v4270 = vadd.f32 0.0, %v4269
        %v4271 = vpop.f32.mrb[0].mxu0
        %4272 = vmatprep.mubr.bf16.mxu0 %v3910
        %4273 = vmatmul.mubr.bf16.gmra.mrb[0].mxu0 %v3907
        %v4274 = vpop.f32.mrb[0].mxu0
        %v4275 = vadd.f32 0.0, %v4274
        %v4276 = vpop.f32.mrb[0].mxu0
        %v4277 = vpop.f32.mrb[0].mxu0
        %v4278 = vadd.f32 0.0, %v4277
        %v4279 = vpop.f32.mrb[0].mxu0
        %4280 = vmatprep.mubr.bf16.mxu0 %v3913
        %4281 = vmatmul.mubr.bf16.gmra.mrb[0].mxu0 %v3910
        %v4282 = vpop.f32.mrb[0].mxu0
        %v4283 = vadd.f32 0.0, %v4282
        %v4284 = vpop.f32.mrb[0].mxu0
        %v4285 = vpop.f32.mrb[0].mxu0
        %v4286 = vadd.f32 0.0, %v4285
        %v4287 = vpop.f32.mrb[0].mxu0
        %4288 = vdwg.mxu0
        %4289 = vmatprep.subr.bf16.mxu0 0
        %4290 = vmatpush1.bf16.msra.mxu0 %v4096
        %4291 = vmatprep.subr.bf16.mxu0 0
        %4292 = vmatpush1.bf16.msra.mxu0 %v4097
        %4293 = vmatprep.subr.bf16.mxu0 0
        %4294 = vmatpush1.bf16.msra.mxu0 %v4098
        %4295 = vmatprep.subr.bf16.mxu0 0
        %4296 = vmatpush1.bf16.msra.mxu0 %v4099
        %4297 = vmatprep.subr.bf16.mxu0 0
        %4298 = vmatpush1.bf16.msra.mxu0 %v4100
        %4299 = vmatprep.subr.bf16.mxu0 0
        %4300 = vmatpush1.bf16.msra.mxu0 %v4101
        %4301 = vmatprep.subr.bf16.mxu0 0
        %4302 = vmatpush1.bf16.msra.mxu0 %v4102
        %4303 = vmatprep.subr.bf16.mxu0 0
        %4304 = vmatpush1.bf16.msra.mxu0 %v4103
        %4305 = vmatprep.subr.bf16.mxu0 0
        %4306 = vmatpush1.bf16.msra.mxu0 0
        %4307 = vmatprep.subr.bf16.mxu0 0
        %4308 = vmatpush1.bf16.msra.mxu0 0
        %4309 = vmatprep.subr.bf16.mxu0 0
        %4310 = vmatpush1.bf16.msra.mxu0 0
        %4311 = vmatprep.subr.bf16.mxu0 0
        %4312 = vmatpush1.bf16.msra.mxu0 0
        %4313 = vmatprep.subr.bf16.mxu0 0
        %4314 = vmatpush1.bf16.msra.mxu0 0
        %4315 = vmatprep.subr.bf16.mxu0 0
        %4316 = vmatpush1.bf16.msra.mxu0 0
        %4317 = vmatprep.subr.bf16.mxu0 0
        %4318 = vmatpush1.bf16.msra.mxu0 0
        %4319 = vmatprep.subr.bf16.mxu0 0
        %4320 = vmatpush1.bf16.msra.mxu0 0
        %4321 = vmatprep.mubr.bf16.mxu0 0
        %4322 = vmatmul.mubr.bf16.gmra.mrb[0].mxu0 %v3871
        %v4323 = vpop.f32.mrb[0].mxu0
        %v4324 = vadd.f32 %v4163, %v4323
        %v4325 = vpop.f32.mrb[0].mxu0
        %v4326 = vpop.f32.mrb[0].mxu0
        %v4327 = vadd.f32 %v4166, %v4326
        %v4328 = vpop.f32.mrb[0].mxu0
        %4329 = vmatprep.mubr.bf16.mxu0 0
        %4330 = vmatmul.mubr.bf16.gmra.mrb[0].mxu0 %v3874
        %v4331 = vpop.f32.mrb[0].mxu0
        %v4332 = vadd.f32 %v4171, %v4331
        %v4333 = vpop.f32.mrb[0].mxu0
        %v4334 = vpop.f32.mrb[0].mxu0
        %v4335 = vadd.f32 %v4174, %v4334
        %v4336 = vpop.f32.mrb[0].mxu0
        %4337 = vmatprep.mubr.bf16.mxu0 0
        %4338 = vmatmul.mubr.bf16.gmra.mrb[0].mxu0 %v3877
        %v4339 = vpop.f32.mrb[0].mxu0
        %v4340 = vadd.f32 %v4179, %v4339
        %v4341 = vpop.f32.mrb[0].mxu0
        %v4342 = vpop.f32.mrb[0].mxu0
        %v4343 = vadd.f32 %v4182, %v4342
        %v4344 = vpop.f32.mrb[0].mxu0
        %4345 = vmatprep.mubr.bf16.mxu0 0
        %4346 = vmatmul.mubr.bf16.gmra.mrb[0].mxu0 %v3880
        %v4347 = vpop.f32.mrb[0].mxu0
        %v4348 = vadd.f32 %v4187, %v4347
        %v4349 = vpop.f32.mrb[0].mxu0
        %v4350 = vpop.f32.mrb[0].mxu0
        %v4351 = vadd.f32 %v4190, %v4350
        %v4352 = vpop.f32.mrb[0].mxu0
        %4353 = vmatprep.mubr.bf16.mxu0 0
        %4354 = vmatmul.mubr.bf16.gmra.mrb[0].mxu0 %v3883
        %v4355 = vpop.f32.mrb[0].mxu0
        %v4356 = vadd.f32 %v4195, %v4355
        %v4357 = vpop.f32.mrb[0].mxu0
        %v4358 = vpop.f32.mrb[0].mxu0
        %v4359 = vadd.f32 %v4198, %v4358
        %v4360 = vpop.f32.mrb[0].mxu0
        %4361 = vmatprep.mubr.bf16.mxu0 0
        %4362 = vmatmul.mubr.bf16.gmra.mrb[0].mxu0 %v3886
        %v4363 = vpop.f32.mrb[0].mxu0
        %v4364 = vadd.f32 %v4203, %v4363
        %v4365 = vpop.f32.mrb[0].mxu0
        %v4366 = vpop.f32.mrb[0].mxu0
        %v4367 = vadd.f32 %v4206, %v4366
        %v4368 = vpop.f32.mrb[0].mxu0
        %4369 = vmatprep.mubr.bf16.mxu0 0
        %4370 = vmatmul.mubr.bf16.gmra.mrb[0].mxu0 %v3889
        %v4371 = vpop.f32.mrb[0].mxu0
        %v4372 = vadd.f32 %v4211, %v4371
        %v4373 = vpop.f32.mrb[0].mxu0
        %v4374 = vpop.f32.mrb[0].mxu0
        %v4375 = vadd.f32 %v4214, %v4374
        %v4376 = vpop.f32.mrb[0].mxu0
        %4377 = vmatprep.mubr.bf16.mxu0 0
        %4378 = vmatmul.mubr.bf16.gmra.mrb[0].mxu0 %v3892
        %v4379 = vpop.f32.mrb[0].mxu0
        %v4380 = vadd.f32 %v4219, %v4379
        %v4381 = vpop.f32.mrb[0].mxu0
        %v4382 = vpop.f32.mrb[0].mxu0
        %v4383 = vadd.f32 %v4222, %v4382
        %v4384 = vpop.f32.mrb[0].mxu0
        %4385 = vmatprep.mubr.bf16.mxu0 0
        %4386 = vmatmul.mubr.bf16.gmra.mrb[0].mxu0 %v3895
        %v4387 = vpop.f32.mrb[0].mxu0
        %v4388 = vadd.f32 %v4227, %v4387
        %v4389 = vpop.f32.mrb[0].mxu0
        %v4390 = vpop.f32.mrb[0].mxu0
        %v4391 = vadd.f32 %v4230, %v4390
        %v4392 = vpop.f32.mrb[0].mxu0
        %4393 = vmatprep.mubr.bf16.mxu0 0
        %4394 = vmatmul.mubr.bf16.gmra.mrb[0].mxu0 %v3898
        %v4395 = vpop.f32.mrb[0].mxu0
        %v4396 = vadd.f32 %v4235, %v4395
        %v4397 = vpop.f32.mrb[0].mxu0
        %v4398 = vpop.f32.mrb[0].mxu0
        %v4399 = vadd.f32 %v4238, %v4398
        %v4400 = vpop.f32.mrb[0].mxu0
        %4401 = vmatprep.mubr.bf16.mxu0 0
        %4402 = vmatmul.mubr.bf16.gmra.mrb[0].mxu0 %v3901
        %v4403 = vpop.f32.mrb[0].mxu0
        %v4404 = vadd.f32 %v4243, %v4403
        %v4405 = vpop.f32.mrb[0].mxu0
        %v4406 = vpop.f32.mrb[0].mxu0
        %v4407 = vadd.f32 %v4246, %v4406
        %v4408 = vpop.f32.mrb[0].mxu0
        %4409 = vmatprep.mubr.bf16.mxu0 0
        %4410 = vmatmul.mubr.bf16.gmra.mrb[0].mxu0 %v3904
        %v4411 = vpop.f32.mrb[0].mxu0
        %v4412 = vadd.f32 %v4251, %v4411
        %v4413 = vpop.f32.mrb[0].mxu0
        %v4414 = vpop.f32.mrb[0].mxu0
        %v4415 = vadd.f32 %v4254, %v4414
        %v4416 = vpop.f32.mrb[0].mxu0
        %4417 = vmatprep.mubr.bf16.mxu0 0
        %4418 = vmatmul.mubr.bf16.gmra.mrb[0].mxu0 %v3907
        %v4419 = vpop.f32.mrb[0].mxu0
        %v4420 = vadd.f32 %v4259, %v4419
        %v4421 = vpop.f32.mrb[0].mxu0
        %v4422 = vpop.f32.mrb[0].mxu0
        %v4423 = vadd.f32 %v4262, %v4422
        %v4424 = vpop.f32.mrb[0].mxu0
        %4425 = vmatprep.mubr.bf16.mxu0 0
        %4426 = vmatmul.mubr.bf16.gmra.mrb[0].mxu0 %v3910
        %v4427 = vpop.f32.mrb[0].mxu0
        %v4428 = vadd.f32 %v4267, %v4427
        %v4429 = vpop.f32.mrb[0].mxu0
        %v4430 = vpop.f32.mrb[0].mxu0
        %v4431 = vadd.f32 %v4270, %v4430
        %v4432 = vpop.f32.mrb[0].mxu0
        %4433 = vmatprep.mubr.bf16.mxu0 0
        %4434 = vmatmul.mubr.bf16.gmra.mrb[0].mxu0 %v3913
        %v4435 = vpop.f32.mrb[0].mxu0
        %v4436 = vadd.f32 %v4275, %v4435
        %v4437 = vpop.f32.mrb[0].mxu0
        %v4438 = vpop.f32.mrb[0].mxu0
        %v4439 = vadd.f32 %v4278, %v4438
        %v4440 = vpop.f32.mrb[0].mxu0
        %4441 = vmatprep.mubr.bf16.mxu0 0
        %4442 = vmatmul.mubr.bf16.gmra.mrb[0].mxu0 %v3916
        %v4443 = vpop.f32.mrb[0].mxu0
        %v4444 = vadd.f32 %v4283, %v4443
        %v4445 = vpop.f32.mrb[0].mxu0
        %v4446 = vpop.f32.mrb[0].mxu0
        %v4447 = vadd.f32 %v4286, %v4446
        %v4448 = vpop.f32.mrb[0].mxu0
        %4449 = vdwg.mxu0
        %v4450 = vadd.f32 %v3795, %v4324
        %v4451 = vadd.f32 %v3796, %v4327
        %v4452 = vadd.f32 %v3797, %v4332
        %v4453 = vadd.f32 %v3798, %v4335
        %v4454 = vadd.f32 %v3799, %v4340
        %v4455 = vadd.f32 %v3800, %v4343
        %v4456 = vadd.f32 %v3801, %v4348
        %v4457 = vadd.f32 %v3802, %v4351
        %v4458 = vadd.f32 %v3803, %v4356
        %v4459 = vadd.f32 %v3804, %v4359
        %v4460 = vadd.f32 %v3805, %v4364
        %v4461 = vadd.f32 %v3806, %v4367
        %v4462 = vadd.f32 %v3807, %v4372
        %v4463 = vadd.f32 %v3808, %v4375
        %v4464 = vadd.f32 %v3809, %v4380
        %v4465 = vadd.f32 %v3810, %v4383
        %v4466 = vadd.f32 %v3811, %v4388
        %v4467 = vadd.f32 %v3812, %v4391
        %v4468 = vadd.f32 %v3813, %v4396
        %v4469 = vadd.f32 %v3814, %v4399
        %v4470 = vadd.f32 %v3815, %v4404
        %v4471 = vadd.f32 %v3816, %v4407
        %v4472 = vadd.f32 %v3817, %v4412
        %v4473 = vadd.f32 %v3818, %v4415
        %v4474 = vadd.f32 %v3819, %v4420
        %v4475 = vadd.f32 %v3820, %v4423
        %v4476 = vadd.f32 %v3821, %v4428
        %v4477 = vadd.f32 %v3822, %v4431
        %v4478 = vadd.f32 %v3823, %v4436
        %v4479 = vadd.f32 %v3824, %v4439
        %v4480 = vadd.f32 %v3825, %v4444
        %v4481 = vadd.f32 %v3826, %v4447
        %vm4530 = vcmask 1046528
        %v4531 = vrot.slane %v281, 1
        %v4532 = vrot.slane %v282, 1
        %v4533 = vsel %vm4530, %v4531, %v4532
        %v4534 = vrot.slane %v283, 1
        %v4535 = vsel %vm4530, %v4532, %v4534
        %v4536 = vrot.slane %v284, 1
        %v4537 = vrot.slane %v285, 1
        %v4538 = vsel %vm4530, %v4536, %v4537
        %v4539 = vrot.slane %v286, 1
        %v4540 = vsel %vm4530, %v4537, %v4539
        %v4541 = vrot.slane %v287, 1
        %v4542 = vrot.slane %v288, 1
        %v4543 = vsel %vm4530, %v4541, %v4542
        %v4544 = vrot.slane %v289, 1
        %v4545 = vsel %vm4530, %v4542, %v4544
        %v4546 = vrot.slane %v290, 1
        %v4547 = vrot.slane %v291, 1
        %v4548 = vsel %vm4530, %v4546, %v4547
        %v4549 = vrot.slane %v292, 1
        %v4550 = vsel %vm4530, %v4547, %v4549
        %v4551 = vrot.slane %v293, 1
        %v4552 = vrot.slane %v294, 1
        %v4553 = vsel %vm4530, %v4551, %v4552
        %v4554 = vrot.slane %v295, 1
        %v4555 = vsel %vm4530, %v4552, %v4554
        %v4556 = vrot.slane %v296, 1
        %v4557 = vrot.slane %v297, 1
        %v4558 = vsel %vm4530, %v4556, %v4557
        %v4559 = vrot.slane %v298, 1
        %v4560 = vsel %vm4530, %v4557, %v4559
        %v4561 = vrot.slane %v299, 1
        %v4562 = vrot.slane %v300, 1
        %v4563 = vsel %vm4530, %v4561, %v4562
        %v4564 = vrot.slane %v301, 1
        %v4565 = vsel %vm4530, %v4562, %v4564
        %v4566 = vrot.slane %v302, 1
        %v4567 = vrot.slane %v303, 1
        %v4568 = vsel %vm4530, %v4566, %v4567
        %v4569 = vrot.slane %v304, 1
        %v4570 = vsel %vm4530, %v4567, %v4569
        %v4571 = vrot.slane %v305, 1
        %v4572 = vrot.slane %v306, 1
        %v4573 = vsel %vm4530, %v4571, %v4572
        %v4574 = vrot.slane %v307, 1
        %v4575 = vsel %vm4530, %v4572, %v4574
        %v4576 = vrot.slane %v308, 1
        %v4577 = vrot.slane %v309, 1
        %v4578 = vsel %vm4530, %v4576, %v4577
        %v4579 = vrot.slane %v310, 1
        %v4580 = vsel %vm4530, %v4577, %v4579
        %v4581 = vrot.slane %v311, 1
        %v4582 = vrot.slane %v312, 1
        %v4583 = vsel %vm4530, %v4581, %v4582
        %v4584 = vrot.slane %v313, 1
        %v4585 = vsel %vm4530, %v4582, %v4584
        %v4586 = vrot.slane %v314, 1
        %v4587 = vrot.slane %v315, 1
        %v4588 = vsel %vm4530, %v4586, %v4587
        %v4589 = vrot.slane %v316, 1
        %v4590 = vsel %vm4530, %v4587, %v4589
        %v4591 = vrot.slane %v317, 1
        %v4592 = vrot.slane %v318, 1
        %v4593 = vsel %vm4530, %v4591, %v4592
        %v4594 = vrot.slane %v319, 1
        %v4595 = vsel %vm4530, %v4592, %v4594
        %v4596 = vrot.slane %v320, 1
        %v4597 = vrot.slane %v321, 1
        %v4598 = vsel %vm4530, %v4596, %v4597
        %v4599 = vrot.slane %v322, 1
        %v4600 = vsel %vm4530, %v4597, %v4599
        %v4601 = vrot.slane %v323, 1
        %v4602 = vrot.slane %v324, 1
        %v4603 = vsel %vm4530, %v4601, %v4602
        %v4604 = vrot.slane %v325, 1
        %v4605 = vsel %vm4530, %v4602, %v4604
        %v4606 = vrot.slane %v326, 1
        %v4607 = vrot.slane %v327, 1
        %v4608 = vsel %vm4530, %v4606, %v4607
        %v4609 = vrot.slane %v328, 1
        %v4610 = vsel %vm4530, %v4607, %v4609
        %v4643 = vpack.c.bf16 %v4535, %v4533
        %v4644 = vpack.c.bf16 %v4540, %v4538
        %v4645 = vpack.c.bf16 %v4545, %v4543
        %v4646 = vpack.c.bf16 %v4550, %v4548
        %v4647 = vpack.c.bf16 %v4555, %v4553
        %v4648 = vpack.c.bf16 %v4560, %v4558
        %v4649 = vpack.c.bf16 %v4565, %v4563
        %v4650 = vpack.c.bf16 %v4570, %v4568
        %v4651 = vpack.c.bf16 %v4575, %v4573
        %v4652 = vpack.c.bf16 %v4580, %v4578
        %v4653 = vpack.c.bf16 %v4585, %v4583
        %v4654 = vpack.c.bf16 %v4590, %v4588
        %v4655 = vpack.c.bf16 %v4595, %v4593
        %v4656 = vpack.c.bf16 %v4600, %v4598
        %v4657 = vpack.c.bf16 %v4605, %v4603
        %v4658 = vpack.c.bf16 %v4610, %v4608
        %v4659 = vld [vmem:[%s3] sm:$0xf]
        %v4660 = vld [vmem:[%s3 + $0x4] sm:$0xf]
        %v4661 = vld [vmem:[%s3 + $0x8] sm:$0xf]
        %v4662 = vld [vmem:[%s3 + $0xc] sm:$0xf]
        %v4663 = vld [vmem:[%s3 + $0x10] sm:$0xf]
        %v4664 = vld [vmem:[%s3 + $0x14] sm:$0xf]
        %v4665 = vld [vmem:[%s3 + $0x18] sm:$0xf]
        %v4666 = vld [vmem:[%s3 + $0x1c] sm:$0xf]
        %v4667 = vld [vmem:[%s3 + $0x20] sm:$0xf]
        %v4668 = vld [vmem:[%s3 + $0x24] sm:$0xf]
        %v4669 = vld [vmem:[%s3 + $0x28] sm:$0xf]
        %v4670 = vld [vmem:[%s3 + $0x2c] sm:$0xf]
        %v4671 = vld [vmem:[%s3 + $0x30] sm:$0xf]
        %v4672 = vld [vmem:[%s3 + $0x34] sm:$0xf]
        %v4673 = vld [vmem:[%s3 + $0x38] sm:$0xf]
        %v4674 = vld [vmem:[%s3 + $0x3c] sm:$0xf]
        %v4675 = vld [vmem:[%s6] sm:$0x1]
        %v4677 = vlaneseq
        %v4678 = vshrl.u32 %v4677, 7
        %v4679 = vsub.s32 0, %v4678
        %v4680 = vrot.slane %v4675, %v4679
        %v4698 = vunpack.c.l.b16 %v4659
        %v4699 = vunpack.c.l.b16 %v4660
        %v4700 = vunpack.c.l.b16 %v4661
        %v4701 = vunpack.c.l.b16 %v4662
        %v4702 = vunpack.c.l.b16 %v4663
        %v4703 = vunpack.c.l.b16 %v4664
        %v4704 = vunpack.c.l.b16 %v4665
        %v4705 = vunpack.c.l.b16 %v4666
        %v4706 = vunpack.c.l.b16 %v4667
        %v4707 = vunpack.c.l.b16 %v4668
        %v4708 = vunpack.c.l.b16 %v4669
        %v4709 = vunpack.c.l.b16 %v4670
        %v4710 = vunpack.c.l.b16 %v4671
        %v4711 = vunpack.c.l.b16 %v4672
        %v4712 = vunpack.c.l.b16 %v4673
        %v4713 = vunpack.c.l.b16 %v4674
        %v4714 = vpack.c.b16 %v4699, %v4698
        %v4715 = vpack.c.b16 %v4701, %v4700
        %v4716 = vpack.c.b16 %v4703, %v4702
        %v4717 = vpack.c.b16 %v4705, %v4704
        %v4718 = vpack.c.b16 %v4707, %v4706
        %v4719 = vpack.c.b16 %v4709, %v4708
        %v4720 = vpack.c.b16 %v4711, %v4710
        %v4721 = vpack.c.b16 %v4713, %v4712
        %4730 = vmatprep.subr.bf16.mxu0 0
        %4731 = vmatpush1.bf16.msra.mxu0 %v4714
        %4732 = vmatprep.subr.bf16.mxu0 0
        %4733 = vmatpush1.bf16.msra.mxu0 %v4715
        %4734 = vmatprep.subr.bf16.mxu0 0
        %4735 = vmatpush1.bf16.msra.mxu0 %v4716
        %4736 = vmatprep.subr.bf16.mxu0 0
        %4737 = vmatpush1.bf16.msra.mxu0 %v4717
        %4738 = vmatprep.subr.bf16.mxu0 0
        %4739 = vmatpush1.bf16.msra.mxu0 %v4718
        %4740 = vmatprep.subr.bf16.mxu0 0
        %4741 = vmatpush1.bf16.msra.mxu0 %v4719
        %4742 = vmatprep.subr.bf16.mxu0 0
        %4743 = vmatpush1.bf16.msra.mxu0 %v4720
        %4744 = vmatprep.subr.bf16.mxu0 0
        %4745 = vmatpush1.bf16.msra.mxu0 %v4721
        %4746 = vmatprep.subr.bf16.mxu0 0
        %4747 = vmatpush1.bf16.msra.mxu0 0
        %4748 = vmatprep.subr.bf16.mxu0 0
        %4749 = vmatpush1.bf16.msra.mxu0 0
        %4750 = vmatprep.subr.bf16.mxu0 0
        %4751 = vmatpush1.bf16.msra.mxu0 0
        %4752 = vmatprep.subr.bf16.mxu0 0
        %4753 = vmatpush1.bf16.msra.mxu0 0
        %4754 = vmatprep.subr.bf16.mxu0 0
        %4755 = vmatpush1.bf16.msra.mxu0 0
        %4756 = vmatprep.subr.bf16.mxu0 0
        %4757 = vmatpush1.bf16.msra.mxu0 0
        %4758 = vmatprep.subr.bf16.mxu0 0
        %4759 = vmatpush1.bf16.msra.mxu0 0
        %4760 = vmatprep.subr.bf16.mxu0 0
        %4761 = vmatpush1.bf16.msra.mxu0 0
        %4762 = vmatprep.mubr.bf16.mxu0 0
        %4763 = vmatmul.mubr.bf16.gmra.mrb[0].mxu0 %v4643
        %v4764 = vpop.f32.mrb[0].mxu0
        %v4765 = vadd.f32 %v4680, %v4764
        %v4766 = vpop.f32.mrb[0].mxu0
        %v4767 = vpop.f32.mrb[0].mxu0
        %v4768 = vadd.f32 %v4680, %v4767
        %v4769 = vpop.f32.mrb[0].mxu0
        %4770 = vmatprep.mubr.bf16.mxu0 0
        %4771 = vmatmul.mubr.bf16.gmra.mrb[0].mxu0 %v4644
        %v4772 = vpop.f32.mrb[0].mxu0
        %v4773 = vadd.f32 %v4680, %v4772
        %v4774 = vpop.f32.mrb[0].mxu0
        %v4775 = vpop.f32.mrb[0].mxu0
        %v4776 = vadd.f32 %v4680, %v4775
        %v4777 = vpop.f32.mrb[0].mxu0
        %4778 = vmatprep.mubr.bf16.mxu0 0
        %4779 = vmatmul.mubr.bf16.gmra.mrb[0].mxu0 %v4645
        %v4780 = vpop.f32.mrb[0].mxu0
        %v4781 = vadd.f32 %v4680, %v4780
        %v4782 = vpop.f32.mrb[0].mxu0
        %v4783 = vpop.f32.mrb[0].mxu0
        %v4784 = vadd.f32 %v4680, %v4783
        %v4785 = vpop.f32.mrb[0].mxu0
        %4786 = vmatprep.mubr.bf16.mxu0 0
        %4787 = vmatmul.mubr.bf16.gmra.mrb[0].mxu0 %v4646
        %v4788 = vpop.f32.mrb[0].mxu0
        %v4789 = vadd.f32 %v4680, %v4788
        %v4790 = vpop.f32.mrb[0].mxu0
        %v4791 = vpop.f32.mrb[0].mxu0
        %v4792 = vadd.f32 %v4680, %v4791
        %v4793 = vpop.f32.mrb[0].mxu0
        %4794 = vmatprep.mubr.bf16.mxu0 0
        %4795 = vmatmul.mubr.bf16.gmra.mrb[0].mxu0 %v4647
        %v4796 = vpop.f32.mrb[0].mxu0
        %v4797 = vadd.f32 %v4680, %v4796
        %v4798 = vpop.f32.mrb[0].mxu0
        %v4799 = vpop.f32.mrb[0].mxu0
        %v4800 = vadd.f32 %v4680, %v4799
        %v4801 = vpop.f32.mrb[0].mxu0
        %4802 = vmatprep.mubr.bf16.mxu0 0
        %4803 = vmatmul.mubr.bf16.gmra.mrb[0].mxu0 %v4648
        %v4804 = vpop.f32.mrb[0].mxu0
        %v4805 = vadd.f32 %v4680, %v4804
        %v4806 = vpop.f32.mrb[0].mxu0
        %v4807 = vpop.f32.mrb[0].mxu0
        %v4808 = vadd.f32 %v4680, %v4807
        %v4809 = vpop.f32.mrb[0].mxu0
        %4810 = vmatprep.mubr.bf16.mxu0 0
        %4811 = vmatmul.mubr.bf16.gmra.mrb[0].mxu0 %v4649
        %v4812 = vpop.f32.mrb[0].mxu0
        %v4813 = vadd.f32 %v4680, %v4812
        %v4814 = vpop.f32.mrb[0].mxu0
        %v4815 = vpop.f32.mrb[0].mxu0
        %v4816 = vadd.f32 %v4680, %v4815
        %v4817 = vpop.f32.mrb[0].mxu0
        %4818 = vmatprep.mubr.bf16.mxu0 0
        %4819 = vmatmul.mubr.bf16.gmra.mrb[0].mxu0 %v4650
        %v4820 = vpop.f32.mrb[0].mxu0
        %v4821 = vadd.f32 %v4680, %v4820
        %v4822 = vpop.f32.mrb[0].mxu0
        %v4823 = vpop.f32.mrb[0].mxu0
        %v4824 = vadd.f32 %v4680, %v4823
        %v4825 = vpop.f32.mrb[0].mxu0
        %4826 = vmatprep.mubr.bf16.mxu0 0
        %4827 = vmatmul.mubr.bf16.gmra.mrb[0].mxu0 %v4651
        %v4828 = vpop.f32.mrb[0].mxu0
        %v4829 = vadd.f32 %v4680, %v4828
        %v4830 = vpop.f32.mrb[0].mxu0
        %v4831 = vpop.f32.mrb[0].mxu0
        %v4832 = vadd.f32 %v4680, %v4831
        %v4833 = vpop.f32.mrb[0].mxu0
        %4834 = vmatprep.mubr.bf16.mxu0 0
        %4835 = vmatmul.mubr.bf16.gmra.mrb[0].mxu0 %v4652
        %v4836 = vpop.f32.mrb[0].mxu0
        %v4837 = vadd.f32 %v4680, %v4836
        %v4838 = vpop.f32.mrb[0].mxu0
        %v4839 = vpop.f32.mrb[0].mxu0
        %v4840 = vadd.f32 %v4680, %v4839
        %v4841 = vpop.f32.mrb[0].mxu0
        %4842 = vmatprep.mubr.bf16.mxu0 0
        %4843 = vmatmul.mubr.bf16.gmra.mrb[0].mxu0 %v4653
        %v4844 = vpop.f32.mrb[0].mxu0
        %v4845 = vadd.f32 %v4680, %v4844
        %v4846 = vpop.f32.mrb[0].mxu0
        %v4847 = vpop.f32.mrb[0].mxu0
        %v4848 = vadd.f32 %v4680, %v4847
        %v4849 = vpop.f32.mrb[0].mxu0
        %4850 = vmatprep.mubr.bf16.mxu0 0
        %4851 = vmatmul.mubr.bf16.gmra.mrb[0].mxu0 %v4654
        %v4852 = vpop.f32.mrb[0].mxu0
        %v4853 = vadd.f32 %v4680, %v4852
        %v4854 = vpop.f32.mrb[0].mxu0
        %v4855 = vpop.f32.mrb[0].mxu0
        %v4856 = vadd.f32 %v4680, %v4855
        %v4857 = vpop.f32.mrb[0].mxu0
        %4858 = vmatprep.mubr.bf16.mxu0 0
        %4859 = vmatmul.mubr.bf16.gmra.mrb[0].mxu0 %v4655
        %v4860 = vpop.f32.mrb[0].mxu0
        %v4861 = vadd.f32 %v4680, %v4860
        %v4862 = vpop.f32.mrb[0].mxu0
        %v4863 = vpop.f32.mrb[0].mxu0
        %v4864 = vadd.f32 %v4680, %v4863
        %v4865 = vpop.f32.mrb[0].mxu0
        %4866 = vmatprep.mubr.bf16.mxu0 0
        %4867 = vmatmul.mubr.bf16.gmra.mrb[0].mxu0 %v4656
        %v4868 = vpop.f32.mrb[0].mxu0
        %v4869 = vadd.f32 %v4680, %v4868
        %v4870 = vpop.f32.mrb[0].mxu0
        %v4871 = vpop.f32.mrb[0].mxu0
        %v4872 = vadd.f32 %v4680, %v4871
        %v4873 = vpop.f32.mrb[0].mxu0
        %4874 = vmatprep.mubr.bf16.mxu0 0
        %4875 = vmatmul.mubr.bf16.gmra.mrb[0].mxu0 %v4657
        %v4876 = vpop.f32.mrb[0].mxu0
        %v4877 = vadd.f32 %v4680, %v4876
        %v4878 = vpop.f32.mrb[0].mxu0
        %v4879 = vpop.f32.mrb[0].mxu0
        %v4880 = vadd.f32 %v4680, %v4879
        %v4881 = vpop.f32.mrb[0].mxu0
        %4882 = vmatprep.mubr.bf16.mxu0 0
        %4883 = vmatmul.mubr.bf16.gmra.mrb[0].mxu0 %v4658
        %v4884 = vpop.f32.mrb[0].mxu0
        %v4885 = vadd.f32 %v4680, %v4884
        %v4886 = vpop.f32.mrb[0].mxu0
        %v4887 = vpop.f32.mrb[0].mxu0
        %v4888 = vadd.f32 %v4680, %v4887
        %v4889 = vpop.f32.mrb[0].mxu0
        %4890 = vdwg.mxu0
        %v4891 = vadd.f32 %v4450, %v4765
        %v4892 = vadd.f32 %v4451, %v4768
        %v4893 = vadd.f32 %v4452, %v4773
        %v4894 = vadd.f32 %v4453, %v4776
        %v4895 = vadd.f32 %v4454, %v4781
        %v4896 = vadd.f32 %v4455, %v4784
        %v4897 = vadd.f32 %v4456, %v4789
        %v4898 = vadd.f32 %v4457, %v4792
        %v4899 = vadd.f32 %v4458, %v4797
        %v4900 = vadd.f32 %v4459, %v4800
        %v4901 = vadd.f32 %v4460, %v4805
        %v4902 = vadd.f32 %v4461, %v4808
        %v4903 = vadd.f32 %v4462, %v4813
        %v4904 = vadd.f32 %v4463, %v4816
        %v4905 = vadd.f32 %v4464, %v4821
        %v4906 = vadd.f32 %v4465, %v4824
        %v4907 = vadd.f32 %v4466, %v4829
        %v4908 = vadd.f32 %v4467, %v4832
        %v4909 = vadd.f32 %v4468, %v4837
        %v4910 = vadd.f32 %v4469, %v4840
        %v4911 = vadd.f32 %v4470, %v4845
        %v4912 = vadd.f32 %v4471, %v4848
        %v4913 = vadd.f32 %v4472, %v4853
        %v4914 = vadd.f32 %v4473, %v4856
        %v4915 = vadd.f32 %v4474, %v4861
        %v4916 = vadd.f32 %v4475, %v4864
        %v4917 = vadd.f32 %v4476, %v4869
        %v4918 = vadd.f32 %v4477, %v4872
        %v4919 = vadd.f32 %v4478, %v4877
        %v4920 = vadd.f32 %v4479, %v4880
        %v4921 = vadd.f32 %v4480, %v4885
        %v4922 = vadd.f32 %v4481, %v4888
        %v4923 = vmax.f32 %v4891, 0.0
        %v4924 = vmax.f32 %v4892, 0.0
        %v4925 = vmax.f32 %v4893, 0.0
        %v4926 = vmax.f32 %v4894, 0.0
        %v4927 = vmax.f32 %v4895, 0.0
        %v4928 = vmax.f32 %v4896, 0.0
        %v4929 = vmax.f32 %v4897, 0.0
        %v4930 = vmax.f32 %v4898, 0.0
        %v4931 = vmax.f32 %v4899, 0.0
        %v4932 = vmax.f32 %v4900, 0.0
        %v4933 = vmax.f32 %v4901, 0.0
        %v4934 = vmax.f32 %v4902, 0.0
        %v4935 = vmax.f32 %v4903, 0.0
        %v4936 = vmax.f32 %v4904, 0.0
        %v4937 = vmax.f32 %v4905, 0.0
        %v4938 = vmax.f32 %v4906, 0.0
        %v4939 = vmax.f32 %v4907, 0.0
        %v4940 = vmax.f32 %v4908, 0.0
        %v4941 = vmax.f32 %v4909, 0.0
        %v4942 = vmax.f32 %v4910, 0.0
        %v4943 = vmax.f32 %v4911, 0.0
        %v4944 = vmax.f32 %v4912, 0.0
        %v4945 = vmax.f32 %v4913, 0.0
        %v4946 = vmax.f32 %v4914, 0.0
        %v4947 = vmax.f32 %v4915, 0.0
        %v4948 = vmax.f32 %v4916, 0.0
        %v4949 = vmax.f32 %v4917, 0.0
        %v4950 = vmax.f32 %v4918, 0.0
        %v4951 = vmax.f32 %v4919, 0.0
        %v4952 = vmax.f32 %v4920, 0.0
        %v4953 = vmax.f32 %v4921, 0.0
        %v4954 = vmax.f32 %v4922, 0.0
        %4955 = vst [vmem:[%s271] sm:$0xff] %v4923
        %4956 = vst [vmem:[%s271 + $0x8] sm:$0xff] %v4924
        %4957 = vst [vmem:[%s271 + $0x10] sm:$0xff] %v4925
        %4958 = vst [vmem:[%s271 + $0x18] sm:$0xff] %v4926
        %4959 = vst [vmem:[%s271 + $0x20] sm:$0xff] %v4927
        %4960 = vst [vmem:[%s271 + $0x28] sm:$0xff] %v4928
        %4961 = vst [vmem:[%s271 + $0x30] sm:$0xff] %v4929
        %4962 = vst [vmem:[%s271 + $0x38] sm:$0xff] %v4930
        %4963 = vst [vmem:[%s271 + $0x40] sm:$0xff] %v4931
        %4964 = vst [vmem:[%s271 + $0x48] sm:$0xff] %v4932
        %4965 = vst [vmem:[%s271 + $0x50] sm:$0xff] %v4933
        %4966 = vst [vmem:[%s271 + $0x58] sm:$0xff] %v4934
        %4967 = vst [vmem:[%s271 + $0x60] sm:$0xff] %v4935
        %4968 = vst [vmem:[%s271 + $0x68] sm:$0xff] %v4936
        %4969 = vst [vmem:[%s271 + $0x70] sm:$0xff] %v4937
        %4970 = vst [vmem:[%s271 + $0x78] sm:$0xff] %v4938
        %4971 = vst [vmem:[%s271 + $0x80] sm:$0xff] %v4939
        %4972 = vst [vmem:[%s271 + $0x88] sm:$0xff] %v4940
        %4973 = vst [vmem:[%s271 + $0x90] sm:$0xff] %v4941
        %4974 = vst [vmem:[%s271 + $0x98] sm:$0xff] %v4942
        %4975 = vst [vmem:[%s271 + $0xa0] sm:$0xff] %v4943
        %4976 = vst [vmem:[%s271 + $0xa8] sm:$0xff] %v4944
        %4977 = vst [vmem:[%s271 + $0xb0] sm:$0xff] %v4945
        %4978 = vst [vmem:[%s271 + $0xb8] sm:$0xff] %v4946
        %4979 = vst [vmem:[%s271 + $0xc0] sm:$0xff] %v4947
        %4980 = vst [vmem:[%s271 + $0xc8] sm:$0xff] %v4948
        %4981 = vst [vmem:[%s271 + $0xd0] sm:$0xff] %v4949
        %4982 = vst [vmem:[%s271 + $0xd8] sm:$0xff] %v4950
        %4983 = vst [vmem:[%s271 + $0xe0] sm:$0xff] %v4951
        %4984 = vst [vmem:[%s271 + $0xe8] sm:$0xff] %v4952
        %4985 = vst [vmem:[%s271 + $0xf0] sm:$0xff] %v4953
        %4986 = vst [vmem:[%s271 + $0xf8] sm:$0xff] %v4954
        %s4987 = sand.u32 %s181, 1
        %s4988 = scalar_lea.sflag [#allocation4], %s4987
        %s4989 = sand.u32 %s181, 1
        %s4990 = smul.addr %s4989, 256
        %s4991 = scalar_lea.vmem [#allocation3], %s4990
        // Predicated region
        $region49: #{tpu_custom_call.1} parent=47 // pred_check
          %p4992 = pneg %p191
        $region50: #{tpu_custom_call.1} parent=47 // pred_check_branch
          %4994 = sbr.rel (%p4992) target = $region52
        $region51: #{tpu_custom_call.1} parent=47 // pred_region
          %s4996 = ssub.s32 4096, 4096
          %4997 = vsyncadd %s4988, %s4996
          %s4998 = smul.addr %s21, 32
          %s4999 = smul.addr %s4998, 128
          %s5000 = scalar_lea.hbm %s7, %s4999
          %s5001 = sshll.u32 %s4991, 4
          %s5002 = int_to_ptr.vmem [resolvable:$true] %s5001
          %5007 = dma.vmem_to_hbm [thread:$0]  %s5002, 4096, %s5000, %s4988, 128, 128, 8
        $region52: #{tpu_custom_call.1} parent=47 // pred_fallthru
          _
      $region48: #{tpu_custom_call.1} parent=5 // pred_fallthru
        _
      %p5008 = scmp.le.s32.totalorder 2, %s16
      // Predicated region
      $region53: #{tpu_custom_call.1} parent=5 // pred_check
        %p5009 = pneg %p5008
      $region54: #{tpu_custom_call.1} parent=5 // pred_check_branch
        %5011 = sbr.rel (%p5009) target = $region56
      $region55: #{tpu_custom_call.1} parent=5 // pred_region
        %s5012 = ssub.s32 %s16, 2
        // Predicated region
        $region57: #{tpu_custom_call.1} parent=55 // pred_check
          %p5013 = pneg %p197
        $region58: #{tpu_custom_call.1} parent=55 // pred_check_branch
          %5015 = sbr.rel (%p5013) target = $region60
        $region59: #{tpu_custom_call.1} parent=55 // pred_region
          %s5016 = sand.u32 %s182, 1
          %s5017 = scalar_lea.sflag [#allocation4], %s5016
          %s5018 = sand.u32 %s182, 1
          %s5019 = smul.addr %s5018, 256
          %s5020 = scalar_lea.vmem [#allocation3], %s5019
          %5021 = dma.done %s5017, 4096
        $region60: #{tpu_custom_call.1} parent=55 // pred_fallthru
          _
      $region56: #{tpu_custom_call.1} parent=5 // pred_fallthru
        _
    $region6: #{tpu_custom_call.1} parent=1 // loop_footer
      %s20 = sadd.s32 1, %s16
    $region7: #{tpu_custom_call.1} parent=1 // loop_footer_branch
      %15 = sbr.rel target = $region3
    $region8: #{tpu_custom_call.1} parent=1 // loop_exit
      _
    %5022 = vsyncpa [#allocation4], 1
    %s5023 = scalar_lea.sflag [#allocation4], 1
    %5024 = vsyncpa %s5023, 1

</llo_original>
